<compile_context>
chip_gen: v6e
topology: v6e:2x2x1
jax: 0.10.0
libtpu: 0.0.40
codegen_flags: <defaults>
</compile_context>

<pallas_src>
import jax
import jax.numpy as jnp
from jax.experimental import pallas as pl
from jax.experimental.pallas import tpu as pltpu

LANE = 128


def _round_up(n, m):
    return ((n + m - 1) // m) * m


def vae_kernel(x_ref, eps_ref,
               w1_ref, b1_ref, w2_ref, b2_ref,
               wh_ref, bh_ref,
               wd1_ref, bd1_ref, wd2_ref, bd2_ref, wd3_ref, bd3_ref,
               recon_ref, heads_ref,
               x_slab, eps_slab):
    """Whole VAE forward for one batch tile.

    MXU operands are bf16 with f32 accumulation; all element-wise math (ReLU, exp,
    reparameterization, bias adds) stays f32 (v5e VPU/EUP have no bf16 path).
    Padded lanes carry exact zeros wherever correctness needs it.
    """
    f32 = jnp.float32
    bf16 = jnp.bfloat16

    lat = eps_ref.shape[-1]            # real latent dim
    slab_w = heads_ref.shape[-1]       # packed head slab width (multiple of 128)
    half = slab_w // 2                 # lane offset of logvar inside the slab

    def widen(ref, slab_ref):
        # Widen a narrow (sub-128-lane) input block to a lane-dense slab with zero padding.
        n = ref.shape[-1]
        if n == slab_ref.shape[-1]:
            return ref[...].astype(slab_ref.dtype)
        slab_ref[...] = jnp.zeros_like(slab_ref)
        slab_ref[:, :n] = ref[...].astype(slab_ref.dtype)
        return slab_ref[...]

    # ---- encoder: Linear(in,256)+ReLU, Linear(256,128)+ReLU ----
    x = widen(x_ref, x_slab)                                    # (tile, din_p) bf16, pad=0
    h = jnp.dot(x, w1_ref[...], preferred_element_type=f32) + b1_ref[...]
    h = jnp.maximum(h, 0.0)
    h = jnp.dot(h.astype(bf16), w2_ref[...], preferred_element_type=f32) + b2_ref[...]
    h = jnp.maximum(h, 0.0)

    # ---- packed latent heads: mu in lanes [0,lat), logvar in lanes [half, half+lat) ----
    heads = jnp.dot(h.astype(bf16), wh_ref[...], preferred_element_type=f32) + bh_ref[...]

    # ---- reparameterization: z = mu + eps * exp(0.5*logvar) on the real lanes ----
    lane = jax.lax.broadcasted_iota(jnp.int32, heads.shape, 1)
    valid = lane < lat
    # half-slab roll brings logvar onto the mu lanes (shift by slab/2 is direction-agnostic)
    logvar_aligned = pltpu.roll(heads, shift=half, axis=1)
    std = jnp.exp(0.5 * jnp.where(valid, logvar_aligned, 0.0))  # pad lanes -> exp(0)=1
    eps = widen(eps_ref, eps_slab)                              # (tile, slab_w) f32, pad=0
    z = jnp.where(valid, heads + eps * std, 0.0)                # exact zeros on pad lanes

    # ---- decoder: Linear(L,128)+ReLU, Linear(128,256)+ReLU, Linear(256,in) ----
    d = jnp.dot(z.astype(bf16), wd1_ref[...], preferred_element_type=f32) + bd1_ref[...]
    d = jnp.maximum(d, 0.0)
    d = jnp.dot(d.astype(bf16), wd2_ref[...], preferred_element_type=f32) + bd2_ref[...]
    d = jnp.maximum(d, 0.0)
    recon = jnp.dot(d.astype(bf16), wd3_ref[...], preferred_element_type=f32) + bd3_ref[...]

    # Lane-dense bf16 stores (no masked vst); wrapper slices/upcasts.
    recon_ref[...] = recon.astype(recon_ref.dtype)
    heads_ref[...] = heads.astype(heads_ref.dtype)


def _pad_params(params, input_dim, latent_dim):
    """Zero-pad weights to lane-dense shapes, pack the two latent heads into one slab
    (mu at lanes [0,L), logvar at lanes [half, half+L)), and cast MXU operands to bf16
    (biases stay f32)."""
    f32 = jnp.float32
    bf16 = jnp.bfloat16
    din_p = _round_up(input_dim, LANE)
    half = _round_up(max(latent_dim, 64), 64)    # logvar lane offset; slab = 2*half is 128-multiple
    slab = 2 * half

    def pad_to(a, shape):
        return jnp.pad(a, [(0, s - d) for d, s in zip(a.shape, shape)])

    w1 = pad_to(params["w1"], (din_p, 256)).astype(bf16)     # padded rows are zero
    b1 = params["b1"]
    w2 = params["w2"].astype(bf16)
    b2 = params["b2"]
    wh = (jnp.zeros((128, slab), f32)
          .at[:, :latent_dim].set(params["wmu"])
          .at[:, half:half + latent_dim].set(params["wlv"])).astype(bf16)
    bh = (jnp.zeros((1, slab), f32)
          .at[:, :latent_dim].set(params["bmu"])
          .at[:, half:half + latent_dim].set(params["blv"]))
    wd1 = (jnp.zeros((slab, 128), f32)
           .at[:latent_dim, :].set(params["wd1"])).astype(bf16)  # pad rows zero -> pad z ignored
    bd1 = params["bd1"]
    wd2 = params["wd2"].astype(bf16)
    bd2 = params["bd2"]
    wd3 = pad_to(params["wd3"], (256, din_p)).astype(bf16)
    bd3 = pad_to(params["bd3"], (1, din_p))
    padded = (w1, b1, w2, b2, wh, bh, wd1, bd1, wd2, bd2, wd3, bd3)
    return padded, din_p, half, slab


def vae_forward(x, eps, params, *, batch_tile=None):
    """Run the whole VAE forward in one pallas_call, tiled over the batch.

    Returns (recon, mu, logvar) as f32, matching the PyTorch module interface.
    """
    B, input_dim = x.shape
    latent_dim = params["wmu"].shape[1]
    padded, din_p, half, slab = _pad_params(params, input_dim, latent_dim)

    if batch_tile is None:
        # ~B/2 rows/step: >=2 "parallel" grid steps keep both v7x TensorCores fed while a
        # tile big enough to amortize the ~0.35us per-step overhead and the MXU weight
        # loads. 2048-row cap keeps VMEM (<~16 MiB incl. double buffering + temporaries)
        # comfortably under v7x's 64 MiB; on 1-TC chips (v5e/v6e) batch_tile=B is also fine.
        batch_tile = min(2048, max(8, _round_up(pl.cdiv(B, 2), 8)))

    bp = _round_up(B, batch_tile)
    # Unpadded feature dims: last block dim == full array dim (<128) is legal; widening to
    # lane-dense slabs happens in-kernel so HBM only sees the real columns.
    x_p = jnp.pad(x, ((0, bp - B), (0, 0))).astype(jnp.bfloat16)
    eps_p = jnp.pad(eps, ((0, bp - B), (0, 0)))                 # f32 (exact VPU path)

    def rep(a):
        # Replicated weight/bias: constant block index -> DMA'd once, reused every step.
        return pl.BlockSpec(a.shape, lambda i: (0,) * a.ndim)

    def batched(cols):
        return pl.BlockSpec((batch_tile, cols), lambda i: (i, 0))

    in_specs = [batched(input_dim), batched(latent_dim)] + [rep(a) for a in padded]
    out_specs = [batched(din_p), batched(slab)]
    out_shape = [
        jax.ShapeDtypeStruct((bp, din_p), jnp.bfloat16),        # recon (padded, bf16)
        jax.ShapeDtypeStruct((bp, slab), jnp.bfloat16),         # packed [mu | logvar] slab
    ]
    scratch_shapes = [
        pltpu.VMEM((batch_tile, din_p), jnp.bfloat16),          # x widened to lane-dense
        pltpu.VMEM((batch_tile, slab), jnp.float32),            # eps widened to lane-dense
    ]

    flops = 2 * bp * (din_p * 256 + 256 * 128 + 128 * slab
                      + slab * 128 + 128 * 256 + 256 * din_p)
    bytes_accessed = (x_p.size * 2 + eps_p.size * 4
                      + sum(int(a.size) * a.dtype.itemsize for a in padded)
                      + bp * din_p * 2 + bp * slab * 2)
    cost = pl.CostEstimate(flops=flops,
                           transcendentals=bp * slab,
                           bytes_accessed=bytes_accessed)

    recon_p, heads_p = pl.pallas_call(
        vae_kernel,
        out_shape=out_shape,
        grid_spec=pltpu.PrefetchScalarGridSpec(
            num_scalar_prefetch=0,
            grid=(bp // batch_tile,),
            in_specs=in_specs,
            out_specs=out_specs,
            scratch_shapes=scratch_shapes,
        ),
        compiler_params=pltpu.CompilerParams(
            dimension_semantics=("parallel",)),
        cost_estimate=cost,
    )(x_p, eps_p, *padded)

    recon = recon_p[:B, :input_dim].astype(jnp.float32)
    mu = heads_p[:B, :latent_dim].astype(jnp.float32)
    logvar = heads_p[:B, half:half + latent_dim].astype(jnp.float32)
    return recon, mu, logvar


def make_params(key, input_dim, latent_dim):
    """Deterministic synthetic parameters. PyTorch Linear weight is (out, in); we store it
    transposed as (in, out). Biases stored as (1, out) for broadcast."""
    dims = [
        ("w1",  input_dim, 256), ("w2",  256, 128),
        ("wmu", 128, latent_dim), ("wlv", 128, latent_dim),
        ("wd1", latent_dim, 128), ("wd2", 128, 256), ("wd3", 256, input_dim),
    ]
    params = {}
    for name, fan_in, fan_out in dims:
        key, kw, kb = jax.random.split(key, 3)
        bound = 1.0 / jnp.sqrt(fan_in)
        params[name] = jax.random.uniform(
            kw, (fan_in, fan_out), jnp.float32, -bound, bound)
        params["b" + name[1:]] = jax.random.uniform(
            kb, (1, fan_out), jnp.float32, -bound, bound)
    return params


def vae_forward_ref(x, eps, p):
    """Pure-JAX reference with the same bf16-operand / f32-accumulate matmul semantics
    (outputs kept in f32; the kernel additionally rounds its stores to bf16)."""
    bf16 = jnp.bfloat16
    f32 = jnp.float32

    def lin(a, w, b):
        return jnp.dot(a.astype(bf16), w.astype(bf16), preferred_element_type=f32) + b

    h = jax.nn.relu(lin(x, p["w1"], p["b1"]))
    h = jax.nn.relu(lin(h, p["w2"], p["b2"]))
    mu = lin(h, p["wmu"], p["bmu"])
    logvar = lin(h, p["wlv"], p["blv"])
    z = mu + eps * jnp.exp(0.5 * logvar)
    d = jax.nn.relu(lin(z, p["wd1"], p["bd1"]))
    d = jax.nn.relu(lin(d, p["wd2"], p["bd2"]))
    recon = lin(d, p["wd3"], p["bd3"])
    return recon, mu, logvar


if __name__ == "__main__":
    INPUT_DIM = 32
    LATENT_DIM = 8
    BATCH = 512          # default tiling -> 256 rows/step, 2 parallel steps (both v7x TCs)

    key = jax.random.PRNGKey(0)
    key, kx, keps, kp = jax.random.split(key, 4)

    x = jax.random.normal(kx, (BATCH, INPUT_DIM), jnp.float32)
    # eps = torch.randn_like(std): the normal noise is generated outside and fed in so the
    # kernel is deterministic given its inputs (in-kernel pltpu PRNG would not be
    # reproducible by the pure-JAX reference).
    eps = jax.random.normal(keps, (BATCH, LATENT_DIM), jnp.float32)
    params = make_params(kp, INPUT_DIM, LATENT_DIM)

    recon, mu, logvar = vae_forward(x, eps, params)
    jax.block_until_ready((recon, mu, logvar))

    r_ref, mu_ref, lv_ref = vae_forward_ref(x, eps, params)
    # Kernel stores are bf16 (then upcast), so compare with bf16-level tolerances.
    assert jnp.allclose(recon, r_ref, atol=2e-2, rtol=2e-2), "recon mismatch"
    assert jnp.allclose(mu, mu_ref, atol=2e-2, rtol=2e-2), "mu mismatch"
    assert jnp.allclose(logvar, lv_ref, atol=2e-2, rtol=2e-2), "logvar mismatch"

    print("KERNEL_OK")
</pallas_src>

<mosaic_0001>
module attributes {stable_mosaic.version = 11 : i64} {
  func.func @vae_kernel(%arg0: i32, %arg1: memref<256x32xbf16, #tpu.memory_space<vmem>>, %arg2: memref<256x8xf32, #tpu.memory_space<vmem>>, %arg3: memref<128x256xbf16, #tpu.memory_space<vmem>>, %arg4: memref<1x256xf32, #tpu.memory_space<vmem>>, %arg5: memref<256x128xbf16, #tpu.memory_space<vmem>>, %arg6: memref<1x128xf32, #tpu.memory_space<vmem>>, %arg7: memref<128x128xbf16, #tpu.memory_space<vmem>>, %arg8: memref<1x128xf32, #tpu.memory_space<vmem>>, %arg9: memref<128x128xbf16, #tpu.memory_space<vmem>>, %arg10: memref<1x128xf32, #tpu.memory_space<vmem>>, %arg11: memref<128x256xbf16, #tpu.memory_space<vmem>>, %arg12: memref<1x256xf32, #tpu.memory_space<vmem>>, %arg13: memref<256x128xbf16, #tpu.memory_space<vmem>>, %arg14: memref<1x128xf32, #tpu.memory_space<vmem>>, %arg15: memref<256x128xbf16, #tpu.memory_space<vmem>>, %arg16: memref<256x128xbf16, #tpu.memory_space<vmem>>, %arg17: memref<256x128xbf16, #tpu.memory_space<vmem>>, %arg18: memref<256x128xf32, #tpu.memory_space<vmem>>) attributes {dimension_semantics = [#tpu.dimension_semantics<parallel>], iteration_bounds = array<i64: 2>, scalar_prefetch = 0 : i64, scratch_operands = 2 : i64, tpu.core_type = #tpu.core_type<tc>, window_params = [{transform_indices = @transform_0, window_bounds = array<i64: 256, 32>}, {transform_indices = @transform_1, window_bounds = array<i64: 256, 8>}, {pipeline_mode = #tpu.pipeline_mode<synchronous>, transform_indices = @transform_2, window_bounds = array<i64: 128, 256>}, {pipeline_mode = #tpu.pipeline_mode<synchronous>, transform_indices = @transform_3, window_bounds = array<i64: 1, 256>}, {pipeline_mode = #tpu.pipeline_mode<synchronous>, transform_indices = @transform_4, window_bounds = array<i64: 256, 128>}, {pipeline_mode = #tpu.pipeline_mode<synchronous>, transform_indices = @transform_5, window_bounds = array<i64: 1, 128>}, {pipeline_mode = #tpu.pipeline_mode<synchronous>, transform_indices = @transform_6, window_bounds = array<i64: 128, 128>}, {pipeline_mode = #tpu.pipeline_mode<synchronous>, transform_indices = @transform_7, window_bounds = array<i64: 1, 128>}, {pipeline_mode = #tpu.pipeline_mode<synchronous>, transform_indices = @transform_8, window_bounds = array<i64: 128, 128>}, {pipeline_mode = #tpu.pipeline_mode<synchronous>, transform_indices = @transform_9, window_bounds = array<i64: 1, 128>}, {pipeline_mode = #tpu.pipeline_mode<synchronous>, transform_indices = @transform_10, window_bounds = array<i64: 128, 256>}, {pipeline_mode = #tpu.pipeline_mode<synchronous>, transform_indices = @transform_11, window_bounds = array<i64: 1, 256>}, {pipeline_mode = #tpu.pipeline_mode<synchronous>, transform_indices = @transform_12, window_bounds = array<i64: 256, 128>}, {pipeline_mode = #tpu.pipeline_mode<synchronous>, transform_indices = @transform_13, window_bounds = array<i64: 1, 128>}, {transform_indices = @transform_14, window_bounds = array<i64: 256, 128>}, {transform_indices = @transform_15, window_bounds = array<i64: 256, 128>}]} {
    %cst = arith.constant 0.000000e+00 : bf16
    %0 = vector.broadcast %cst : bf16 to vector<256x128xbf16>
    %c0 = arith.constant 0 : index
    %c0_0 = arith.constant 0 : index
    %1 = vector.load %arg17[%c0, %c0_0] : memref<256x128xbf16, #tpu.memory_space<vmem>>, vector<256x128xbf16>
    tpu.vector_store %arg17[%c0, %c0_0], %0 {strides = array<i32>} : memref<256x128xbf16, #tpu.memory_space<vmem>>, vector<256x128xbf16>,
    %c0_1 = arith.constant 0 : index
    %c0_2 = arith.constant 0 : index
    %2 = vector.load %arg1[%c0_1, %c0_2] : memref<256x32xbf16, #tpu.memory_space<vmem>>, vector<256x32xbf16>
    %c0_3 = arith.constant 0 : index
    %c0_4 = arith.constant 0 : index
    %3 = vector.load %arg17[%c0_3, %c0_4] : memref<256x128xbf16, #tpu.memory_space<vmem>>, vector<256x32xbf16>
    tpu.vector_store %arg17[%c0_3, %c0_4], %2 {strides = array<i32>} : memref<256x128xbf16, #tpu.memory_space<vmem>>, vector<256x32xbf16>,
    %c0_5 = arith.constant 0 : index
    %c0_6 = arith.constant 0 : index
    %4 = vector.load %arg17[%c0_5, %c0_6] : memref<256x128xbf16, #tpu.memory_space<vmem>>, vector<256x128xbf16>
    %c0_7 = arith.constant 0 : index
    %c0_8 = arith.constant 0 : index
    %5 = vector.load %arg3[%c0_7, %c0_8] : memref<128x256xbf16, #tpu.memory_space<vmem>>, vector<128x256xbf16>
    %cst_9 = arith.constant dense<0.000000e+00> : vector<256x256xf32>
    %6 = tpu.matmul %4, %5, %cst_9 {dimension_numbers = #tpu.dot_dimension_numbers<[1], [0], [0], [1], [0, 0, 1, 1], [], []>} : vector<256x128xbf16>, vector<128x256xbf16>, vector<256x256xf32> -> vector<256x256xf32>
    %c0_10 = arith.constant 0 : index
    %c0_11 = arith.constant 0 : index
    %7 = vector.load %arg4[%c0_10, %c0_11] : memref<1x256xf32, #tpu.memory_space<vmem>>, vector<1x256xf32>
    %8 = vector.broadcast %7 : vector<1x256xf32> to vector<256x256xf32>
    %9 = arith.addf %6, %8 : vector<256x256xf32>
    %cst_12 = arith.constant 0.000000e+00 : f32
    %10 = vector.broadcast %cst_12 : f32 to vector<256x256xf32>
    %11 = arith.maximumf %9, %10 : vector<256x256xf32>
    %12 = arith.truncf %11 : vector<256x256xf32> to vector<256x256xbf16>
    %c0_13 = arith.constant 0 : index
    %c0_14 = arith.constant 0 : index
    %13 = vector.load %arg5[%c0_13, %c0_14] : memref<256x128xbf16, #tpu.memory_space<vmem>>, vector<256x128xbf16>
    %cst_15 = arith.constant dense<0.000000e+00> : vector<256x128xf32>
    %14 = tpu.matmul %12, %13, %cst_15 {dimension_numbers = #tpu.dot_dimension_numbers<[1], [0], [0], [1], [0, 0, 1, 1], [], []>} : vector<256x256xbf16>, vector<256x128xbf16>, vector<256x128xf32> -> vector<256x128xf32>
    %c0_16 = arith.constant 0 : index
    %c0_17 = arith.constant 0 : index
    %15 = vector.load %arg6[%c0_16, %c0_17] : memref<1x128xf32, #tpu.memory_space<vmem>>, vector<1x128xf32>
    %16 = vector.broadcast %15 : vector<1x128xf32> to vector<256x128xf32>
    %17 = arith.addf %14, %16 : vector<256x128xf32>
    %cst_18 = arith.constant 0.000000e+00 : f32
    %18 = vector.broadcast %cst_18 : f32 to vector<256x128xf32>
    %19 = arith.maximumf %17, %18 : vector<256x128xf32>
    %20 = arith.truncf %19 : vector<256x128xf32> to vector<256x128xbf16>
    %c0_19 = arith.constant 0 : index
    %c0_20 = arith.constant 0 : index
    %21 = vector.load %arg7[%c0_19, %c0_20] : memref<128x128xbf16, #tpu.memory_space<vmem>>, vector<128x128xbf16>
    %cst_21 = arith.constant dense<0.000000e+00> : vector<256x128xf32>
    %22 = tpu.matmul %20, %21, %cst_21 {dimension_numbers = #tpu.dot_dimension_numbers<[1], [0], [0], [1], [0, 0, 1, 1], [], []>} : vector<256x128xbf16>, vector<128x128xbf16>, vector<256x128xf32> -> vector<256x128xf32>
    %c0_22 = arith.constant 0 : index
    %c0_23 = arith.constant 0 : index
    %23 = vector.load %arg8[%c0_22, %c0_23] : memref<1x128xf32, #tpu.memory_space<vmem>>, vector<1x128xf32>
    %24 = vector.broadcast %23 : vector<1x128xf32> to vector<256x128xf32>
    %25 = arith.addf %22, %24 : vector<256x128xf32>
    %26 = tpu.iota {dimensions = array<i32: 1>} : vector<256x128xi32>
    %c8_i32 = arith.constant 8 : i32
    %27 = vector.broadcast %c8_i32 : i32 to vector<256x128xi32>
    %28 = arith.cmpi slt, %26, %27 : vector<256x128xi32>
    %c64_i32 = arith.constant 64 : i32
    %29 = tpu.dynamic_rotate %25 by %c64_i32 dim 1 : vector<256x128xf32>, i32 -> vector<256x128xf32>
    %cst_24 = arith.constant 0.000000e+00 : f32
    %30 = vector.broadcast %cst_24 : f32 to vector<256x128xf32>
    %31 = arith.select %28, %29, %30 : vector<256x128xi1>, vector<256x128xf32>
    %cst_25 = arith.constant 5.000000e-01 : f32
    %32 = vector.broadcast %cst_25 : f32 to vector<256x128xf32>
    %33 = arith.mulf %32, %31 : vector<256x128xf32>
    %34 = math.exp %33 : vector<256x128xf32>
    %cst_26 = arith.constant 0.000000e+00 : f32
    %35 = vector.broadcast %cst_26 : f32 to vector<256x128xf32>
    %c0_27 = arith.constant 0 : index
    %c0_28 = arith.constant 0 : index
    %36 = vector.load %arg18[%c0_27, %c0_28] : memref<256x128xf32, #tpu.memory_space<vmem>>, vector<256x128xf32>
    tpu.vector_store %arg18[%c0_27, %c0_28], %35 {strides = array<i32>} : memref<256x128xf32, #tpu.memory_space<vmem>>, vector<256x128xf32>,
    %c0_29 = arith.constant 0 : index
    %c0_30 = arith.constant 0 : index
    %37 = vector.load %arg2[%c0_29, %c0_30] : memref<256x8xf32, #tpu.memory_space<vmem>>, vector<256x8xf32>
    %c0_31 = arith.constant 0 : index
    %c0_32 = arith.constant 0 : index
    %38 = vector.load %arg18[%c0_31, %c0_32] : memref<256x128xf32, #tpu.memory_space<vmem>>, vector<256x8xf32>
    tpu.vector_store %arg18[%c0_31, %c0_32], %37 {strides = array<i32>} : memref<256x128xf32, #tpu.memory_space<vmem>>, vector<256x8xf32>,
    %c0_33 = arith.constant 0 : index
    %c0_34 = arith.constant 0 : index
    %39 = vector.load %arg18[%c0_33, %c0_34] : memref<256x128xf32, #tpu.memory_space<vmem>>, vector<256x128xf32>
    %40 = arith.mulf %39, %34 : vector<256x128xf32>
    %41 = arith.addf %25, %40 : vector<256x128xf32>
    %cst_35 = arith.constant 0.000000e+00 : f32
    %42 = vector.broadcast %cst_35 : f32 to vector<256x128xf32>
    %43 = arith.select %28, %41, %42 : vector<256x128xi1>, vector<256x128xf32>
    %44 = arith.truncf %43 : vector<256x128xf32> to vector<256x128xbf16>
    %c0_36 = arith.constant 0 : index
    %c0_37 = arith.constant 0 : index
    %45 = vector.load %arg9[%c0_36, %c0_37] : memref<128x128xbf16, #tpu.memory_space<vmem>>, vector<128x128xbf16>
    %cst_38 = arith.constant dense<0.000000e+00> : vector<256x128xf32>
    %46 = tpu.matmul %44, %45, %cst_38 {dimension_numbers = #tpu.dot_dimension_numbers<[1], [0], [0], [1], [0, 0, 1, 1], [], []>} : vector<256x128xbf16>, vector<128x128xbf16>, vector<256x128xf32> -> vector<256x128xf32>
    %c0_39 = arith.constant 0 : index
    %c0_40 = arith.constant 0 : index
    %47 = vector.load %arg10[%c0_39, %c0_40] : memref<1x128xf32, #tpu.memory_space<vmem>>, vector<1x128xf32>
    %48 = vector.broadcast %47 : vector<1x128xf32> to vector<256x128xf32>
    %49 = arith.addf %46, %48 : vector<256x128xf32>
    %cst_41 = arith.constant 0.000000e+00 : f32
    %50 = vector.broadcast %cst_41 : f32 to vector<256x128xf32>
    %51 = arith.maximumf %49, %50 : vector<256x128xf32>
    %52 = arith.truncf %51 : vector<256x128xf32> to vector<256x128xbf16>
    %c0_42 = arith.constant 0 : index
    %c0_43 = arith.constant 0 : index
    %53 = vector.load %arg11[%c0_42, %c0_43] : memref<128x256xbf16, #tpu.memory_space<vmem>>, vector<128x256xbf16>
    %cst_44 = arith.constant dense<0.000000e+00> : vector<256x256xf32>
    %54 = tpu.matmul %52, %53, %cst_44 {dimension_numbers = #tpu.dot_dimension_numbers<[1], [0], [0], [1], [0, 0, 1, 1], [], []>} : vector<256x128xbf16>, vector<128x256xbf16>, vector<256x256xf32> -> vector<256x256xf32>
    %c0_45 = arith.constant 0 : index
    %c0_46 = arith.constant 0 : index
    %55 = vector.load %arg12[%c0_45, %c0_46] : memref<1x256xf32, #tpu.memory_space<vmem>>, vector<1x256xf32>
    %56 = vector.broadcast %55 : vector<1x256xf32> to vector<256x256xf32>
    %57 = arith.addf %54, %56 : vector<256x256xf32>
    %cst_47 = arith.constant 0.000000e+00 : f32
    %58 = vector.broadcast %cst_47 : f32 to vector<256x256xf32>
    %59 = arith.maximumf %57, %58 : vector<256x256xf32>
    %60 = arith.truncf %59 : vector<256x256xf32> to vector<256x256xbf16>
    %c0_48 = arith.constant 0 : index
    %c0_49 = arith.constant 0 : index
    %61 = vector.load %arg13[%c0_48, %c0_49] : memref<256x128xbf16, #tpu.memory_space<vmem>>, vector<256x128xbf16>
    %cst_50 = arith.constant dense<0.000000e+00> : vector<256x128xf32>
    %62 = tpu.matmul %60, %61, %cst_50 {dimension_numbers = #tpu.dot_dimension_numbers<[1], [0], [0], [1], [0, 0, 1, 1], [], []>} : vector<256x256xbf16>, vector<256x128xbf16>, vector<256x128xf32> -> vector<256x128xf32>
    %c0_51 = arith.constant 0 : index
    %c0_52 = arith.constant 0 : index
    %63 = vector.load %arg14[%c0_51, %c0_52] : memref<1x128xf32, #tpu.memory_space<vmem>>, vector<1x128xf32>
    %64 = vector.broadcast %63 : vector<1x128xf32> to vector<256x128xf32>
    %65 = arith.addf %62, %64 : vector<256x128xf32>
    %66 = arith.truncf %65 : vector<256x128xf32> to vector<256x128xbf16>
    %c0_53 = arith.constant 0 : index
    %c0_54 = arith.constant 0 : index
    %67 = vector.load %arg15[%c0_53, %c0_54] : memref<256x128xbf16, #tpu.memory_space<vmem>>, vector<256x128xbf16>
    tpu.vector_store %arg15[%c0_53, %c0_54], %66 {strides = array<i32>} : memref<256x128xbf16, #tpu.memory_space<vmem>>, vector<256x128xbf16>,
    %68 = arith.truncf %25 : vector<256x128xf32> to vector<256x128xbf16>
    %c0_55 = arith.constant 0 : index
    %c0_56 = arith.constant 0 : index
    %69 = vector.load %arg16[%c0_55, %c0_56] : memref<256x128xbf16, #tpu.memory_space<vmem>>, vector<256x128xbf16>
    tpu.vector_store %arg16[%c0_55, %c0_56], %68 {strides = array<i32>} : memref<256x128xbf16, #tpu.memory_space<vmem>>, vector<256x128xbf16>,
    return
  }
  func.func @transform_0(%arg0: i32) -> (i32, i32) {
    %c0_i32 = arith.constant 0 : i32
    %c0_i32_0 = arith.constant 0 : i32
    return %arg0, %c0_i32 : i32, i32
  }
  func.func @transform_1(%arg0: i32) -> (i32, i32) {
    %c0_i32 = arith.constant 0 : i32
    %c0_i32_0 = arith.constant 0 : i32
    return %arg0, %c0_i32 : i32, i32
  }
  func.func @transform_2(%arg0: i32) -> (i32, i32) {
    %c0_i32 = arith.constant 0 : i32
    %c0_i32_0 = arith.constant 0 : i32
    %c0_i32_1 = arith.constant 0 : i32
    return %c0_i32, %c0_i32_0 : i32, i32
  }
  func.func @transform_3(%arg0: i32) -> (i32, i32) {
    %c0_i32 = arith.constant 0 : i32
    %c0_i32_0 = arith.constant 0 : i32
    %c0_i32_1 = arith.constant 0 : i32
    return %c0_i32, %c0_i32_0 : i32, i32
  }
  func.func @transform_4(%arg0: i32) -> (i32, i32) {
    %c0_i32 = arith.constant 0 : i32
    %c0_i32_0 = arith.constant 0 : i32
    %c0_i32_1 = arith.constant 0 : i32
    return %c0_i32, %c0_i32_0 : i32, i32
  }
  func.func @transform_5(%arg0: i32) -> (i32, i32) {
    %c0_i32 = arith.constant 0 : i32
    %c0_i32_0 = arith.constant 0 : i32
    %c0_i32_1 = arith.constant 0 : i32
    return %c0_i32, %c0_i32_0 : i32, i32
  }
  func.func @transform_6(%arg0: i32) -> (i32, i32) {
    %c0_i32 = arith.constant 0 : i32
    %c0_i32_0 = arith.constant 0 : i32
    %c0_i32_1 = arith.constant 0 : i32
    return %c0_i32, %c0_i32_0 : i32, i32
  }
  func.func @transform_7(%arg0: i32) -> (i32, i32) {
    %c0_i32 = arith.constant 0 : i32
    %c0_i32_0 = arith.constant 0 : i32
    %c0_i32_1 = arith.constant 0 : i32
    return %c0_i32, %c0_i32_0 : i32, i32
  }
  func.func @transform_8(%arg0: i32) -> (i32, i32) {
    %c0_i32 = arith.constant 0 : i32
    %c0_i32_0 = arith.constant 0 : i32
    %c0_i32_1 = arith.constant 0 : i32
    return %c0_i32, %c0_i32_0 : i32, i32
  }
  func.func @transform_9(%arg0: i32) -> (i32, i32) {
    %c0_i32 = arith.constant 0 : i32
    %c0_i32_0 = arith.constant 0 : i32
    %c0_i32_1 = arith.constant 0 : i32
    return %c0_i32, %c0_i32_0 : i32, i32
  }
  func.func @transform_10(%arg0: i32) -> (i32, i32) {
    %c0_i32 = arith.constant 0 : i32
    %c0_i32_0 = arith.constant 0 : i32
    %c0_i32_1 = arith.constant 0 : i32
    return %c0_i32, %c0_i32_0 : i32, i32
  }
  func.func @transform_11(%arg0: i32) -> (i32, i32) {
    %c0_i32 = arith.constant 0 : i32
    %c0_i32_0 = arith.constant 0 : i32
    %c0_i32_1 = arith.constant 0 : i32
    return %c0_i32, %c0_i32_0 : i32, i32
  }
  func.func @transform_12(%arg0: i32) -> (i32, i32) {
    %c0_i32 = arith.constant 0 : i32
    %c0_i32_0 = arith.constant 0 : i32
    %c0_i32_1 = arith.constant 0 : i32
    return %c0_i32, %c0_i32_0 : i32, i32
  }
  func.func @transform_13(%arg0: i32) -> (i32, i32) {
    %c0_i32 = arith.constant 0 : i32
    %c0_i32_0 = arith.constant 0 : i32
    %c0_i32_1 = arith.constant 0 : i32
    return %c0_i32, %c0_i32_0 : i32, i32
  }
  func.func @transform_14(%arg0: i32) -> (i32, i32) {
    %c0_i32 = arith.constant 0 : i32
    %c0_i32_0 = arith.constant 0 : i32
    return %arg0, %c0_i32 : i32, i32
  }
  func.func @transform_15(%arg0: i32) -> (i32, i32) {
    %c0_i32 = arith.constant 0 : i32
    %c0_i32_0 = arith.constant 0 : i32
    return %arg0, %c0_i32 : i32, i32
  }
}

</mosaic_0001>

<llo_original>
// kernel: tpu_custom_call.1
$region0: #{tpu_custom_call.1}
  #allocation0 [shape = 'u32[]', space=smem, size = 0x4, offset = 0x4, fixed_abs, tag = 'smem constant byte address 0x4 - core index']
  #allocation1 [shape = 'u32[144,128]{1,0:T(1,128)}', space=vmem, size = 0x12000, scoped, tag = 'internal scratch']
  #allocation2 [shape = 'bf16[256,128]{1,0:T(8,128)(2,1)}', space=vmem, size = 0x10000, scoped, tag = 'scratch operand']
  #allocation3 [shape = 'f32[256,128]{1,0:T(8,128)}', space=vmem, size = 0x20000, scoped, tag = 'scratch operand']
  %s0 = inlined_call_operand.vmem [shape: bf16[512,32], index: 0, kind: input, shape index: {}]
  %s1 = inlined_call_operand.vmem [shape: f32[512,8], index: 1, kind: input, shape index: {}]
  %s2 = inlined_call_operand.vmem [shape: bf16[128,256], index: 2, kind: input, shape index: {}]
  %s3 = inlined_call_operand.vmem [shape: f32[1,256], index: 3, kind: input, shape index: {}]
  %s4 = inlined_call_operand.vmem [shape: bf16[256,128], index: 4, kind: input, shape index: {}]
  %s5 = inlined_call_operand.vmem [shape: f32[1,128], index: 5, kind: input, shape index: {}]
  %s6 = inlined_call_operand.vmem [shape: bf16[128,128], index: 6, kind: input, shape index: {}]
  %s7 = inlined_call_operand.vmem [shape: f32[1,128], index: 7, kind: input, shape index: {}]
  %s8 = inlined_call_operand.vmem [shape: bf16[128,128], index: 8, kind: input, shape index: {}]
  %s9 = inlined_call_operand.vmem [shape: f32[1,128], index: 9, kind: input, shape index: {}]
  %s10 = inlined_call_operand.vmem [shape: bf16[128,256], index: 10, kind: input, shape index: {}]
  %s11 = inlined_call_operand.vmem [shape: f32[1,256], index: 11, kind: input, shape index: {}]
  %s12 = inlined_call_operand.vmem [shape: bf16[256,128], index: 12, kind: input, shape index: {}]
  %s13 = inlined_call_operand.vmem [shape: f32[1,128], index: 13, kind: input, shape index: {}]
  %s14 = inlined_call_operand.hbm [shape: bf16[512,128], index: 14, kind: output, shape index: {0}]
  %s15 = inlined_call_operand.hbm [shape: bf16[512,128], index: 15, kind: output, shape index: {1}]
  %16 = xla_tuple %s14, %s15
  %s17 = sld [smem:[#allocation0]]
  $region97: #{tpu_custom_call.1} parent=0
    _
  %s19 = ssub.s32 1, %s17
  %s20 = scalar_select 0, %s19, %s17
  $region1: #{tpu_custom_call.1} parent=0
    #allocation4 [shape = 'u8[131072]{0}', space=vmem, size = 0x20000, scoped, tag = 'output window, operand 0']
    #allocation5 [shape = 's32[2]{0}', space=sflag, size = 0x8, scoped, tag = 'scoped memory for tpu_custom_call.1']
    #allocation6 [shape = 'u8[131072]{0}', space=vmem, size = 0x20000, scoped, tag = 'output window, operand 1']
    #allocation7 [shape = 's32[2]{0}', space=sflag, size = 0x8, scoped, tag = 'scoped memory for tpu_custom_call.1']
    %21 = vsyncpa [#allocation5], 0
    %s22 = scalar_lea.sflag [#allocation5], 1
    %23 = vsyncpa %s22, 0
    %24 = vsyncpa [#allocation7], 0
    %s25 = scalar_lea.sflag [#allocation7], 1
    %26 = vsyncpa %s25, 0
    loop: start=0, step=1, limit=4
    $region2: #{tpu_custom_call.1} parent=1 // loop_pre_header
      _
    $region3: #{tpu_custom_call.1} parent=1 // loop_header
      %s28 = sphi 0, %s32
      %p29 = scmp.ge.s32.totalorder %s28, 4
      %s38 = sphi 0, %s40
      %s41 = sphi 0, %s38
      %s42 = sphi 0, %s41
      %s58 = sphi 0, %s42
      %s64 = sphi 0, %s66
      %s67 = sphi 0, %s64
      %s68 = sphi 0, %s67
      %s84 = sphi 0, %s68
      %s88 = sphi 0, %s88
      %s90 = sphi 0, %s88
      %s91 = sphi 0, %s90
      %s105 = sphi 0, %s91
      %s109 = sphi 0, %s109
      %s111 = sphi 0, %s109
      %s112 = sphi 0, %s111
      %s126 = sphi 0, %s112
      %s130 = sphi 0, %s130
      %s132 = sphi 0, %s130
      %s133 = sphi 0, %s132
      %s147 = sphi 0, %s133
      %s151 = sphi 0, %s151
      %s153 = sphi 0, %s151
      %s154 = sphi 0, %s153
      %s168 = sphi 0, %s154
      %s172 = sphi 0, %s172
      %s174 = sphi 0, %s172
      %s175 = sphi 0, %s174
      %s189 = sphi 0, %s175
      %s193 = sphi 0, %s193
      %s195 = sphi 0, %s193
      %s196 = sphi 0, %s195
      %s210 = sphi 0, %s196
      %s214 = sphi 0, %s214
      %s216 = sphi 0, %s214
      %s217 = sphi 0, %s216
      %s231 = sphi 0, %s217
      %s235 = sphi 0, %s235
      %s237 = sphi 0, %s235
      %s238 = sphi 0, %s237
      %s252 = sphi 0, %s238
      %s256 = sphi 0, %s256
      %s258 = sphi 0, %s256
      %s259 = sphi 0, %s258
      %s273 = sphi 0, %s259
      %s277 = sphi 0, %s277
      %s279 = sphi 0, %s277
      %s280 = sphi 0, %s279
      %s294 = sphi 0, %s280
      %s298 = sphi 0, %s298
      %s300 = sphi 0, %s298
      %s301 = sphi 0, %s300
      %s315 = sphi 0, %s301
      %s319 = sphi 0, %s319
      %s321 = sphi 0, %s319
      %s322 = sphi 0, %s321
      %s336 = sphi 0, %s322
      %s342 = sphi 0, %s344
      %s345 = sphi 0, %s342
      %s346 = sphi 0, %s345
      %s362 = sphi 0, %s346
      %s368 = sphi 0, %s370
      %s371 = sphi 0, %s368
      %s372 = sphi 0, %s371
      %s388 = sphi 0, %s372
    $region4: #{tpu_custom_call.1} parent=1 // loop_header_branch
      %31 = sbr.rel (%p29) target = $region8
    $region5: #{tpu_custom_call.1} parent=1 // loop_body
      %s33 = ssub.s32 %s28, 1
      %s34 = ssub.s32 %s28, 2
      %s35 = sadd.s32 %s28, 1
      %s36 = ssub.s32 %s28, %s35
      %p37 = scmp.eq.s32.totalorder %s36, 0
      %s39 = sadd.s32 %s38, 1
      %s40 = scalar_select %p37, %s38, %s39
      %p43 = pneg %p37
      %p44 = scmp.eq.s32.totalorder %s28, 1
      %p45 = por %p43, %p44
      %p46 = scmp.ne.s32.totalorder %s38, %s41
      %p47 = scmp.eq.s32.totalorder %s28, 0
      %p48 = por %p46, %p47
      %p49 = scmp.ne.s32.totalorder %s38, %s41
      %p50 = scmp.eq.s32.totalorder %s33, 1
      %p51 = por %p49, %p50
      %p52 = scmp.ne.s32.totalorder %s41, %s42
      %p53 = scmp.eq.s32.totalorder %s33, 0
      %p54 = por %p52, %p53
      %p55 = scmp.ne.s32.totalorder %s41, %s42
      %p56 = scmp.eq.s32.totalorder %s34, 1
      %p57 = por %p55, %p56
      %p59 = scmp.ne.s32.totalorder %s42, %s58
      %p60 = scmp.eq.s32.totalorder %s34, 0
      %p61 = por %p59, %p60
      %s62 = ssub.s32 %s28, %s35
      %p63 = scmp.eq.s32.totalorder %s62, 0
      %s65 = sadd.s32 %s64, 1
      %s66 = scalar_select %p63, %s64, %s65
      %p69 = pneg %p63
      %p70 = scmp.eq.s32.totalorder %s28, 1
      %p71 = por %p69, %p70
      %p72 = scmp.ne.s32.totalorder %s64, %s67
      %p73 = scmp.eq.s32.totalorder %s28, 0
      %p74 = por %p72, %p73
      %p75 = scmp.ne.s32.totalorder %s64, %s67
      %p76 = scmp.eq.s32.totalorder %s33, 1
      %p77 = por %p75, %p76
      %p78 = scmp.ne.s32.totalorder %s67, %s68
      %p79 = scmp.eq.s32.totalorder %s33, 0
      %p80 = por %p78, %p79
      %p81 = scmp.ne.s32.totalorder %s67, %s68
      %p82 = scmp.eq.s32.totalorder %s34, 1
      %p83 = por %p81, %p82
      %p85 = scmp.ne.s32.totalorder %s68, %s84
      %p86 = scmp.eq.s32.totalorder %s34, 0
      %p87 = por %p85, %p86
      %s89 = sadd.s32 %s88, 1
      %p92 = scmp.eq.s32.totalorder %s28, 1
      %p93 = scmp.ne.s32.totalorder %s88, %s90
      %p94 = scmp.eq.s32.totalorder %s28, 0
      %p95 = por %p93, %p94
      %p96 = scmp.ne.s32.totalorder %s88, %s90
      %p97 = scmp.eq.s32.totalorder %s33, 1
      %p98 = por %p96, %p97
      %p99 = scmp.ne.s32.totalorder %s90, %s91
      %p100 = scmp.eq.s32.totalorder %s33, 0
      %p101 = por %p99, %p100
      %p102 = scmp.ne.s32.totalorder %s90, %s91
      %p103 = scmp.eq.s32.totalorder %s34, 1
      %p104 = por %p102, %p103
      %p106 = scmp.ne.s32.totalorder %s91, %s105
      %p107 = scmp.eq.s32.totalorder %s34, 0
      %p108 = por %p106, %p107
      %s110 = sadd.s32 %s109, 1
      %p113 = scmp.eq.s32.totalorder %s28, 1
      %p114 = scmp.ne.s32.totalorder %s109, %s111
      %p115 = scmp.eq.s32.totalorder %s28, 0
      %p116 = por %p114, %p115
      %p117 = scmp.ne.s32.totalorder %s109, %s111
      %p118 = scmp.eq.s32.totalorder %s33, 1
      %p119 = por %p117, %p118
      %p120 = scmp.ne.s32.totalorder %s111, %s112
      %p121 = scmp.eq.s32.totalorder %s33, 0
      %p122 = por %p120, %p121
      %p123 = scmp.ne.s32.totalorder %s111, %s112
      %p124 = scmp.eq.s32.totalorder %s34, 1
      %p125 = por %p123, %p124
      %p127 = scmp.ne.s32.totalorder %s112, %s126
      %p128 = scmp.eq.s32.totalorder %s34, 0
      %p129 = por %p127, %p128
      %s131 = sadd.s32 %s130, 1
      %p134 = scmp.eq.s32.totalorder %s28, 1
      %p135 = scmp.ne.s32.totalorder %s130, %s132
      %p136 = scmp.eq.s32.totalorder %s28, 0
      %p137 = por %p135, %p136
      %p138 = scmp.ne.s32.totalorder %s130, %s132
      %p139 = scmp.eq.s32.totalorder %s33, 1
      %p140 = por %p138, %p139
      %p141 = scmp.ne.s32.totalorder %s132, %s133
      %p142 = scmp.eq.s32.totalorder %s33, 0
      %p143 = por %p141, %p142
      %p144 = scmp.ne.s32.totalorder %s132, %s133
      %p145 = scmp.eq.s32.totalorder %s34, 1
      %p146 = por %p144, %p145
      %p148 = scmp.ne.s32.totalorder %s133, %s147
      %p149 = scmp.eq.s32.totalorder %s34, 0
      %p150 = por %p148, %p149
      %s152 = sadd.s32 %s151, 1
      %p155 = scmp.eq.s32.totalorder %s28, 1
      %p156 = scmp.ne.s32.totalorder %s151, %s153
      %p157 = scmp.eq.s32.totalorder %s28, 0
      %p158 = por %p156, %p157
      %p159 = scmp.ne.s32.totalorder %s151, %s153
      %p160 = scmp.eq.s32.totalorder %s33, 1
      %p161 = por %p159, %p160
      %p162 = scmp.ne.s32.totalorder %s153, %s154
      %p163 = scmp.eq.s32.totalorder %s33, 0
      %p164 = por %p162, %p163
      %p165 = scmp.ne.s32.totalorder %s153, %s154
      %p166 = scmp.eq.s32.totalorder %s34, 1
      %p167 = por %p165, %p166
      %p169 = scmp.ne.s32.totalorder %s154, %s168
      %p170 = scmp.eq.s32.totalorder %s34, 0
      %p171 = por %p169, %p170
      %s173 = sadd.s32 %s172, 1
      %p176 = scmp.eq.s32.totalorder %s28, 1
      %p177 = scmp.ne.s32.totalorder %s172, %s174
      %p178 = scmp.eq.s32.totalorder %s28, 0
      %p179 = por %p177, %p178
      %p180 = scmp.ne.s32.totalorder %s172, %s174
      %p181 = scmp.eq.s32.totalorder %s33, 1
      %p182 = por %p180, %p181
      %p183 = scmp.ne.s32.totalorder %s174, %s175
      %p184 = scmp.eq.s32.totalorder %s33, 0
      %p185 = por %p183, %p184
      %p186 = scmp.ne.s32.totalorder %s174, %s175
      %p187 = scmp.eq.s32.totalorder %s34, 1
      %p188 = por %p186, %p187
      %p190 = scmp.ne.s32.totalorder %s175, %s189
      %p191 = scmp.eq.s32.totalorder %s34, 0
      %p192 = por %p190, %p191
      %s194 = sadd.s32 %s193, 1
      %p197 = scmp.eq.s32.totalorder %s28, 1
      %p198 = scmp.ne.s32.totalorder %s193, %s195
      %p199 = scmp.eq.s32.totalorder %s28, 0
      %p200 = por %p198, %p199
      %p201 = scmp.ne.s32.totalorder %s193, %s195
      %p202 = scmp.eq.s32.totalorder %s33, 1
      %p203 = por %p201, %p202
      %p204 = scmp.ne.s32.totalorder %s195, %s196
      %p205 = scmp.eq.s32.totalorder %s33, 0
      %p206 = por %p204, %p205
      %p207 = scmp.ne.s32.totalorder %s195, %s196
      %p208 = scmp.eq.s32.totalorder %s34, 1
      %p209 = por %p207, %p208
      %p211 = scmp.ne.s32.totalorder %s196, %s210
      %p212 = scmp.eq.s32.totalorder %s34, 0
      %p213 = por %p211, %p212
      %s215 = sadd.s32 %s214, 1
      %p218 = scmp.eq.s32.totalorder %s28, 1
      %p219 = scmp.ne.s32.totalorder %s214, %s216
      %p220 = scmp.eq.s32.totalorder %s28, 0
      %p221 = por %p219, %p220
      %p222 = scmp.ne.s32.totalorder %s214, %s216
      %p223 = scmp.eq.s32.totalorder %s33, 1
      %p224 = por %p222, %p223
      %p225 = scmp.ne.s32.totalorder %s216, %s217
      %p226 = scmp.eq.s32.totalorder %s33, 0
      %p227 = por %p225, %p226
      %p228 = scmp.ne.s32.totalorder %s216, %s217
      %p229 = scmp.eq.s32.totalorder %s34, 1
      %p230 = por %p228, %p229
      %p232 = scmp.ne.s32.totalorder %s217, %s231
      %p233 = scmp.eq.s32.totalorder %s34, 0
      %p234 = por %p232, %p233
      %s236 = sadd.s32 %s235, 1
      %p239 = scmp.eq.s32.totalorder %s28, 1
      %p240 = scmp.ne.s32.totalorder %s235, %s237
      %p241 = scmp.eq.s32.totalorder %s28, 0
      %p242 = por %p240, %p241
      %p243 = scmp.ne.s32.totalorder %s235, %s237
      %p244 = scmp.eq.s32.totalorder %s33, 1
      %p245 = por %p243, %p244
      %p246 = scmp.ne.s32.totalorder %s237, %s238
      %p247 = scmp.eq.s32.totalorder %s33, 0
      %p248 = por %p246, %p247
      %p249 = scmp.ne.s32.totalorder %s237, %s238
      %p250 = scmp.eq.s32.totalorder %s34, 1
      %p251 = por %p249, %p250
      %p253 = scmp.ne.s32.totalorder %s238, %s252
      %p254 = scmp.eq.s32.totalorder %s34, 0
      %p255 = por %p253, %p254
      %s257 = sadd.s32 %s256, 1
      %p260 = scmp.eq.s32.totalorder %s28, 1
      %p261 = scmp.ne.s32.totalorder %s256, %s258
      %p262 = scmp.eq.s32.totalorder %s28, 0
      %p263 = por %p261, %p262
      %p264 = scmp.ne.s32.totalorder %s256, %s258
      %p265 = scmp.eq.s32.totalorder %s33, 1
      %p266 = por %p264, %p265
      %p267 = scmp.ne.s32.totalorder %s258, %s259
      %p268 = scmp.eq.s32.totalorder %s33, 0
      %p269 = por %p267, %p268
      %p270 = scmp.ne.s32.totalorder %s258, %s259
      %p271 = scmp.eq.s32.totalorder %s34, 1
      %p272 = por %p270, %p271
      %p274 = scmp.ne.s32.totalorder %s259, %s273
      %p275 = scmp.eq.s32.totalorder %s34, 0
      %p276 = por %p274, %p275
      %s278 = sadd.s32 %s277, 1
      %p281 = scmp.eq.s32.totalorder %s28, 1
      %p282 = scmp.ne.s32.totalorder %s277, %s279
      %p283 = scmp.eq.s32.totalorder %s28, 0
      %p284 = por %p282, %p283
      %p285 = scmp.ne.s32.totalorder %s277, %s279
      %p286 = scmp.eq.s32.totalorder %s33, 1
      %p287 = por %p285, %p286
      %p288 = scmp.ne.s32.totalorder %s279, %s280
      %p289 = scmp.eq.s32.totalorder %s33, 0
      %p290 = por %p288, %p289
      %p291 = scmp.ne.s32.totalorder %s279, %s280
      %p292 = scmp.eq.s32.totalorder %s34, 1
      %p293 = por %p291, %p292
      %p295 = scmp.ne.s32.totalorder %s280, %s294
      %p296 = scmp.eq.s32.totalorder %s34, 0
      %p297 = por %p295, %p296
      %s299 = sadd.s32 %s298, 1
      %p302 = scmp.eq.s32.totalorder %s28, 1
      %p303 = scmp.ne.s32.totalorder %s298, %s300
      %p304 = scmp.eq.s32.totalorder %s28, 0
      %p305 = por %p303, %p304
      %p306 = scmp.ne.s32.totalorder %s298, %s300
      %p307 = scmp.eq.s32.totalorder %s33, 1
      %p308 = por %p306, %p307
      %p309 = scmp.ne.s32.totalorder %s300, %s301
      %p310 = scmp.eq.s32.totalorder %s33, 0
      %p311 = por %p309, %p310
      %p312 = scmp.ne.s32.totalorder %s300, %s301
      %p313 = scmp.eq.s32.totalorder %s34, 1
      %p314 = por %p312, %p313
      %p316 = scmp.ne.s32.totalorder %s301, %s315
      %p317 = scmp.eq.s32.totalorder %s34, 0
      %p318 = por %p316, %p317
      %s320 = sadd.s32 %s319, 1
      %p323 = scmp.eq.s32.totalorder %s28, 1
      %p324 = scmp.ne.s32.totalorder %s319, %s321
      %p325 = scmp.eq.s32.totalorder %s28, 0
      %p326 = por %p324, %p325
      %p327 = scmp.ne.s32.totalorder %s319, %s321
      %p328 = scmp.eq.s32.totalorder %s33, 1
      %p329 = por %p327, %p328
      %p330 = scmp.ne.s32.totalorder %s321, %s322
      %p331 = scmp.eq.s32.totalorder %s33, 0
      %p332 = por %p330, %p331
      %p333 = scmp.ne.s32.totalorder %s321, %s322
      %p334 = scmp.eq.s32.totalorder %s34, 1
      %p335 = por %p333, %p334
      %p337 = scmp.ne.s32.totalorder %s322, %s336
      %p338 = scmp.eq.s32.totalorder %s34, 0
      %p339 = por %p337, %p338
      %s340 = ssub.s32 %s28, %s35
      %p341 = scmp.eq.s32.totalorder %s340, 0
      %s343 = sadd.s32 %s342, 1
      %s344 = scalar_select %p341, %s342, %s343
      %p347 = pneg %p341
      %p348 = scmp.eq.s32.totalorder %s28, 1
      %p349 = por %p347, %p348
      %p350 = scmp.ne.s32.totalorder %s342, %s345
      %p351 = scmp.eq.s32.totalorder %s28, 0
      %p352 = por %p350, %p351
      %p353 = scmp.ne.s32.totalorder %s342, %s345
      %p354 = scmp.eq.s32.totalorder %s33, 1
      %p355 = por %p353, %p354
      %p356 = scmp.ne.s32.totalorder %s345, %s346
      %p357 = scmp.eq.s32.totalorder %s33, 0
      %p358 = por %p356, %p357
      %p359 = scmp.ne.s32.totalorder %s345, %s346
      %p360 = scmp.eq.s32.totalorder %s34, 1
      %p361 = por %p359, %p360
      %p363 = scmp.ne.s32.totalorder %s346, %s362
      %p364 = scmp.eq.s32.totalorder %s34, 0
      %p365 = por %p363, %p364
      %s366 = ssub.s32 %s28, %s35
      %p367 = scmp.eq.s32.totalorder %s366, 0
      %s369 = sadd.s32 %s368, 1
      %s370 = scalar_select %p367, %s368, %s369
      %p373 = pneg %p367
      %p374 = scmp.eq.s32.totalorder %s28, 1
      %p375 = por %p373, %p374
      %p376 = scmp.ne.s32.totalorder %s368, %s371
      %p377 = scmp.eq.s32.totalorder %s28, 0
      %p378 = por %p376, %p377
      %p379 = scmp.ne.s32.totalorder %s368, %s371
      %p380 = scmp.eq.s32.totalorder %s33, 1
      %p381 = por %p379, %p380
      %p382 = scmp.ne.s32.totalorder %s371, %s372
      %p383 = scmp.eq.s32.totalorder %s33, 0
      %p384 = por %p382, %p383
      %p385 = scmp.ne.s32.totalorder %s371, %s372
      %p386 = scmp.eq.s32.totalorder %s34, 1
      %p387 = por %p385, %p386
      %p389 = scmp.ne.s32.totalorder %s372, %s388
      %p390 = scmp.eq.s32.totalorder %s34, 0
      %p391 = por %p389, %p390
      %p392 = scmp.le.s32.totalorder 1, %s28
      %p393 = scmp.lt.s32.totalorder %s28, 3
      %p394 = pnand %p392, %p393
      %p395 = pneg %p394
      // Predicated region
      $region9: #{tpu_custom_call.1} parent=5 // pred_check
        _
      $region10: #{tpu_custom_call.1} parent=5 // pred_check_branch
        %397 = sbr.rel (%p394) target = $region12
      $region11: #{tpu_custom_call.1} parent=5 // pred_region
        %s398 = ssub.s32 %s28, 1
        // Predicated region
        $region13: #{tpu_custom_call.1} parent=11 // pred_check
          %p399 = pneg %p101
        $region14: #{tpu_custom_call.1} parent=11 // pred_check_branch
          %401 = sbr.rel (%p399) target = $region16
        $region15: #{tpu_custom_call.1} parent=11 // pred_region
          _
        $region16: #{tpu_custom_call.1} parent=11 // pred_fallthru
          _
        // Predicated region
        $region17: #{tpu_custom_call.1} parent=11 // pred_check
          %p402 = pneg %p122
        $region18: #{tpu_custom_call.1} parent=11 // pred_check_branch
          %404 = sbr.rel (%p402) target = $region20
        $region19: #{tpu_custom_call.1} parent=11 // pred_region
          _
        $region20: #{tpu_custom_call.1} parent=11 // pred_fallthru
          _
        // Predicated region
        $region21: #{tpu_custom_call.1} parent=11 // pred_check
          %p405 = pneg %p143
        $region22: #{tpu_custom_call.1} parent=11 // pred_check_branch
          %407 = sbr.rel (%p405) target = $region24
        $region23: #{tpu_custom_call.1} parent=11 // pred_region
          _
        $region24: #{tpu_custom_call.1} parent=11 // pred_fallthru
          _
        // Predicated region
        $region25: #{tpu_custom_call.1} parent=11 // pred_check
          %p408 = pneg %p164
        $region26: #{tpu_custom_call.1} parent=11 // pred_check_branch
          %410 = sbr.rel (%p408) target = $region28
        $region27: #{tpu_custom_call.1} parent=11 // pred_region
          _
        $region28: #{tpu_custom_call.1} parent=11 // pred_fallthru
          _
        // Predicated region
        $region29: #{tpu_custom_call.1} parent=11 // pred_check
          %p411 = pneg %p185
        $region30: #{tpu_custom_call.1} parent=11 // pred_check_branch
          %413 = sbr.rel (%p411) target = $region32
        $region31: #{tpu_custom_call.1} parent=11 // pred_region
          _
        $region32: #{tpu_custom_call.1} parent=11 // pred_fallthru
          _
        // Predicated region
        $region33: #{tpu_custom_call.1} parent=11 // pred_check
          %p414 = pneg %p206
        $region34: #{tpu_custom_call.1} parent=11 // pred_check_branch
          %416 = sbr.rel (%p414) target = $region36
        $region35: #{tpu_custom_call.1} parent=11 // pred_region
          _
        $region36: #{tpu_custom_call.1} parent=11 // pred_fallthru
          _
        // Predicated region
        $region37: #{tpu_custom_call.1} parent=11 // pred_check
          %p417 = pneg %p227
        $region38: #{tpu_custom_call.1} parent=11 // pred_check_branch
          %419 = sbr.rel (%p417) target = $region40
        $region39: #{tpu_custom_call.1} parent=11 // pred_region
          _
        $region40: #{tpu_custom_call.1} parent=11 // pred_fallthru
          _
        // Predicated region
        $region41: #{tpu_custom_call.1} parent=11 // pred_check
          %p420 = pneg %p248
        $region42: #{tpu_custom_call.1} parent=11 // pred_check_branch
          %422 = sbr.rel (%p420) target = $region44
        $region43: #{tpu_custom_call.1} parent=11 // pred_region
          _
        $region44: #{tpu_custom_call.1} parent=11 // pred_fallthru
          _
        // Predicated region
        $region45: #{tpu_custom_call.1} parent=11 // pred_check
          %p423 = pneg %p269
        $region46: #{tpu_custom_call.1} parent=11 // pred_check_branch
          %425 = sbr.rel (%p423) target = $region48
        $region47: #{tpu_custom_call.1} parent=11 // pred_region
          _
        $region48: #{tpu_custom_call.1} parent=11 // pred_fallthru
          _
        // Predicated region
        $region49: #{tpu_custom_call.1} parent=11 // pred_check
          %p426 = pneg %p290
        $region50: #{tpu_custom_call.1} parent=11 // pred_check_branch
          %428 = sbr.rel (%p426) target = $region52
        $region51: #{tpu_custom_call.1} parent=11 // pred_region
          _
        $region52: #{tpu_custom_call.1} parent=11 // pred_fallthru
          _
        // Predicated region
        $region53: #{tpu_custom_call.1} parent=11 // pred_check
          %p429 = pneg %p311
        $region54: #{tpu_custom_call.1} parent=11 // pred_check_branch
          %431 = sbr.rel (%p429) target = $region56
        $region55: #{tpu_custom_call.1} parent=11 // pred_region
          _
        $region56: #{tpu_custom_call.1} parent=11 // pred_fallthru
          _
        // Predicated region
        $region57: #{tpu_custom_call.1} parent=11 // pred_check
          %p432 = pneg %p332
        $region58: #{tpu_custom_call.1} parent=11 // pred_check_branch
          %434 = sbr.rel (%p432) target = $region60
        $region59: #{tpu_custom_call.1} parent=11 // pred_region
          _
        $region60: #{tpu_custom_call.1} parent=11 // pred_fallthru
          _
      $region12: #{tpu_custom_call.1} parent=5 // pred_fallthru
        _
      %p435 = scmp.lt.s32.totalorder %s28, 2
      // Predicated region
      $region61: #{tpu_custom_call.1} parent=5 // pred_check
        %p436 = pneg %p435
      $region62: #{tpu_custom_call.1} parent=5 // pred_check_branch
        %438 = sbr.rel (%p436) target = $region64
      $region63: #{tpu_custom_call.1} parent=5 // pred_region
        // Predicated region
        $region65: #{tpu_custom_call.1} parent=63 // pred_check
          %p439 = pneg %p48
        $region66: #{tpu_custom_call.1} parent=63 // pred_check_branch
          %441 = sbr.rel (%p439) target = $region68
        $region67: #{tpu_custom_call.1} parent=63 // pred_region
          %s442 = smul.u32 32, %s28
          %p443 = scmp.lt.s32.totalorder %s442, 63
          %s444 = scalar_select %p443, %s442, 63
          %s445 = smul.addr %s444, 4
          %s446 = scalar_lea.vmem %s0, %s445
          %s447 = smul.u32 32, %s28
        $region68: #{tpu_custom_call.1} parent=63 // pred_fallthru
          _
        // Predicated region
        $region69: #{tpu_custom_call.1} parent=63 // pred_check
          %p448 = pneg %p74
        $region70: #{tpu_custom_call.1} parent=63 // pred_check_branch
          %450 = sbr.rel (%p448) target = $region72
        $region71: #{tpu_custom_call.1} parent=63 // pred_region
          %s451 = smul.u32 32, %s28
          %p452 = scmp.lt.s32.totalorder %s451, 63
          %s453 = scalar_select %p452, %s451, 63
          %s454 = smul.addr %s453, 8
          %s455 = scalar_lea.vmem %s1, %s454
          %s456 = smul.u32 32, %s28
        $region72: #{tpu_custom_call.1} parent=63 // pred_fallthru
          _
      $region64: #{tpu_custom_call.1} parent=5 // pred_fallthru
        _
      %p457 = scmp.le.s32.totalorder 1, %s28
      %p458 = scmp.lt.s32.totalorder %s28, 3
      %p459 = pnand %p457, %p458
      %p460 = pneg %p459
      // Predicated region
      $region73: #{tpu_custom_call.1} parent=5 // pred_check
        _
      $region74: #{tpu_custom_call.1} parent=5 // pred_check_branch
        %462 = sbr.rel (%p459) target = $region76
      $region75: #{tpu_custom_call.1} parent=5 // pred_region
        %s463 = ssub.s32 %s28, 1
        %s464 = smul.u32 32, %s33
        %p465 = scmp.lt.s32.totalorder %s464, 63
        %s466 = scalar_select %p465, %s464, 63
        %s467 = smul.addr %s466, 4
        %s468 = scalar_lea.vmem %s0, %s467
        %p469 = pneg %p54
        %p470 = pneg %p51
        %s471 = smul.u32 32, %s33
        %p472 = scmp.lt.s32.totalorder %s471, 63
        %s473 = scalar_select %p472, %s471, 63
        %s474 = smul.addr %s473, 8
        %s475 = scalar_lea.vmem %s1, %s474
        %p476 = pneg %p80
        %p477 = pneg %p77
        %p478 = pneg %p101
        %p479 = pneg %p98
        %p480 = pneg %p122
        %p481 = pneg %p119
        %p482 = pneg %p143
        %p483 = pneg %p140
        %p484 = pneg %p164
        %p485 = pneg %p161
        %p486 = pneg %p185
        %p487 = pneg %p182
        %p488 = pneg %p206
        %p489 = pneg %p203
        %p490 = pneg %p227
        %p491 = pneg %p224
        %p492 = pneg %p248
        %p493 = pneg %p245
        %p494 = pneg %p269
        %p495 = pneg %p266
        %p496 = pneg %p290
        %p497 = pneg %p287
        %p498 = pneg %p311
        %p499 = pneg %p308
        %p500 = pneg %p332
        %p501 = pneg %p329
        %p502 = pneg %p358
        %p503 = pneg %p355
        %s504 = sand.u32 %s345, 1
        %s505 = scalar_lea.sflag [#allocation5], %s504
        %s506 = sand.u32 %s345, 1
        %s507 = smul.addr %s506, 128
        %s508 = scalar_lea.vmem [#allocation4], %s507
        %p509 = pneg %p384
        %p510 = pneg %p381
        %s511 = sand.u32 %s371, 1
        %s512 = scalar_lea.sflag [#allocation7], %s511
        %s513 = sand.u32 %s371, 1
        %s514 = smul.addr %s513, 128
        %s515 = scalar_lea.vmem [#allocation6], %s514
        %s516 = smul.u32 32, %s33
        %p517 = scmp.lt.s32.totalorder %s516, 63
        %s518 = scalar_select %p517, %s516, 63
        %s519 = smul.addr %s518, 4
        %s520 = scalar_lea.vmem %s0, %s519
        %s521 = smul.u32 32, %s33
        %s522 = smul.u32 32, %s33
        %p523 = scmp.lt.s32.totalorder %s522, 63
        %s524 = scalar_select %p523, %s522, 63
        %s525 = smul.addr %s524, 8
        %s526 = scalar_lea.vmem %s1, %s525
        %s527 = smul.u32 32, %s33
        %s528 = smul.u32 32, %s33
        %s529 = smul.u32 32, %s33
        %531 = vst [vmem:[#allocation2] sm:$0xf] 0
        %532 = vst [vmem:[#allocation2 + $0x4] sm:$0xf] 0
        %533 = vst [vmem:[#allocation2 + $0x8] sm:$0xf] 0
        %534 = vst [vmem:[#allocation2 + $0xc] sm:$0xf] 0
        %535 = vst [vmem:[#allocation2 + $0x10] sm:$0xf] 0
        %536 = vst [vmem:[#allocation2 + $0x14] sm:$0xf] 0
        %537 = vst [vmem:[#allocation2 + $0x18] sm:$0xf] 0
        %538 = vst [vmem:[#allocation2 + $0x1c] sm:$0xf] 0
        %539 = vst [vmem:[#allocation2 + $0x20] sm:$0xf] 0
        %540 = vst [vmem:[#allocation2 + $0x24] sm:$0xf] 0
        %541 = vst [vmem:[#allocation2 + $0x28] sm:$0xf] 0
        %542 = vst [vmem:[#allocation2 + $0x2c] sm:$0xf] 0
        %543 = vst [vmem:[#allocation2 + $0x30] sm:$0xf] 0
        %544 = vst [vmem:[#allocation2 + $0x34] sm:$0xf] 0
        %545 = vst [vmem:[#allocation2 + $0x38] sm:$0xf] 0
        %546 = vst [vmem:[#allocation2 + $0x3c] sm:$0xf] 0
        %547 = vst [vmem:[#allocation2 + $0x40] sm:$0xf] 0
        %548 = vst [vmem:[#allocation2 + $0x44] sm:$0xf] 0
        %549 = vst [vmem:[#allocation2 + $0x48] sm:$0xf] 0
        %550 = vst [vmem:[#allocation2 + $0x4c] sm:$0xf] 0
        %551 = vst [vmem:[#allocation2 + $0x50] sm:$0xf] 0
        %552 = vst [vmem:[#allocation2 + $0x54] sm:$0xf] 0
        %553 = vst [vmem:[#allocation2 + $0x58] sm:$0xf] 0
        %554 = vst [vmem:[#allocation2 + $0x5c] sm:$0xf] 0
        %555 = vst [vmem:[#allocation2 + $0x60] sm:$0xf] 0
        %556 = vst [vmem:[#allocation2 + $0x64] sm:$0xf] 0
        %557 = vst [vmem:[#allocation2 + $0x68] sm:$0xf] 0
        %558 = vst [vmem:[#allocation2 + $0x6c] sm:$0xf] 0
        %559 = vst [vmem:[#allocation2 + $0x70] sm:$0xf] 0
        %560 = vst [vmem:[#allocation2 + $0x74] sm:$0xf] 0
        %561 = vst [vmem:[#allocation2 + $0x78] sm:$0xf] 0
        %562 = vst [vmem:[#allocation2 + $0x7c] sm:$0xf] 0
        %v563 = vld [vmem:[%s520] sm:$0xf]
        %v564 = vld [vmem:[%s520 + $0x4] sm:$0xf]
        %v565 = vld [vmem:[%s520 + $0x8] sm:$0xf]
        %v566 = vld [vmem:[%s520 + $0xc] sm:$0xf]
        %v567 = vld [vmem:[%s520 + $0x10] sm:$0xf]
        %v568 = vld [vmem:[%s520 + $0x14] sm:$0xf]
        %v569 = vld [vmem:[%s520 + $0x18] sm:$0xf]
        %v570 = vld [vmem:[%s520 + $0x1c] sm:$0xf]
        %v571 = vld [vmem:[%s520 + $0x20] sm:$0xf]
        %v572 = vld [vmem:[%s520 + $0x24] sm:$0xf]
        %v573 = vld [vmem:[%s520 + $0x28] sm:$0xf]
        %v574 = vld [vmem:[%s520 + $0x2c] sm:$0xf]
        %v575 = vld [vmem:[%s520 + $0x30] sm:$0xf]
        %v576 = vld [vmem:[%s520 + $0x34] sm:$0xf]
        %v577 = vld [vmem:[%s520 + $0x38] sm:$0xf]
        %v578 = vld [vmem:[%s520 + $0x3c] sm:$0xf]
        %v579 = vld [vmem:[%s520 + $0x40] sm:$0xf]
        %v580 = vld [vmem:[%s520 + $0x44] sm:$0xf]
        %v581 = vld [vmem:[%s520 + $0x48] sm:$0xf]
        %v582 = vld [vmem:[%s520 + $0x4c] sm:$0xf]
        %v583 = vld [vmem:[%s520 + $0x50] sm:$0xf]
        %v584 = vld [vmem:[%s520 + $0x54] sm:$0xf]
        %v585 = vld [vmem:[%s520 + $0x58] sm:$0xf]
        %v586 = vld [vmem:[%s520 + $0x5c] sm:$0xf]
        %v587 = vld [vmem:[%s520 + $0x60] sm:$0xf]
        %v588 = vld [vmem:[%s520 + $0x64] sm:$0xf]
        %v589 = vld [vmem:[%s520 + $0x68] sm:$0xf]
        %v590 = vld [vmem:[%s520 + $0x6c] sm:$0xf]
        %v591 = vld [vmem:[%s520 + $0x70] sm:$0xf]
        %v592 = vld [vmem:[%s520 + $0x74] sm:$0xf]
        %v593 = vld [vmem:[%s520 + $0x78] sm:$0xf]
        %v594 = vld [vmem:[%s520 + $0x7c] sm:$0xf]
        %vm595 = vcmask 257024
        %596 = vst.msk [vmem:[#allocation2] sm:$0xf] %vm595, %v563
        %597 = vst.msk [vmem:[#allocation2 + $0x4] sm:$0xf] %vm595, %v564
        %598 = vst.msk [vmem:[#allocation2 + $0x8] sm:$0xf] %vm595, %v565
        %599 = vst.msk [vmem:[#allocation2 + $0xc] sm:$0xf] %vm595, %v566
        %600 = vst.msk [vmem:[#allocation2 + $0x10] sm:$0xf] %vm595, %v567
        %601 = vst.msk [vmem:[#allocation2 + $0x14] sm:$0xf] %vm595, %v568
        %602 = vst.msk [vmem:[#allocation2 + $0x18] sm:$0xf] %vm595, %v569
        %603 = vst.msk [vmem:[#allocation2 + $0x1c] sm:$0xf] %vm595, %v570
        %604 = vst.msk [vmem:[#allocation2 + $0x20] sm:$0xf] %vm595, %v571
        %605 = vst.msk [vmem:[#allocation2 + $0x24] sm:$0xf] %vm595, %v572
        %606 = vst.msk [vmem:[#allocation2 + $0x28] sm:$0xf] %vm595, %v573
        %607 = vst.msk [vmem:[#allocation2 + $0x2c] sm:$0xf] %vm595, %v574
        %608 = vst.msk [vmem:[#allocation2 + $0x30] sm:$0xf] %vm595, %v575
        %609 = vst.msk [vmem:[#allocation2 + $0x34] sm:$0xf] %vm595, %v576
        %610 = vst.msk [vmem:[#allocation2 + $0x38] sm:$0xf] %vm595, %v577
        %611 = vst.msk [vmem:[#allocation2 + $0x3c] sm:$0xf] %vm595, %v578
        %612 = vst.msk [vmem:[#allocation2 + $0x40] sm:$0xf] %vm595, %v579
        %613 = vst.msk [vmem:[#allocation2 + $0x44] sm:$0xf] %vm595, %v580
        %614 = vst.msk [vmem:[#allocation2 + $0x48] sm:$0xf] %vm595, %v581
        %615 = vst.msk [vmem:[#allocation2 + $0x4c] sm:$0xf] %vm595, %v582
        %616 = vst.msk [vmem:[#allocation2 + $0x50] sm:$0xf] %vm595, %v583
        %617 = vst.msk [vmem:[#allocation2 + $0x54] sm:$0xf] %vm595, %v584
        %618 = vst.msk [vmem:[#allocation2 + $0x58] sm:$0xf] %vm595, %v585
        %619 = vst.msk [vmem:[#allocation2 + $0x5c] sm:$0xf] %vm595, %v586
        %620 = vst.msk [vmem:[#allocation2 + $0x60] sm:$0xf] %vm595, %v587
        %621 = vst.msk [vmem:[#allocation2 + $0x64] sm:$0xf] %vm595, %v588
        %622 = vst.msk [vmem:[#allocation2 + $0x68] sm:$0xf] %vm595, %v589
        %623 = vst.msk [vmem:[#allocation2 + $0x6c] sm:$0xf] %vm595, %v590
        %624 = vst.msk [vmem:[#allocation2 + $0x70] sm:$0xf] %vm595, %v591
        %625 = vst.msk [vmem:[#allocation2 + $0x74] sm:$0xf] %vm595, %v592
        %626 = vst.msk [vmem:[#allocation2 + $0x78] sm:$0xf] %vm595, %v593
        %627 = vst.msk [vmem:[#allocation2 + $0x7c] sm:$0xf] %vm595, %v594
        %v628 = vld [vmem:[#allocation2] sm:$0xf]
        %v629 = vld [vmem:[#allocation2 + $0x4] sm:$0xf]
        %v630 = vld [vmem:[#allocation2 + $0x8] sm:$0xf]
        %v631 = vld [vmem:[#allocation2 + $0xc] sm:$0xf]
        %v632 = vld [vmem:[#allocation2 + $0x10] sm:$0xf]
        %v633 = vld [vmem:[#allocation2 + $0x14] sm:$0xf]
        %v634 = vld [vmem:[#allocation2 + $0x18] sm:$0xf]
        %v635 = vld [vmem:[#allocation2 + $0x1c] sm:$0xf]
        %v636 = vld [vmem:[#allocation2 + $0x20] sm:$0xf]
        %v637 = vld [vmem:[#allocation2 + $0x24] sm:$0xf]
        %v638 = vld [vmem:[#allocation2 + $0x28] sm:$0xf]
        %v639 = vld [vmem:[#allocation2 + $0x2c] sm:$0xf]
        %v640 = vld [vmem:[#allocation2 + $0x30] sm:$0xf]
        %v641 = vld [vmem:[#allocation2 + $0x34] sm:$0xf]
        %v642 = vld [vmem:[#allocation2 + $0x38] sm:$0xf]
        %v643 = vld [vmem:[#allocation2 + $0x3c] sm:$0xf]
        %v644 = vld [vmem:[#allocation2 + $0x40] sm:$0xf]
        %v645 = vld [vmem:[#allocation2 + $0x44] sm:$0xf]
        %v646 = vld [vmem:[#allocation2 + $0x48] sm:$0xf]
        %v647 = vld [vmem:[#allocation2 + $0x4c] sm:$0xf]
        %v648 = vld [vmem:[#allocation2 + $0x50] sm:$0xf]
        %v649 = vld [vmem:[#allocation2 + $0x54] sm:$0xf]
        %v650 = vld [vmem:[#allocation2 + $0x58] sm:$0xf]
        %v651 = vld [vmem:[#allocation2 + $0x5c] sm:$0xf]
        %v652 = vld [vmem:[#allocation2 + $0x60] sm:$0xf]
        %v653 = vld [vmem:[#allocation2 + $0x64] sm:$0xf]
        %v654 = vld [vmem:[#allocation2 + $0x68] sm:$0xf]
        %v655 = vld [vmem:[#allocation2 + $0x6c] sm:$0xf]
        %v656 = vld [vmem:[#allocation2 + $0x70] sm:$0xf]
        %v657 = vld [vmem:[#allocation2 + $0x74] sm:$0xf]
        %v658 = vld [vmem:[#allocation2 + $0x78] sm:$0xf]
        %v659 = vld [vmem:[#allocation2 + $0x7c] sm:$0xf]
        %v660 = vld [vmem:[%s2] sm:$0xff]
        %v661 = vld [vmem:[%s2 + $0x8] sm:$0xff]
        %v662 = vld [vmem:[%s2 + $0x10] sm:$0xff]
        %v663 = vld [vmem:[%s2 + $0x18] sm:$0xff]
        %v664 = vld [vmem:[%s2 + $0x20] sm:$0xff]
        %v665 = vld [vmem:[%s2 + $0x28] sm:$0xff]
        %v666 = vld [vmem:[%s2 + $0x30] sm:$0xff]
        %v667 = vld [vmem:[%s2 + $0x38] sm:$0xff]
        %v668 = vld [vmem:[%s2 + $0x40] sm:$0xff]
        %v669 = vld [vmem:[%s2 + $0x48] sm:$0xff]
        %v670 = vld [vmem:[%s2 + $0x50] sm:$0xff]
        %v671 = vld [vmem:[%s2 + $0x58] sm:$0xff]
        %v672 = vld [vmem:[%s2 + $0x60] sm:$0xff]
        %v673 = vld [vmem:[%s2 + $0x68] sm:$0xff]
        %v674 = vld [vmem:[%s2 + $0x70] sm:$0xff]
        %v675 = vld [vmem:[%s2 + $0x78] sm:$0xff]
        %v676 = vld [vmem:[%s3] sm:$0x3]
        %v678 = vlaneseq
        %v679 = vshrl.u32 %v678, 7
        %v680 = vsub.s32 0, %v679
        %v681 = vrot.slane %v676, %v680
        %v682 = vlaneseq
        %v683 = vshrl.u32 %v682, 7
        %v684 = vsub.s32 1, %v683
        %v685 = vrot.slane %v676, %v684
        %v720 = vunpack.c.l.b16 %v628
        %v721 = vunpack.c.l.b16 %v629
        %v722 = vunpack.c.l.b16 %v630
        %v723 = vunpack.c.l.b16 %v631
        %v724 = vunpack.c.l.b16 %v632
        %v725 = vunpack.c.l.b16 %v633
        %v726 = vunpack.c.l.b16 %v634
        %v727 = vunpack.c.l.b16 %v635
        %v728 = vunpack.c.l.b16 %v636
        %v729 = vunpack.c.l.b16 %v637
        %v730 = vunpack.c.l.b16 %v638
        %v731 = vunpack.c.l.b16 %v639
        %v732 = vunpack.c.l.b16 %v640
        %v733 = vunpack.c.l.b16 %v641
        %v734 = vunpack.c.l.b16 %v642
        %v735 = vunpack.c.l.b16 %v643
        %v736 = vunpack.c.l.b16 %v644
        %v737 = vunpack.c.l.b16 %v645
        %v738 = vunpack.c.l.b16 %v646
        %v739 = vunpack.c.l.b16 %v647
        %v740 = vunpack.c.l.b16 %v648
        %v741 = vunpack.c.l.b16 %v649
        %v742 = vunpack.c.l.b16 %v650
        %v743 = vunpack.c.l.b16 %v651
        %v744 = vunpack.c.l.b16 %v652
        %v745 = vunpack.c.l.b16 %v653
        %v746 = vunpack.c.l.b16 %v654
        %v747 = vunpack.c.l.b16 %v655
        %v748 = vunpack.c.l.b16 %v656
        %v749 = vunpack.c.l.b16 %v657
        %v750 = vunpack.c.l.b16 %v658
        %v751 = vunpack.c.l.b16 %v659
        %v752 = vpack.c.b16 %v721, %v720
        %v753 = vpack.c.b16 %v723, %v722
        %v754 = vpack.c.b16 %v725, %v724
        %v755 = vpack.c.b16 %v727, %v726
        %v756 = vpack.c.b16 %v729, %v728
        %v757 = vpack.c.b16 %v731, %v730
        %v758 = vpack.c.b16 %v733, %v732
        %v759 = vpack.c.b16 %v735, %v734
        %v760 = vpack.c.b16 %v737, %v736
        %v761 = vpack.c.b16 %v739, %v738
        %v762 = vpack.c.b16 %v741, %v740
        %v763 = vpack.c.b16 %v743, %v742
        %v764 = vpack.c.b16 %v745, %v744
        %v765 = vpack.c.b16 %v747, %v746
        %v766 = vpack.c.b16 %v749, %v748
        %v767 = vpack.c.b16 %v751, %v750
        %v800 = vunpack.c.l.b16 %v660
        %v801 = vunpack.c.h.b16 %v660
        %v802 = vunpack.c.l.b16 %v661
        %v803 = vunpack.c.h.b16 %v661
        %v804 = vunpack.c.l.b16 %v662
        %v805 = vunpack.c.h.b16 %v662
        %v806 = vunpack.c.l.b16 %v663
        %v807 = vunpack.c.h.b16 %v663
        %v808 = vunpack.c.l.b16 %v664
        %v809 = vunpack.c.h.b16 %v664
        %v810 = vunpack.c.l.b16 %v665
        %v811 = vunpack.c.h.b16 %v665
        %v812 = vunpack.c.l.b16 %v666
        %v813 = vunpack.c.h.b16 %v666
        %v814 = vunpack.c.l.b16 %v667
        %v815 = vunpack.c.h.b16 %v667
        %v816 = vunpack.c.l.b16 %v668
        %v817 = vunpack.c.h.b16 %v668
        %v818 = vunpack.c.l.b16 %v669
        %v819 = vunpack.c.h.b16 %v669
        %v820 = vunpack.c.l.b16 %v670
        %v821 = vunpack.c.h.b16 %v670
        %v822 = vunpack.c.l.b16 %v671
        %v823 = vunpack.c.h.b16 %v671
        %v824 = vunpack.c.l.b16 %v672
        %v825 = vunpack.c.h.b16 %v672
        %v826 = vunpack.c.l.b16 %v673
        %v827 = vunpack.c.h.b16 %v673
        %v828 = vunpack.c.l.b16 %v674
        %v829 = vunpack.c.h.b16 %v674
        %v830 = vunpack.c.l.b16 %v675
        %v831 = vunpack.c.h.b16 %v675
        %v832 = vpack.c.b16 %v802, %v800
        %v833 = vpack.c.b16 %v803, %v801
        %v834 = vpack.c.b16 %v806, %v804
        %v835 = vpack.c.b16 %v807, %v805
        %v836 = vpack.c.b16 %v810, %v808
        %v837 = vpack.c.b16 %v811, %v809
        %v838 = vpack.c.b16 %v814, %v812
        %v839 = vpack.c.b16 %v815, %v813
        %v840 = vpack.c.b16 %v818, %v816
        %v841 = vpack.c.b16 %v819, %v817
        %v842 = vpack.c.b16 %v822, %v820
        %v843 = vpack.c.b16 %v823, %v821
        %v844 = vpack.c.b16 %v826, %v824
        %v845 = vpack.c.b16 %v827, %v825
        %v846 = vpack.c.b16 %v830, %v828
        %v847 = vpack.c.b16 %v831, %v829
        %864 = vmatprep.subr.bf16.mxu0 %v847
        %865 = vmatpush1.bf16.msra.mxu0 %v846
        %866 = vmatprep.subr.bf16.mxu0 %v845
        %867 = vmatpush1.bf16.msra.mxu0 %v844
        %868 = vmatprep.subr.bf16.mxu0 %v843
        %869 = vmatpush1.bf16.msra.mxu0 %v842
        %870 = vmatprep.subr.bf16.mxu0 %v841
        %871 = vmatpush1.bf16.msra.mxu0 %v840
        %872 = vmatprep.subr.bf16.mxu0 %v839
        %873 = vmatpush1.bf16.msra.mxu0 %v838
        %874 = vmatprep.subr.bf16.mxu0 %v837
        %875 = vmatpush1.bf16.msra.mxu0 %v836
        %876 = vmatprep.subr.bf16.mxu0 %v835
        %877 = vmatpush1.bf16.msra.mxu0 %v834
        %878 = vmatprep.subr.bf16.mxu0 %v833
        %879 = vmatpush1.bf16.msra.mxu0 %v832
        %880 = vmatprep.subr.bf16.mxu0 0
        %881 = vmatpush2.bf16.msra.mxu0 0
        %882 = vmatprep.subr.bf16.mxu0 0
        %883 = vmatpush2.bf16.msra.mxu0 0
        %884 = vmatprep.subr.bf16.mxu0 0
        %885 = vmatpush2.bf16.msra.mxu0 0
        %886 = vmatprep.subr.bf16.mxu0 0
        %887 = vmatpush2.bf16.msra.mxu0 0
        %888 = vmatprep.subr.bf16.mxu0 0
        %889 = vmatpush2.bf16.msra.mxu0 0
        %890 = vmatprep.subr.bf16.mxu0 0
        %891 = vmatpush2.bf16.msra.mxu0 0
        %892 = vmatprep.subr.bf16.mxu0 0
        %893 = vmatpush2.bf16.msra.mxu0 0
        %894 = vmatprep.subr.bf16.mxu0 0
        %895 = vmatpush2.bf16.msra.mxu0 0
        %896 = vmatprep.mubr.bf16.mxu0 0
        %897 = vmatmul.mubr.bf16.gmra.mxu0 %v752
        %v898 = vpop.f32.mrf.mxu0
        %v899 = vadd.f32 %v681, %v898
        %v900 = vpop.f32.mrf.mxu0
        %v901 = vadd.f32 %v685, %v900
        %v902 = vpop.f32.mrf.mxu0
        %v903 = vadd.f32 %v681, %v902
        %v904 = vpop.f32.mrf.mxu0
        %v905 = vadd.f32 %v685, %v904
        %906 = vmatprep.mubr.bf16.mxu0 0
        %907 = vmatmul.mubr.bf16.gmra.mxu0 %v753
        %v908 = vpop.f32.mrf.mxu0
        %v909 = vadd.f32 %v681, %v908
        %v910 = vpop.f32.mrf.mxu0
        %v911 = vadd.f32 %v685, %v910
        %v912 = vpop.f32.mrf.mxu0
        %v913 = vadd.f32 %v681, %v912
        %v914 = vpop.f32.mrf.mxu0
        %v915 = vadd.f32 %v685, %v914
        %916 = vmatprep.mubr.bf16.mxu0 0
        %917 = vmatmul.mubr.bf16.gmra.mxu0 %v754
        %v918 = vpop.f32.mrf.mxu0
        %v919 = vadd.f32 %v681, %v918
        %v920 = vpop.f32.mrf.mxu0
        %v921 = vadd.f32 %v685, %v920
        %v922 = vpop.f32.mrf.mxu0
        %v923 = vadd.f32 %v681, %v922
        %v924 = vpop.f32.mrf.mxu0
        %v925 = vadd.f32 %v685, %v924
        %926 = vmatprep.mubr.bf16.mxu0 0
        %927 = vmatmul.mubr.bf16.gmra.mxu0 %v755
        %v928 = vpop.f32.mrf.mxu0
        %v929 = vadd.f32 %v681, %v928
        %v930 = vpop.f32.mrf.mxu0
        %v931 = vadd.f32 %v685, %v930
        %v932 = vpop.f32.mrf.mxu0
        %v933 = vadd.f32 %v681, %v932
        %v934 = vpop.f32.mrf.mxu0
        %v935 = vadd.f32 %v685, %v934
        %936 = vmatprep.mubr.bf16.mxu0 0
        %937 = vmatmul.mubr.bf16.gmra.mxu0 %v756
        %v938 = vpop.f32.mrf.mxu0
        %v939 = vadd.f32 %v681, %v938
        %v940 = vpop.f32.mrf.mxu0
        %v941 = vadd.f32 %v685, %v940
        %v942 = vpop.f32.mrf.mxu0
        %v943 = vadd.f32 %v681, %v942
        %v944 = vpop.f32.mrf.mxu0
        %v945 = vadd.f32 %v685, %v944
        %946 = vmatprep.mubr.bf16.mxu0 0
        %947 = vmatmul.mubr.bf16.gmra.mxu0 %v757
        %v948 = vpop.f32.mrf.mxu0
        %v949 = vadd.f32 %v681, %v948
        %v950 = vpop.f32.mrf.mxu0
        %v951 = vadd.f32 %v685, %v950
        %v952 = vpop.f32.mrf.mxu0
        %v953 = vadd.f32 %v681, %v952
        %v954 = vpop.f32.mrf.mxu0
        %v955 = vadd.f32 %v685, %v954
        %956 = vmatprep.mubr.bf16.mxu0 0
        %957 = vmatmul.mubr.bf16.gmra.mxu0 %v758
        %v958 = vpop.f32.mrf.mxu0
        %v959 = vadd.f32 %v681, %v958
        %v960 = vpop.f32.mrf.mxu0
        %v961 = vadd.f32 %v685, %v960
        %v962 = vpop.f32.mrf.mxu0
        %v963 = vadd.f32 %v681, %v962
        %v964 = vpop.f32.mrf.mxu0
        %v965 = vadd.f32 %v685, %v964
        %966 = vmatprep.mubr.bf16.mxu0 0
        %967 = vmatmul.mubr.bf16.gmra.mxu0 %v759
        %v968 = vpop.f32.mrf.mxu0
        %v969 = vadd.f32 %v681, %v968
        %v970 = vpop.f32.mrf.mxu0
        %v971 = vadd.f32 %v685, %v970
        %v972 = vpop.f32.mrf.mxu0
        %v973 = vadd.f32 %v681, %v972
        %v974 = vpop.f32.mrf.mxu0
        %v975 = vadd.f32 %v685, %v974
        %976 = vmatprep.mubr.bf16.mxu0 0
        %977 = vmatmul.mubr.bf16.gmra.mxu0 %v760
        %v978 = vpop.f32.mrf.mxu0
        %v979 = vadd.f32 %v681, %v978
        %v980 = vpop.f32.mrf.mxu0
        %v981 = vadd.f32 %v685, %v980
        %v982 = vpop.f32.mrf.mxu0
        %v983 = vadd.f32 %v681, %v982
        %v984 = vpop.f32.mrf.mxu0
        %v985 = vadd.f32 %v685, %v984
        %986 = vmatprep.mubr.bf16.mxu0 0
        %987 = vmatmul.mubr.bf16.gmra.mxu0 %v761
        %v988 = vpop.f32.mrf.mxu0
        %v989 = vadd.f32 %v681, %v988
        %v990 = vpop.f32.mrf.mxu0
        %v991 = vadd.f32 %v685, %v990
        %v992 = vpop.f32.mrf.mxu0
        %v993 = vadd.f32 %v681, %v992
        %v994 = vpop.f32.mrf.mxu0
        %v995 = vadd.f32 %v685, %v994
        %996 = vmatprep.mubr.bf16.mxu0 0
        %997 = vmatmul.mubr.bf16.gmra.mxu0 %v762
        %v998 = vpop.f32.mrf.mxu0
        %v999 = vadd.f32 %v681, %v998
        %v1000 = vpop.f32.mrf.mxu0
        %v1001 = vadd.f32 %v685, %v1000
        %v1002 = vpop.f32.mrf.mxu0
        %v1003 = vadd.f32 %v681, %v1002
        %v1004 = vpop.f32.mrf.mxu0
        %v1005 = vadd.f32 %v685, %v1004
        %1006 = vmatprep.mubr.bf16.mxu0 0
        %1007 = vmatmul.mubr.bf16.gmra.mxu0 %v763
        %v1008 = vpop.f32.mrf.mxu0
        %v1009 = vadd.f32 %v681, %v1008
        %v1010 = vpop.f32.mrf.mxu0
        %v1011 = vadd.f32 %v685, %v1010
        %v1012 = vpop.f32.mrf.mxu0
        %v1013 = vadd.f32 %v681, %v1012
        %v1014 = vpop.f32.mrf.mxu0
        %v1015 = vadd.f32 %v685, %v1014
        %1016 = vmatprep.mubr.bf16.mxu0 0
        %1017 = vmatmul.mubr.bf16.gmra.mxu0 %v764
        %v1018 = vpop.f32.mrf.mxu0
        %v1019 = vadd.f32 %v681, %v1018
        %v1020 = vpop.f32.mrf.mxu0
        %v1021 = vadd.f32 %v685, %v1020
        %v1022 = vpop.f32.mrf.mxu0
        %v1023 = vadd.f32 %v681, %v1022
        %v1024 = vpop.f32.mrf.mxu0
        %v1025 = vadd.f32 %v685, %v1024
        %1026 = vmatprep.mubr.bf16.mxu0 0
        %1027 = vmatmul.mubr.bf16.gmra.mxu0 %v765
        %v1028 = vpop.f32.mrf.mxu0
        %v1029 = vadd.f32 %v681, %v1028
        %v1030 = vpop.f32.mrf.mxu0
        %v1031 = vadd.f32 %v685, %v1030
        %v1032 = vpop.f32.mrf.mxu0
        %v1033 = vadd.f32 %v681, %v1032
        %v1034 = vpop.f32.mrf.mxu0
        %v1035 = vadd.f32 %v685, %v1034
        %1036 = vmatprep.mubr.bf16.mxu0 0
        %1037 = vmatmul.mubr.bf16.gmra.mxu0 %v766
        %v1038 = vpop.f32.mrf.mxu0
        %v1039 = vadd.f32 %v681, %v1038
        %v1040 = vpop.f32.mrf.mxu0
        %v1041 = vadd.f32 %v685, %v1040
        %v1042 = vpop.f32.mrf.mxu0
        %v1043 = vadd.f32 %v681, %v1042
        %v1044 = vpop.f32.mrf.mxu0
        %v1045 = vadd.f32 %v685, %v1044
        %1046 = vmatprep.mubr.bf16.mxu0 0
        %1047 = vmatmul.mubr.bf16.gmra.mxu0 %v767
        %v1048 = vpop.f32.mrf.mxu0
        %v1049 = vadd.f32 %v681, %v1048
        %v1050 = vpop.f32.mrf.mxu0
        %v1051 = vadd.f32 %v685, %v1050
        %v1052 = vpop.f32.mrf.mxu0
        %v1053 = vadd.f32 %v681, %v1052
        %v1054 = vpop.f32.mrf.mxu0
        %v1055 = vadd.f32 %v685, %v1054
        %1056 = vdwg.mxu0
        %v1057 = vmax.f32 %v899, 0.0
        %v1058 = vmax.f32 %v901, 0.0
        %v1059 = vmax.f32 %v903, 0.0
        %v1060 = vmax.f32 %v905, 0.0
        %v1061 = vmax.f32 %v909, 0.0
        %v1062 = vmax.f32 %v911, 0.0
        %v1063 = vmax.f32 %v913, 0.0
        %v1064 = vmax.f32 %v915, 0.0
        %v1065 = vmax.f32 %v919, 0.0
        %v1066 = vmax.f32 %v921, 0.0
        %v1067 = vmax.f32 %v923, 0.0
        %v1068 = vmax.f32 %v925, 0.0
        %v1069 = vmax.f32 %v929, 0.0
        %v1070 = vmax.f32 %v931, 0.0
        %v1071 = vmax.f32 %v933, 0.0
        %v1072 = vmax.f32 %v935, 0.0
        %v1073 = vmax.f32 %v939, 0.0
        %v1074 = vmax.f32 %v941, 0.0
        %v1075 = vmax.f32 %v943, 0.0
        %v1076 = vmax.f32 %v945, 0.0
        %v1077 = vmax.f32 %v949, 0.0
        %v1078 = vmax.f32 %v951, 0.0
        %v1079 = vmax.f32 %v953, 0.0
        %v1080 = vmax.f32 %v955, 0.0
        %v1081 = vmax.f32 %v959, 0.0
        %v1082 = vmax.f32 %v961, 0.0
        %v1083 = vmax.f32 %v963, 0.0
        %v1084 = vmax.f32 %v965, 0.0
        %v1085 = vmax.f32 %v969, 0.0
        %v1086 = vmax.f32 %v971, 0.0
        %v1087 = vmax.f32 %v973, 0.0
        %v1088 = vmax.f32 %v975, 0.0
        %v1089 = vmax.f32 %v979, 0.0
        %v1090 = vmax.f32 %v981, 0.0
        %v1091 = vmax.f32 %v983, 0.0
        %v1092 = vmax.f32 %v985, 0.0
        %v1093 = vmax.f32 %v989, 0.0
        %v1094 = vmax.f32 %v991, 0.0
        %v1095 = vmax.f32 %v993, 0.0
        %v1096 = vmax.f32 %v995, 0.0
        %v1097 = vmax.f32 %v999, 0.0
        %v1098 = vmax.f32 %v1001, 0.0
        %v1099 = vmax.f32 %v1003, 0.0
        %v1100 = vmax.f32 %v1005, 0.0
        %v1101 = vmax.f32 %v1009, 0.0
        %v1102 = vmax.f32 %v1011, 0.0
        %v1103 = vmax.f32 %v1013, 0.0
        %v1104 = vmax.f32 %v1015, 0.0
        %v1105 = vmax.f32 %v1019, 0.0
        %v1106 = vmax.f32 %v1021, 0.0
        %v1107 = vmax.f32 %v1023, 0.0
        %v1108 = vmax.f32 %v1025, 0.0
        %v1109 = vmax.f32 %v1029, 0.0
        %v1110 = vmax.f32 %v1031, 0.0
        %v1111 = vmax.f32 %v1033, 0.0
        %v1112 = vmax.f32 %v1035, 0.0
        %v1113 = vmax.f32 %v1039, 0.0
        %v1114 = vmax.f32 %v1041, 0.0
        %v1115 = vmax.f32 %v1043, 0.0
        %v1116 = vmax.f32 %v1045, 0.0
        %v1117 = vmax.f32 %v1049, 0.0
        %v1118 = vmax.f32 %v1051, 0.0
        %v1119 = vmax.f32 %v1053, 0.0
        %v1120 = vmax.f32 %v1055, 0.0
        %v1121 = vpack.c.bf16 %v1059, %v1057
        %v1122 = vpack.c.bf16 %v1060, %v1058
        %v1123 = vpack.c.bf16 %v1063, %v1061
        %v1124 = vpack.c.bf16 %v1064, %v1062
        %v1125 = vpack.c.bf16 %v1067, %v1065
        %v1126 = vpack.c.bf16 %v1068, %v1066
        %v1127 = vpack.c.bf16 %v1071, %v1069
        %v1128 = vpack.c.bf16 %v1072, %v1070
        %v1129 = vpack.c.bf16 %v1075, %v1073
        %v1130 = vpack.c.bf16 %v1076, %v1074
        %v1131 = vpack.c.bf16 %v1079, %v1077
        %v1132 = vpack.c.bf16 %v1080, %v1078
        %v1133 = vpack.c.bf16 %v1083, %v1081
        %v1134 = vpack.c.bf16 %v1084, %v1082
        %v1135 = vpack.c.bf16 %v1087, %v1085
        %v1136 = vpack.c.bf16 %v1088, %v1086
        %v1137 = vpack.c.bf16 %v1091, %v1089
        %v1138 = vpack.c.bf16 %v1092, %v1090
        %v1139 = vpack.c.bf16 %v1095, %v1093
        %v1140 = vpack.c.bf16 %v1096, %v1094
        %v1141 = vpack.c.bf16 %v1099, %v1097
        %v1142 = vpack.c.bf16 %v1100, %v1098
        %v1143 = vpack.c.bf16 %v1103, %v1101
        %v1144 = vpack.c.bf16 %v1104, %v1102
        %v1145 = vpack.c.bf16 %v1107, %v1105
        %v1146 = vpack.c.bf16 %v1108, %v1106
        %v1147 = vpack.c.bf16 %v1111, %v1109
        %v1148 = vpack.c.bf16 %v1112, %v1110
        %v1149 = vpack.c.bf16 %v1115, %v1113
        %v1150 = vpack.c.bf16 %v1116, %v1114
        %v1151 = vpack.c.bf16 %v1119, %v1117
        %v1152 = vpack.c.bf16 %v1120, %v1118
        %v1153 = vld [vmem:[%s4] sm:$0xf]
        %v1154 = vld [vmem:[%s4 + $0x4] sm:$0xf]
        %v1155 = vld [vmem:[%s4 + $0x8] sm:$0xf]
        %v1156 = vld [vmem:[%s4 + $0xc] sm:$0xf]
        %v1157 = vld [vmem:[%s4 + $0x10] sm:$0xf]
        %v1158 = vld [vmem:[%s4 + $0x14] sm:$0xf]
        %v1159 = vld [vmem:[%s4 + $0x18] sm:$0xf]
        %v1160 = vld [vmem:[%s4 + $0x1c] sm:$0xf]
        %v1161 = vld [vmem:[%s4 + $0x20] sm:$0xf]
        %v1162 = vld [vmem:[%s4 + $0x24] sm:$0xf]
        %v1163 = vld [vmem:[%s4 + $0x28] sm:$0xf]
        %v1164 = vld [vmem:[%s4 + $0x2c] sm:$0xf]
        %v1165 = vld [vmem:[%s4 + $0x30] sm:$0xf]
        %v1166 = vld [vmem:[%s4 + $0x34] sm:$0xf]
        %v1167 = vld [vmem:[%s4 + $0x38] sm:$0xf]
        %v1168 = vld [vmem:[%s4 + $0x3c] sm:$0xf]
        %v1169 = vld [vmem:[%s4 + $0x40] sm:$0xf]
        %v1170 = vld [vmem:[%s4 + $0x44] sm:$0xf]
        %v1171 = vld [vmem:[%s4 + $0x48] sm:$0xf]
        %v1172 = vld [vmem:[%s4 + $0x4c] sm:$0xf]
        %v1173 = vld [vmem:[%s4 + $0x50] sm:$0xf]
        %v1174 = vld [vmem:[%s4 + $0x54] sm:$0xf]
        %v1175 = vld [vmem:[%s4 + $0x58] sm:$0xf]
        %v1176 = vld [vmem:[%s4 + $0x5c] sm:$0xf]
        %v1177 = vld [vmem:[%s4 + $0x60] sm:$0xf]
        %v1178 = vld [vmem:[%s4 + $0x64] sm:$0xf]
        %v1179 = vld [vmem:[%s4 + $0x68] sm:$0xf]
        %v1180 = vld [vmem:[%s4 + $0x6c] sm:$0xf]
        %v1181 = vld [vmem:[%s4 + $0x70] sm:$0xf]
        %v1182 = vld [vmem:[%s4 + $0x74] sm:$0xf]
        %v1183 = vld [vmem:[%s4 + $0x78] sm:$0xf]
        %v1184 = vld [vmem:[%s4 + $0x7c] sm:$0xf]
        %v1185 = vld [vmem:[%s5] sm:$0x1]
        %v1187 = vlaneseq
        %v1188 = vshrl.u32 %v1187, 7
        %v1189 = vsub.s32 0, %v1188
        %v1190 = vrot.slane %v1185, %v1189
        %v1224 = vunpack.c.l.b16 %v1153
        %v1225 = vunpack.c.l.b16 %v1154
        %v1226 = vunpack.c.l.b16 %v1155
        %v1227 = vunpack.c.l.b16 %v1156
        %v1228 = vunpack.c.l.b16 %v1157
        %v1229 = vunpack.c.l.b16 %v1158
        %v1230 = vunpack.c.l.b16 %v1159
        %v1231 = vunpack.c.l.b16 %v1160
        %v1232 = vunpack.c.l.b16 %v1161
        %v1233 = vunpack.c.l.b16 %v1162
        %v1234 = vunpack.c.l.b16 %v1163
        %v1235 = vunpack.c.l.b16 %v1164
        %v1236 = vunpack.c.l.b16 %v1165
        %v1237 = vunpack.c.l.b16 %v1166
        %v1238 = vunpack.c.l.b16 %v1167
        %v1239 = vunpack.c.l.b16 %v1168
        %v1240 = vunpack.c.l.b16 %v1169
        %v1241 = vunpack.c.l.b16 %v1170
        %v1242 = vunpack.c.l.b16 %v1171
        %v1243 = vunpack.c.l.b16 %v1172
        %v1244 = vunpack.c.l.b16 %v1173
        %v1245 = vunpack.c.l.b16 %v1174
        %v1246 = vunpack.c.l.b16 %v1175
        %v1247 = vunpack.c.l.b16 %v1176
        %v1248 = vunpack.c.l.b16 %v1177
        %v1249 = vunpack.c.l.b16 %v1178
        %v1250 = vunpack.c.l.b16 %v1179
        %v1251 = vunpack.c.l.b16 %v1180
        %v1252 = vunpack.c.l.b16 %v1181
        %v1253 = vunpack.c.l.b16 %v1182
        %v1254 = vunpack.c.l.b16 %v1183
        %v1255 = vunpack.c.l.b16 %v1184
        %v1256 = vpack.c.b16 %v1225, %v1224
        %v1257 = vpack.c.b16 %v1227, %v1226
        %v1258 = vpack.c.b16 %v1229, %v1228
        %v1259 = vpack.c.b16 %v1231, %v1230
        %v1260 = vpack.c.b16 %v1233, %v1232
        %v1261 = vpack.c.b16 %v1235, %v1234
        %v1262 = vpack.c.b16 %v1237, %v1236
        %v1263 = vpack.c.b16 %v1239, %v1238
        %v1264 = vpack.c.b16 %v1241, %v1240
        %v1265 = vpack.c.b16 %v1243, %v1242
        %v1266 = vpack.c.b16 %v1245, %v1244
        %v1267 = vpack.c.b16 %v1247, %v1246
        %v1268 = vpack.c.b16 %v1249, %v1248
        %v1269 = vpack.c.b16 %v1251, %v1250
        %v1270 = vpack.c.b16 %v1253, %v1252
        %v1271 = vpack.c.b16 %v1255, %v1254
        %1288 = vmatprep.subr.bf16.mxu0 0
        %1289 = vmatpush1.bf16.msra.mxu0 %v1263
        %1290 = vmatprep.subr.bf16.mxu0 0
        %1291 = vmatpush1.bf16.msra.mxu0 %v1262
        %1292 = vmatprep.subr.bf16.mxu0 0
        %1293 = vmatpush1.bf16.msra.mxu0 %v1261
        %1294 = vmatprep.subr.bf16.mxu0 0
        %1295 = vmatpush1.bf16.msra.mxu0 %v1260
        %1296 = vmatprep.subr.bf16.mxu0 0
        %1297 = vmatpush1.bf16.msra.mxu0 %v1259
        %1298 = vmatprep.subr.bf16.mxu0 0
        %1299 = vmatpush1.bf16.msra.mxu0 %v1258
        %1300 = vmatprep.subr.bf16.mxu0 0
        %1301 = vmatpush1.bf16.msra.mxu0 %v1257
        %1302 = vmatprep.subr.bf16.mxu0 0
        %1303 = vmatpush1.bf16.msra.mxu0 %v1256
        %1304 = vmatprep.subr.bf16.mxu0 0
        %1305 = vmatpush2.bf16.msra.mxu0 %v1271
        %1306 = vmatprep.subr.bf16.mxu0 0
        %1307 = vmatpush2.bf16.msra.mxu0 %v1270
        %1308 = vmatprep.subr.bf16.mxu0 0
        %1309 = vmatpush2.bf16.msra.mxu0 %v1269
        %1310 = vmatprep.subr.bf16.mxu0 0
        %1311 = vmatpush2.bf16.msra.mxu0 %v1268
        %1312 = vmatprep.subr.bf16.mxu0 0
        %1313 = vmatpush2.bf16.msra.mxu0 %v1267
        %1314 = vmatprep.subr.bf16.mxu0 0
        %1315 = vmatpush2.bf16.msra.mxu0 %v1266
        %1316 = vmatprep.subr.bf16.mxu0 0
        %1317 = vmatpush2.bf16.msra.mxu0 %v1265
        %1318 = vmatprep.subr.bf16.mxu0 0
        %1319 = vmatpush2.bf16.msra.mxu0 %v1264
        %1320 = vmatprep.mubr.bf16.mxu0 %v1122
        %1321 = vmatmul.mubr.bf16.gmra.mxu0 %v1121
        %v1322 = vpop.f32.mrf.mxu0
        %v1323 = vadd.f32 %v1190, %v1322
        %v1324 = vpop.f32.mrf.mxu0
        %v1325 = vpop.f32.mrf.mxu0
        %v1326 = vadd.f32 %v1190, %v1325
        %v1327 = vpop.f32.mrf.mxu0
        %1328 = vmatprep.mubr.bf16.mxu0 %v1124
        %1329 = vmatmul.mubr.bf16.gmra.mxu0 %v1123
        %v1330 = vpop.f32.mrf.mxu0
        %v1331 = vadd.f32 %v1190, %v1330
        %v1332 = vpop.f32.mrf.mxu0
        %v1333 = vpop.f32.mrf.mxu0
        %v1334 = vadd.f32 %v1190, %v1333
        %v1335 = vpop.f32.mrf.mxu0
        %1336 = vmatprep.mubr.bf16.mxu0 %v1126
        %1337 = vmatmul.mubr.bf16.gmra.mxu0 %v1125
        %v1338 = vpop.f32.mrf.mxu0
        %v1339 = vadd.f32 %v1190, %v1338
        %v1340 = vpop.f32.mrf.mxu0
        %v1341 = vpop.f32.mrf.mxu0
        %v1342 = vadd.f32 %v1190, %v1341
        %v1343 = vpop.f32.mrf.mxu0
        %1344 = vmatprep.mubr.bf16.mxu0 %v1128
        %1345 = vmatmul.mubr.bf16.gmra.mxu0 %v1127
        %v1346 = vpop.f32.mrf.mxu0
        %v1347 = vadd.f32 %v1190, %v1346
        %v1348 = vpop.f32.mrf.mxu0
        %v1349 = vpop.f32.mrf.mxu0
        %v1350 = vadd.f32 %v1190, %v1349
        %v1351 = vpop.f32.mrf.mxu0
        %1352 = vmatprep.mubr.bf16.mxu0 %v1130
        %1353 = vmatmul.mubr.bf16.gmra.mxu0 %v1129
        %v1354 = vpop.f32.mrf.mxu0
        %v1355 = vadd.f32 %v1190, %v1354
        %v1356 = vpop.f32.mrf.mxu0
        %v1357 = vpop.f32.mrf.mxu0
        %v1358 = vadd.f32 %v1190, %v1357
        %v1359 = vpop.f32.mrf.mxu0
        %1360 = vmatprep.mubr.bf16.mxu0 %v1132
        %1361 = vmatmul.mubr.bf16.gmra.mxu0 %v1131
        %v1362 = vpop.f32.mrf.mxu0
        %v1363 = vadd.f32 %v1190, %v1362
        %v1364 = vpop.f32.mrf.mxu0
        %v1365 = vpop.f32.mrf.mxu0
        %v1366 = vadd.f32 %v1190, %v1365
        %v1367 = vpop.f32.mrf.mxu0
        %1368 = vmatprep.mubr.bf16.mxu0 %v1134
        %1369 = vmatmul.mubr.bf16.gmra.mxu0 %v1133
        %v1370 = vpop.f32.mrf.mxu0
        %v1371 = vadd.f32 %v1190, %v1370
        %v1372 = vpop.f32.mrf.mxu0
        %v1373 = vpop.f32.mrf.mxu0
        %v1374 = vadd.f32 %v1190, %v1373
        %v1375 = vpop.f32.mrf.mxu0
        %1376 = vmatprep.mubr.bf16.mxu0 %v1136
        %1377 = vmatmul.mubr.bf16.gmra.mxu0 %v1135
        %v1378 = vpop.f32.mrf.mxu0
        %v1379 = vadd.f32 %v1190, %v1378
        %v1380 = vpop.f32.mrf.mxu0
        %v1381 = vpop.f32.mrf.mxu0
        %v1382 = vadd.f32 %v1190, %v1381
        %v1383 = vpop.f32.mrf.mxu0
        %1384 = vmatprep.mubr.bf16.mxu0 %v1138
        %1385 = vmatmul.mubr.bf16.gmra.mxu0 %v1137
        %v1386 = vpop.f32.mrf.mxu0
        %v1387 = vadd.f32 %v1190, %v1386
        %v1388 = vpop.f32.mrf.mxu0
        %v1389 = vpop.f32.mrf.mxu0
        %v1390 = vadd.f32 %v1190, %v1389
        %v1391 = vpop.f32.mrf.mxu0
        %1392 = vmatprep.mubr.bf16.mxu0 %v1140
        %1393 = vmatmul.mubr.bf16.gmra.mxu0 %v1139
        %v1394 = vpop.f32.mrf.mxu0
        %v1395 = vadd.f32 %v1190, %v1394
        %v1396 = vpop.f32.mrf.mxu0
        %v1397 = vpop.f32.mrf.mxu0
        %v1398 = vadd.f32 %v1190, %v1397
        %v1399 = vpop.f32.mrf.mxu0
        %1400 = vmatprep.mubr.bf16.mxu0 %v1142
        %1401 = vmatmul.mubr.bf16.gmra.mxu0 %v1141
        %v1402 = vpop.f32.mrf.mxu0
        %v1403 = vadd.f32 %v1190, %v1402
        %v1404 = vpop.f32.mrf.mxu0
        %v1405 = vpop.f32.mrf.mxu0
        %v1406 = vadd.f32 %v1190, %v1405
        %v1407 = vpop.f32.mrf.mxu0
        %1408 = vmatprep.mubr.bf16.mxu0 %v1144
        %1409 = vmatmul.mubr.bf16.gmra.mxu0 %v1143
        %v1410 = vpop.f32.mrf.mxu0
        %v1411 = vadd.f32 %v1190, %v1410
        %v1412 = vpop.f32.mrf.mxu0
        %v1413 = vpop.f32.mrf.mxu0
        %v1414 = vadd.f32 %v1190, %v1413
        %v1415 = vpop.f32.mrf.mxu0
        %1416 = vmatprep.mubr.bf16.mxu0 %v1146
        %1417 = vmatmul.mubr.bf16.gmra.mxu0 %v1145
        %v1418 = vpop.f32.mrf.mxu0
        %v1419 = vadd.f32 %v1190, %v1418
        %v1420 = vpop.f32.mrf.mxu0
        %v1421 = vpop.f32.mrf.mxu0
        %v1422 = vadd.f32 %v1190, %v1421
        %v1423 = vpop.f32.mrf.mxu0
        %1424 = vmatprep.mubr.bf16.mxu0 %v1148
        %1425 = vmatmul.mubr.bf16.gmra.mxu0 %v1147
        %v1426 = vpop.f32.mrf.mxu0
        %v1427 = vadd.f32 %v1190, %v1426
        %v1428 = vpop.f32.mrf.mxu0
        %v1429 = vpop.f32.mrf.mxu0
        %v1430 = vadd.f32 %v1190, %v1429
        %v1431 = vpop.f32.mrf.mxu0
        %1432 = vmatprep.mubr.bf16.mxu0 %v1150
        %1433 = vmatmul.mubr.bf16.gmra.mxu0 %v1149
        %v1434 = vpop.f32.mrf.mxu0
        %v1435 = vadd.f32 %v1190, %v1434
        %v1436 = vpop.f32.mrf.mxu0
        %v1437 = vpop.f32.mrf.mxu0
        %v1438 = vadd.f32 %v1190, %v1437
        %v1439 = vpop.f32.mrf.mxu0
        %1440 = vmatprep.mubr.bf16.mxu0 %v1152
        %1441 = vmatmul.mubr.bf16.gmra.mxu0 %v1151
        %v1442 = vpop.f32.mrf.mxu0
        %v1443 = vadd.f32 %v1190, %v1442
        %v1444 = vpop.f32.mrf.mxu0
        %v1445 = vpop.f32.mrf.mxu0
        %v1446 = vadd.f32 %v1190, %v1445
        %v1447 = vpop.f32.mrf.mxu0
        %1448 = vdwg.mxu0
        %v1449 = vmax.f32 %v1323, 0.0
        %v1450 = vmax.f32 %v1326, 0.0
        %v1451 = vmax.f32 %v1331, 0.0
        %v1452 = vmax.f32 %v1334, 0.0
        %v1453 = vmax.f32 %v1339, 0.0
        %v1454 = vmax.f32 %v1342, 0.0
        %v1455 = vmax.f32 %v1347, 0.0
        %v1456 = vmax.f32 %v1350, 0.0
        %v1457 = vmax.f32 %v1355, 0.0
        %v1458 = vmax.f32 %v1358, 0.0
        %v1459 = vmax.f32 %v1363, 0.0
        %v1460 = vmax.f32 %v1366, 0.0
        %v1461 = vmax.f32 %v1371, 0.0
        %v1462 = vmax.f32 %v1374, 0.0
        %v1463 = vmax.f32 %v1379, 0.0
        %v1464 = vmax.f32 %v1382, 0.0
        %v1465 = vmax.f32 %v1387, 0.0
        %v1466 = vmax.f32 %v1390, 0.0
        %v1467 = vmax.f32 %v1395, 0.0
        %v1468 = vmax.f32 %v1398, 0.0
        %v1469 = vmax.f32 %v1403, 0.0
        %v1470 = vmax.f32 %v1406, 0.0
        %v1471 = vmax.f32 %v1411, 0.0
        %v1472 = vmax.f32 %v1414, 0.0
        %v1473 = vmax.f32 %v1419, 0.0
        %v1474 = vmax.f32 %v1422, 0.0
        %v1475 = vmax.f32 %v1427, 0.0
        %v1476 = vmax.f32 %v1430, 0.0
        %v1477 = vmax.f32 %v1435, 0.0
        %v1478 = vmax.f32 %v1438, 0.0
        %v1479 = vmax.f32 %v1443, 0.0
        %v1480 = vmax.f32 %v1446, 0.0
        %v1481 = vpack.c.bf16 %v1450, %v1449
        %v1482 = vpack.c.bf16 %v1452, %v1451
        %v1483 = vpack.c.bf16 %v1454, %v1453
        %v1484 = vpack.c.bf16 %v1456, %v1455
        %v1485 = vpack.c.bf16 %v1458, %v1457
        %v1486 = vpack.c.bf16 %v1460, %v1459
        %v1487 = vpack.c.bf16 %v1462, %v1461
        %v1488 = vpack.c.bf16 %v1464, %v1463
        %v1489 = vpack.c.bf16 %v1466, %v1465
        %v1490 = vpack.c.bf16 %v1468, %v1467
        %v1491 = vpack.c.bf16 %v1470, %v1469
        %v1492 = vpack.c.bf16 %v1472, %v1471
        %v1493 = vpack.c.bf16 %v1474, %v1473
        %v1494 = vpack.c.bf16 %v1476, %v1475
        %v1495 = vpack.c.bf16 %v1478, %v1477
        %v1496 = vpack.c.bf16 %v1480, %v1479
        %v1497 = vld [vmem:[%s6] sm:$0xf]
        %v1498 = vld [vmem:[%s6 + $0x4] sm:$0xf]
        %v1499 = vld [vmem:[%s6 + $0x8] sm:$0xf]
        %v1500 = vld [vmem:[%s6 + $0xc] sm:$0xf]
        %v1501 = vld [vmem:[%s6 + $0x10] sm:$0xf]
        %v1502 = vld [vmem:[%s6 + $0x14] sm:$0xf]
        %v1503 = vld [vmem:[%s6 + $0x18] sm:$0xf]
        %v1504 = vld [vmem:[%s6 + $0x1c] sm:$0xf]
        %v1505 = vld [vmem:[%s6 + $0x20] sm:$0xf]
        %v1506 = vld [vmem:[%s6 + $0x24] sm:$0xf]
        %v1507 = vld [vmem:[%s6 + $0x28] sm:$0xf]
        %v1508 = vld [vmem:[%s6 + $0x2c] sm:$0xf]
        %v1509 = vld [vmem:[%s6 + $0x30] sm:$0xf]
        %v1510 = vld [vmem:[%s6 + $0x34] sm:$0xf]
        %v1511 = vld [vmem:[%s6 + $0x38] sm:$0xf]
        %v1512 = vld [vmem:[%s6 + $0x3c] sm:$0xf]
        %v1513 = vld [vmem:[%s7] sm:$0x1]
        %v1515 = vlaneseq
        %v1516 = vshrl.u32 %v1515, 7
        %v1517 = vsub.s32 0, %v1516
        %v1518 = vrot.slane %v1513, %v1517
        %v1536 = vunpack.c.l.b16 %v1497
        %v1537 = vunpack.c.l.b16 %v1498
        %v1538 = vunpack.c.l.b16 %v1499
        %v1539 = vunpack.c.l.b16 %v1500
        %v1540 = vunpack.c.l.b16 %v1501
        %v1541 = vunpack.c.l.b16 %v1502
        %v1542 = vunpack.c.l.b16 %v1503
        %v1543 = vunpack.c.l.b16 %v1504
        %v1544 = vunpack.c.l.b16 %v1505
        %v1545 = vunpack.c.l.b16 %v1506
        %v1546 = vunpack.c.l.b16 %v1507
        %v1547 = vunpack.c.l.b16 %v1508
        %v1548 = vunpack.c.l.b16 %v1509
        %v1549 = vunpack.c.l.b16 %v1510
        %v1550 = vunpack.c.l.b16 %v1511
        %v1551 = vunpack.c.l.b16 %v1512
        %v1552 = vpack.c.b16 %v1537, %v1536
        %v1553 = vpack.c.b16 %v1539, %v1538
        %v1554 = vpack.c.b16 %v1541, %v1540
        %v1555 = vpack.c.b16 %v1543, %v1542
        %v1556 = vpack.c.b16 %v1545, %v1544
        %v1557 = vpack.c.b16 %v1547, %v1546
        %v1558 = vpack.c.b16 %v1549, %v1548
        %v1559 = vpack.c.b16 %v1551, %v1550
        %1568 = vmatprep.subr.bf16.mxu0 0
        %1569 = vmatpush1.bf16.msra.mxu0 %v1559
        %1570 = vmatprep.subr.bf16.mxu0 0
        %1571 = vmatpush1.bf16.msra.mxu0 %v1558
        %1572 = vmatprep.subr.bf16.mxu0 0
        %1573 = vmatpush1.bf16.msra.mxu0 %v1557
        %1574 = vmatprep.subr.bf16.mxu0 0
        %1575 = vmatpush1.bf16.msra.mxu0 %v1556
        %1576 = vmatprep.subr.bf16.mxu0 0
        %1577 = vmatpush1.bf16.msra.mxu0 %v1555
        %1578 = vmatprep.subr.bf16.mxu0 0
        %1579 = vmatpush1.bf16.msra.mxu0 %v1554
        %1580 = vmatprep.subr.bf16.mxu0 0
        %1581 = vmatpush1.bf16.msra.mxu0 %v1553
        %1582 = vmatprep.subr.bf16.mxu0 0
        %1583 = vmatpush1.bf16.msra.mxu0 %v1552
        %1584 = vmatprep.subr.bf16.mxu0 0
        %1585 = vmatpush2.bf16.msra.mxu0 0
        %1586 = vmatprep.subr.bf16.mxu0 0
        %1587 = vmatpush2.bf16.msra.mxu0 0
        %1588 = vmatprep.subr.bf16.mxu0 0
        %1589 = vmatpush2.bf16.msra.mxu0 0
        %1590 = vmatprep.subr.bf16.mxu0 0
        %1591 = vmatpush2.bf16.msra.mxu0 0
        %1592 = vmatprep.subr.bf16.mxu0 0
        %1593 = vmatpush2.bf16.msra.mxu0 0
        %1594 = vmatprep.subr.bf16.mxu0 0
        %1595 = vmatpush2.bf16.msra.mxu0 0
        %1596 = vmatprep.subr.bf16.mxu0 0
        %1597 = vmatpush2.bf16.msra.mxu0 0
        %1598 = vmatprep.subr.bf16.mxu0 0
        %1599 = vmatpush2.bf16.msra.mxu0 0
        %1600 = vmatprep.mubr.bf16.mxu0 0
        %1601 = vmatmul.mubr.bf16.gmra.mxu0 %v1481
        %v1602 = vpop.f32.mrf.mxu0
        %v1603 = vadd.f32 %v1518, %v1602
        %v1604 = vpop.f32.mrf.mxu0
        %v1605 = vpop.f32.mrf.mxu0
        %v1606 = vadd.f32 %v1518, %v1605
        %v1607 = vpop.f32.mrf.mxu0
        %1608 = vmatprep.mubr.bf16.mxu0 0
        %1609 = vmatmul.mubr.bf16.gmra.mxu0 %v1482
        %v1610 = vpop.f32.mrf.mxu0
        %v1611 = vadd.f32 %v1518, %v1610
        %v1612 = vpop.f32.mrf.mxu0
        %v1613 = vpop.f32.mrf.mxu0
        %v1614 = vadd.f32 %v1518, %v1613
        %v1615 = vpop.f32.mrf.mxu0
        %1616 = vmatprep.mubr.bf16.mxu0 0
        %1617 = vmatmul.mubr.bf16.gmra.mxu0 %v1483
        %v1618 = vpop.f32.mrf.mxu0
        %v1619 = vadd.f32 %v1518, %v1618
        %v1620 = vpop.f32.mrf.mxu0
        %v1621 = vpop.f32.mrf.mxu0
        %v1622 = vadd.f32 %v1518, %v1621
        %v1623 = vpop.f32.mrf.mxu0
        %1624 = vmatprep.mubr.bf16.mxu0 0
        %1625 = vmatmul.mubr.bf16.gmra.mxu0 %v1484
        %v1626 = vpop.f32.mrf.mxu0
        %v1627 = vadd.f32 %v1518, %v1626
        %v1628 = vpop.f32.mrf.mxu0
        %v1629 = vpop.f32.mrf.mxu0
        %v1630 = vadd.f32 %v1518, %v1629
        %v1631 = vpop.f32.mrf.mxu0
        %1632 = vmatprep.mubr.bf16.mxu0 0
        %1633 = vmatmul.mubr.bf16.gmra.mxu0 %v1485
        %v1634 = vpop.f32.mrf.mxu0
        %v1635 = vadd.f32 %v1518, %v1634
        %v1636 = vpop.f32.mrf.mxu0
        %v1637 = vpop.f32.mrf.mxu0
        %v1638 = vadd.f32 %v1518, %v1637
        %v1639 = vpop.f32.mrf.mxu0
        %1640 = vmatprep.mubr.bf16.mxu0 0
        %1641 = vmatmul.mubr.bf16.gmra.mxu0 %v1486
        %v1642 = vpop.f32.mrf.mxu0
        %v1643 = vadd.f32 %v1518, %v1642
        %v1644 = vpop.f32.mrf.mxu0
        %v1645 = vpop.f32.mrf.mxu0
        %v1646 = vadd.f32 %v1518, %v1645
        %v1647 = vpop.f32.mrf.mxu0
        %1648 = vmatprep.mubr.bf16.mxu0 0
        %1649 = vmatmul.mubr.bf16.gmra.mxu0 %v1487
        %v1650 = vpop.f32.mrf.mxu0
        %v1651 = vadd.f32 %v1518, %v1650
        %v1652 = vpop.f32.mrf.mxu0
        %v1653 = vpop.f32.mrf.mxu0
        %v1654 = vadd.f32 %v1518, %v1653
        %v1655 = vpop.f32.mrf.mxu0
        %1656 = vmatprep.mubr.bf16.mxu0 0
        %1657 = vmatmul.mubr.bf16.gmra.mxu0 %v1488
        %v1658 = vpop.f32.mrf.mxu0
        %v1659 = vadd.f32 %v1518, %v1658
        %v1660 = vpop.f32.mrf.mxu0
        %v1661 = vpop.f32.mrf.mxu0
        %v1662 = vadd.f32 %v1518, %v1661
        %v1663 = vpop.f32.mrf.mxu0
        %1664 = vmatprep.mubr.bf16.mxu0 0
        %1665 = vmatmul.mubr.bf16.gmra.mxu0 %v1489
        %v1666 = vpop.f32.mrf.mxu0
        %v1667 = vadd.f32 %v1518, %v1666
        %v1668 = vpop.f32.mrf.mxu0
        %v1669 = vpop.f32.mrf.mxu0
        %v1670 = vadd.f32 %v1518, %v1669
        %v1671 = vpop.f32.mrf.mxu0
        %1672 = vmatprep.mubr.bf16.mxu0 0
        %1673 = vmatmul.mubr.bf16.gmra.mxu0 %v1490
        %v1674 = vpop.f32.mrf.mxu0
        %v1675 = vadd.f32 %v1518, %v1674
        %v1676 = vpop.f32.mrf.mxu0
        %v1677 = vpop.f32.mrf.mxu0
        %v1678 = vadd.f32 %v1518, %v1677
        %v1679 = vpop.f32.mrf.mxu0
        %1680 = vmatprep.mubr.bf16.mxu0 0
        %1681 = vmatmul.mubr.bf16.gmra.mxu0 %v1491
        %v1682 = vpop.f32.mrf.mxu0
        %v1683 = vadd.f32 %v1518, %v1682
        %v1684 = vpop.f32.mrf.mxu0
        %v1685 = vpop.f32.mrf.mxu0
        %v1686 = vadd.f32 %v1518, %v1685
        %v1687 = vpop.f32.mrf.mxu0
        %1688 = vmatprep.mubr.bf16.mxu0 0
        %1689 = vmatmul.mubr.bf16.gmra.mxu0 %v1492
        %v1690 = vpop.f32.mrf.mxu0
        %v1691 = vadd.f32 %v1518, %v1690
        %v1692 = vpop.f32.mrf.mxu0
        %v1693 = vpop.f32.mrf.mxu0
        %v1694 = vadd.f32 %v1518, %v1693
        %v1695 = vpop.f32.mrf.mxu0
        %1696 = vmatprep.mubr.bf16.mxu0 0
        %1697 = vmatmul.mubr.bf16.gmra.mxu0 %v1493
        %v1698 = vpop.f32.mrf.mxu0
        %v1699 = vadd.f32 %v1518, %v1698
        %v1700 = vpop.f32.mrf.mxu0
        %v1701 = vpop.f32.mrf.mxu0
        %v1702 = vadd.f32 %v1518, %v1701
        %v1703 = vpop.f32.mrf.mxu0
        %1704 = vmatprep.mubr.bf16.mxu0 0
        %1705 = vmatmul.mubr.bf16.gmra.mxu0 %v1494
        %v1706 = vpop.f32.mrf.mxu0
        %v1707 = vadd.f32 %v1518, %v1706
        %v1708 = vpop.f32.mrf.mxu0
        %v1709 = vpop.f32.mrf.mxu0
        %v1710 = vadd.f32 %v1518, %v1709
        %v1711 = vpop.f32.mrf.mxu0
        %1712 = vmatprep.mubr.bf16.mxu0 0
        %1713 = vmatmul.mubr.bf16.gmra.mxu0 %v1495
        %v1714 = vpop.f32.mrf.mxu0
        %v1715 = vadd.f32 %v1518, %v1714
        %v1716 = vpop.f32.mrf.mxu0
        %v1717 = vpop.f32.mrf.mxu0
        %v1718 = vadd.f32 %v1518, %v1717
        %v1719 = vpop.f32.mrf.mxu0
        %1720 = vmatprep.mubr.bf16.mxu0 0
        %1721 = vmatmul.mubr.bf16.gmra.mxu0 %v1496
        %v1722 = vpop.f32.mrf.mxu0
        %v1723 = vadd.f32 %v1518, %v1722
        %v1724 = vpop.f32.mrf.mxu0
        %v1725 = vpop.f32.mrf.mxu0
        %v1726 = vadd.f32 %v1518, %v1725
        %v1727 = vpop.f32.mrf.mxu0
        %1728 = vdwg.mxu0
        %v1729 = vlaneseq
        %v1730 = vand.u32 %v1729, 127
        %vm1731 = vcmp.lt.s32.totalorder %v1730, 8
        %1732 = vrot.lane.b32.xlu0 %v1603, 64
        %v1733 = vpop.permute.xlu0 %1732
        %1734 = vrot.lane.b32.xlu0 %v1606, 64
        %v1735 = vpop.permute.xlu0 %1734
        %1736 = vrot.lane.b32.xlu0 %v1611, 64
        %v1737 = vpop.permute.xlu0 %1736
        %1738 = vrot.lane.b32.xlu0 %v1614, 64
        %v1739 = vpop.permute.xlu0 %1738
        %1740 = vrot.lane.b32.xlu0 %v1619, 64
        %v1741 = vpop.permute.xlu0 %1740
        %1742 = vrot.lane.b32.xlu0 %v1622, 64
        %v1743 = vpop.permute.xlu0 %1742
        %1744 = vrot.lane.b32.xlu0 %v1627, 64
        %v1745 = vpop.permute.xlu0 %1744
        %1746 = vrot.lane.b32.xlu0 %v1630, 64
        %v1747 = vpop.permute.xlu0 %1746
        %1748 = vrot.lane.b32.xlu0 %v1635, 64
        %v1749 = vpop.permute.xlu0 %1748
        %1750 = vrot.lane.b32.xlu0 %v1638, 64
        %v1751 = vpop.permute.xlu0 %1750
        %1752 = vrot.lane.b32.xlu0 %v1643, 64
        %v1753 = vpop.permute.xlu0 %1752
        %1754 = vrot.lane.b32.xlu0 %v1646, 64
        %v1755 = vpop.permute.xlu0 %1754
        %1756 = vrot.lane.b32.xlu0 %v1651, 64
        %v1757 = vpop.permute.xlu0 %1756
        %1758 = vrot.lane.b32.xlu0 %v1654, 64
        %v1759 = vpop.permute.xlu0 %1758
        %1760 = vrot.lane.b32.xlu0 %v1659, 64
        %v1761 = vpop.permute.xlu0 %1760
        %1762 = vrot.lane.b32.xlu0 %v1662, 64
        %v1763 = vpop.permute.xlu0 %1762
        %1764 = vrot.lane.b32.xlu0 %v1667, 64
        %v1765 = vpop.permute.xlu0 %1764
        %1766 = vrot.lane.b32.xlu0 %v1670, 64
        %v1767 = vpop.permute.xlu0 %1766
        %1768 = vrot.lane.b32.xlu0 %v1675, 64
        %v1769 = vpop.permute.xlu0 %1768
        %1770 = vrot.lane.b32.xlu0 %v1678, 64
        %v1771 = vpop.permute.xlu0 %1770
        %1772 = vrot.lane.b32.xlu0 %v1683, 64
        %v1773 = vpop.permute.xlu0 %1772
        %1774 = vrot.lane.b32.xlu0 %v1686, 64
        %v1775 = vpop.permute.xlu0 %1774
        %1776 = vrot.lane.b32.xlu0 %v1691, 64
        %v1777 = vpop.permute.xlu0 %1776
        %1778 = vrot.lane.b32.xlu0 %v1694, 64
        %v1779 = vpop.permute.xlu0 %1778
        %1780 = vrot.lane.b32.xlu0 %v1699, 64
        %v1781 = vpop.permute.xlu0 %1780
        %1782 = vrot.lane.b32.xlu0 %v1702, 64
        %v1783 = vpop.permute.xlu0 %1782
        %1784 = vrot.lane.b32.xlu0 %v1707, 64
        %v1785 = vpop.permute.xlu0 %1784
        %1786 = vrot.lane.b32.xlu0 %v1710, 64
        %v1787 = vpop.permute.xlu0 %1786
        %1788 = vrot.lane.b32.xlu0 %v1715, 64
        %v1789 = vpop.permute.xlu0 %1788
        %1790 = vrot.lane.b32.xlu0 %v1718, 64
        %v1791 = vpop.permute.xlu0 %1790
        %1792 = vrot.lane.b32.xlu0 %v1723, 64
        %v1793 = vpop.permute.xlu0 %1792
        %1794 = vrot.lane.b32.xlu0 %v1726, 64
        %v1795 = vpop.permute.xlu0 %1794
        %v1796 = vsel %vm1731, %v1733, 0.0
        %v1797 = vsel %vm1731, %v1735, 0.0
        %v1798 = vsel %vm1731, %v1737, 0.0
        %v1799 = vsel %vm1731, %v1739, 0.0
        %v1800 = vsel %vm1731, %v1741, 0.0
        %v1801 = vsel %vm1731, %v1743, 0.0
        %v1802 = vsel %vm1731, %v1745, 0.0
        %v1803 = vsel %vm1731, %v1747, 0.0
        %v1804 = vsel %vm1731, %v1749, 0.0
        %v1805 = vsel %vm1731, %v1751, 0.0
        %v1806 = vsel %vm1731, %v1753, 0.0
        %v1807 = vsel %vm1731, %v1755, 0.0
        %v1808 = vsel %vm1731, %v1757, 0.0
        %v1809 = vsel %vm1731, %v1759, 0.0
        %v1810 = vsel %vm1731, %v1761, 0.0
        %v1811 = vsel %vm1731, %v1763, 0.0
        %v1812 = vsel %vm1731, %v1765, 0.0
        %v1813 = vsel %vm1731, %v1767, 0.0
        %v1814 = vsel %vm1731, %v1769, 0.0
        %v1815 = vsel %vm1731, %v1771, 0.0
        %v1816 = vsel %vm1731, %v1773, 0.0
        %v1817 = vsel %vm1731, %v1775, 0.0
        %v1818 = vsel %vm1731, %v1777, 0.0
        %v1819 = vsel %vm1731, %v1779, 0.0
        %v1820 = vsel %vm1731, %v1781, 0.0
        %v1821 = vsel %vm1731, %v1783, 0.0
        %v1822 = vsel %vm1731, %v1785, 0.0
        %v1823 = vsel %vm1731, %v1787, 0.0
        %v1824 = vsel %vm1731, %v1789, 0.0
        %v1825 = vsel %vm1731, %v1791, 0.0
        %v1826 = vsel %vm1731, %v1793, 0.0
        %v1827 = vsel %vm1731, %v1795, 0.0
        %v1828 = vmul.f32 %v1796, 0.5
        %v1829 = vmul.f32 %v1797, 0.5
        %v1830 = vmul.f32 %v1798, 0.5
        %v1831 = vmul.f32 %v1799, 0.5
        %v1832 = vmul.f32 %v1800, 0.5
        %v1833 = vmul.f32 %v1801, 0.5
        %v1834 = vmul.f32 %v1802, 0.5
        %v1835 = vmul.f32 %v1803, 0.5
        %v1836 = vmul.f32 %v1804, 0.5
        %v1837 = vmul.f32 %v1805, 0.5
        %v1838 = vmul.f32 %v1806, 0.5
        %v1839 = vmul.f32 %v1807, 0.5
        %v1840 = vmul.f32 %v1808, 0.5
        %v1841 = vmul.f32 %v1809, 0.5
        %v1842 = vmul.f32 %v1810, 0.5
        %v1843 = vmul.f32 %v1811, 0.5
        %v1844 = vmul.f32 %v1812, 0.5
        %v1845 = vmul.f32 %v1813, 0.5
        %v1846 = vmul.f32 %v1814, 0.5
        %v1847 = vmul.f32 %v1815, 0.5
        %v1848 = vmul.f32 %v1816, 0.5
        %v1849 = vmul.f32 %v1817, 0.5
        %v1850 = vmul.f32 %v1818, 0.5
        %v1851 = vmul.f32 %v1819, 0.5
        %v1852 = vmul.f32 %v1820, 0.5
        %v1853 = vmul.f32 %v1821, 0.5
        %v1854 = vmul.f32 %v1822, 0.5
        %v1855 = vmul.f32 %v1823, 0.5
        %v1856 = vmul.f32 %v1824, 0.5
        %v1857 = vmul.f32 %v1825, 0.5
        %v1858 = vmul.f32 %v1826, 0.5
        %v1859 = vmul.f32 %v1827, 0.5
        %v1860 = vmul.f32 %v1828, 1.442695
        %v1861 = vpow.pop %v1860
        %v1862 = vmul.f32 %v1829, 1.442695
        %v1863 = vpow.pop %v1862
        %v1864 = vmul.f32 %v1830, 1.442695
        %v1865 = vpow.pop %v1864
        %v1866 = vmul.f32 %v1831, 1.442695
        %v1867 = vpow.pop %v1866
        %v1868 = vmul.f32 %v1832, 1.442695
        %v1869 = vpow.pop %v1868
        %v1870 = vmul.f32 %v1833, 1.442695
        %v1871 = vpow.pop %v1870
        %v1872 = vmul.f32 %v1834, 1.442695
        %v1873 = vpow.pop %v1872
        %v1874 = vmul.f32 %v1835, 1.442695
        %v1875 = vpow.pop %v1874
        %v1876 = vmul.f32 %v1836, 1.442695
        %v1877 = vpow.pop %v1876
        %v1878 = vmul.f32 %v1837, 1.442695
        %v1879 = vpow.pop %v1878
        %v1880 = vmul.f32 %v1838, 1.442695
        %v1881 = vpow.pop %v1880
        %v1882 = vmul.f32 %v1839, 1.442695
        %v1883 = vpow.pop %v1882
        %v1884 = vmul.f32 %v1840, 1.442695
        %v1885 = vpow.pop %v1884
        %v1886 = vmul.f32 %v1841, 1.442695
        %v1887 = vpow.pop %v1886
        %v1888 = vmul.f32 %v1842, 1.442695
        %v1889 = vpow.pop %v1888
        %v1890 = vmul.f32 %v1843, 1.442695
        %v1891 = vpow.pop %v1890
        %v1892 = vmul.f32 %v1844, 1.442695
        %v1893 = vpow.pop %v1892
        %v1894 = vmul.f32 %v1845, 1.442695
        %v1895 = vpow.pop %v1894
        %v1896 = vmul.f32 %v1846, 1.442695
        %v1897 = vpow.pop %v1896
        %v1898 = vmul.f32 %v1847, 1.442695
        %v1899 = vpow.pop %v1898
        %v1900 = vmul.f32 %v1848, 1.442695
        %v1901 = vpow.pop %v1900
        %v1902 = vmul.f32 %v1849, 1.442695
        %v1903 = vpow.pop %v1902
        %v1904 = vmul.f32 %v1850, 1.442695
        %v1905 = vpow.pop %v1904
        %v1906 = vmul.f32 %v1851, 1.442695
        %v1907 = vpow.pop %v1906
        %v1908 = vmul.f32 %v1852, 1.442695
        %v1909 = vpow.pop %v1908
        %v1910 = vmul.f32 %v1853, 1.442695
        %v1911 = vpow.pop %v1910
        %v1912 = vmul.f32 %v1854, 1.442695
        %v1913 = vpow.pop %v1912
        %v1914 = vmul.f32 %v1855, 1.442695
        %v1915 = vpow.pop %v1914
        %v1916 = vmul.f32 %v1856, 1.442695
        %v1917 = vpow.pop %v1916
        %v1918 = vmul.f32 %v1857, 1.442695
        %v1919 = vpow.pop %v1918
        %v1920 = vmul.f32 %v1858, 1.442695
        %v1921 = vpow.pop %v1920
        %v1922 = vmul.f32 %v1859, 1.442695
        %v1923 = vpow.pop %v1922
        %1924 = vst [vmem:[#allocation3] sm:$0xff] 0.0
        %1925 = vst [vmem:[#allocation3 + $0x8] sm:$0xff] 0.0
        %1926 = vst [vmem:[#allocation3 + $0x10] sm:$0xff] 0.0
        %1927 = vst [vmem:[#allocation3 + $0x18] sm:$0xff] 0.0
        %1928 = vst [vmem:[#allocation3 + $0x20] sm:$0xff] 0.0
        %1929 = vst [vmem:[#allocation3 + $0x28] sm:$0xff] 0.0
        %1930 = vst [vmem:[#allocation3 + $0x30] sm:$0xff] 0.0
        %1931 = vst [vmem:[#allocation3 + $0x38] sm:$0xff] 0.0
        %1932 = vst [vmem:[#allocation3 + $0x40] sm:$0xff] 0.0
        %1933 = vst [vmem:[#allocation3 + $0x48] sm:$0xff] 0.0
        %1934 = vst [vmem:[#allocation3 + $0x50] sm:$0xff] 0.0
        %1935 = vst [vmem:[#allocation3 + $0x58] sm:$0xff] 0.0
        %1936 = vst [vmem:[#allocation3 + $0x60] sm:$0xff] 0.0
        %1937 = vst [vmem:[#allocation3 + $0x68] sm:$0xff] 0.0
        %1938 = vst [vmem:[#allocation3 + $0x70] sm:$0xff] 0.0
        %1939 = vst [vmem:[#allocation3 + $0x78] sm:$0xff] 0.0
        %1940 = vst [vmem:[#allocation3 + $0x80] sm:$0xff] 0.0
        %1941 = vst [vmem:[#allocation3 + $0x88] sm:$0xff] 0.0
        %1942 = vst [vmem:[#allocation3 + $0x90] sm:$0xff] 0.0
        %1943 = vst [vmem:[#allocation3 + $0x98] sm:$0xff] 0.0
        %1944 = vst [vmem:[#allocation3 + $0xa0] sm:$0xff] 0.0
        %1945 = vst [vmem:[#allocation3 + $0xa8] sm:$0xff] 0.0
        %1946 = vst [vmem:[#allocation3 + $0xb0] sm:$0xff] 0.0
        %1947 = vst [vmem:[#allocation3 + $0xb8] sm:$0xff] 0.0
        %1948 = vst [vmem:[#allocation3 + $0xc0] sm:$0xff] 0.0
        %1949 = vst [vmem:[#allocation3 + $0xc8] sm:$0xff] 0.0
        %1950 = vst [vmem:[#allocation3 + $0xd0] sm:$0xff] 0.0
        %1951 = vst [vmem:[#allocation3 + $0xd8] sm:$0xff] 0.0
        %1952 = vst [vmem:[#allocation3 + $0xe0] sm:$0xff] 0.0
        %1953 = vst [vmem:[#allocation3 + $0xe8] sm:$0xff] 0.0
        %1954 = vst [vmem:[#allocation3 + $0xf0] sm:$0xff] 0.0
        %1955 = vst [vmem:[#allocation3 + $0xf8] sm:$0xff] 0.0
        %v1956 = vld [vmem:[%s526] sm:$0xff]
        %v1957 = vld [vmem:[%s526 + $0x8] sm:$0xff]
        %v1958 = vld [vmem:[%s526 + $0x10] sm:$0xff]
        %v1959 = vld [vmem:[%s526 + $0x18] sm:$0xff]
        %v1960 = vld [vmem:[%s526 + $0x20] sm:$0xff]
        %v1961 = vld [vmem:[%s526 + $0x28] sm:$0xff]
        %v1962 = vld [vmem:[%s526 + $0x30] sm:$0xff]
        %v1963 = vld [vmem:[%s526 + $0x38] sm:$0xff]
        %v1964 = vld [vmem:[%s526 + $0x40] sm:$0xff]
        %v1965 = vld [vmem:[%s526 + $0x48] sm:$0xff]
        %v1966 = vld [vmem:[%s526 + $0x50] sm:$0xff]
        %v1967 = vld [vmem:[%s526 + $0x58] sm:$0xff]
        %v1968 = vld [vmem:[%s526 + $0x60] sm:$0xff]
        %v1969 = vld [vmem:[%s526 + $0x68] sm:$0xff]
        %v1970 = vld [vmem:[%s526 + $0x70] sm:$0xff]
        %v1971 = vld [vmem:[%s526 + $0x78] sm:$0xff]
        %v1972 = vld [vmem:[%s526 + $0x80] sm:$0xff]
        %v1973 = vld [vmem:[%s526 + $0x88] sm:$0xff]
        %v1974 = vld [vmem:[%s526 + $0x90] sm:$0xff]
        %v1975 = vld [vmem:[%s526 + $0x98] sm:$0xff]
        %v1976 = vld [vmem:[%s526 + $0xa0] sm:$0xff]
        %v1977 = vld [vmem:[%s526 + $0xa8] sm:$0xff]
        %v1978 = vld [vmem:[%s526 + $0xb0] sm:$0xff]
        %v1979 = vld [vmem:[%s526 + $0xb8] sm:$0xff]
        %v1980 = vld [vmem:[%s526 + $0xc0] sm:$0xff]
        %v1981 = vld [vmem:[%s526 + $0xc8] sm:$0xff]
        %v1982 = vld [vmem:[%s526 + $0xd0] sm:$0xff]
        %v1983 = vld [vmem:[%s526 + $0xd8] sm:$0xff]
        %v1984 = vld [vmem:[%s526 + $0xe0] sm:$0xff]
        %v1985 = vld [vmem:[%s526 + $0xe8] sm:$0xff]
        %v1986 = vld [vmem:[%s526 + $0xf0] sm:$0xff]
        %v1987 = vld [vmem:[%s526 + $0xf8] sm:$0xff]
        %vm1988 = vcmask 64512
        %1989 = vst.msk [vmem:[#allocation3] sm:$0xff] %vm1988, %v1956
        %1990 = vst.msk [vmem:[#allocation3 + $0x8] sm:$0xff] %vm1988, %v1957
        %1991 = vst.msk [vmem:[#allocation3 + $0x10] sm:$0xff] %vm1988, %v1958
        %1992 = vst.msk [vmem:[#allocation3 + $0x18] sm:$0xff] %vm1988, %v1959
        %1993 = vst.msk [vmem:[#allocation3 + $0x20] sm:$0xff] %vm1988, %v1960
        %1994 = vst.msk [vmem:[#allocation3 + $0x28] sm:$0xff] %vm1988, %v1961
        %1995 = vst.msk [vmem:[#allocation3 + $0x30] sm:$0xff] %vm1988, %v1962
        %1996 = vst.msk [vmem:[#allocation3 + $0x38] sm:$0xff] %vm1988, %v1963
        %1997 = vst.msk [vmem:[#allocation3 + $0x40] sm:$0xff] %vm1988, %v1964
        %1998 = vst.msk [vmem:[#allocation3 + $0x48] sm:$0xff] %vm1988, %v1965
        %1999 = vst.msk [vmem:[#allocation3 + $0x50] sm:$0xff] %vm1988, %v1966
        %2000 = vst.msk [vmem:[#allocation3 + $0x58] sm:$0xff] %vm1988, %v1967
        %2001 = vst.msk [vmem:[#allocation3 + $0x60] sm:$0xff] %vm1988, %v1968
        %2002 = vst.msk [vmem:[#allocation3 + $0x68] sm:$0xff] %vm1988, %v1969
        %2003 = vst.msk [vmem:[#allocation3 + $0x70] sm:$0xff] %vm1988, %v1970
        %2004 = vst.msk [vmem:[#allocation3 + $0x78] sm:$0xff] %vm1988, %v1971
        %2005 = vst.msk [vmem:[#allocation3 + $0x80] sm:$0xff] %vm1988, %v1972
        %2006 = vst.msk [vmem:[#allocation3 + $0x88] sm:$0xff] %vm1988, %v1973
        %2007 = vst.msk [vmem:[#allocation3 + $0x90] sm:$0xff] %vm1988, %v1974
        %2008 = vst.msk [vmem:[#allocation3 + $0x98] sm:$0xff] %vm1988, %v1975
        %2009 = vst.msk [vmem:[#allocation3 + $0xa0] sm:$0xff] %vm1988, %v1976
        %2010 = vst.msk [vmem:[#allocation3 + $0xa8] sm:$0xff] %vm1988, %v1977
        %2011 = vst.msk [vmem:[#allocation3 + $0xb0] sm:$0xff] %vm1988, %v1978
        %2012 = vst.msk [vmem:[#allocation3 + $0xb8] sm:$0xff] %vm1988, %v1979
        %2013 = vst.msk [vmem:[#allocation3 + $0xc0] sm:$0xff] %vm1988, %v1980
        %2014 = vst.msk [vmem:[#allocation3 + $0xc8] sm:$0xff] %vm1988, %v1981
        %2015 = vst.msk [vmem:[#allocation3 + $0xd0] sm:$0xff] %vm1988, %v1982
        %2016 = vst.msk [vmem:[#allocation3 + $0xd8] sm:$0xff] %vm1988, %v1983
        %2017 = vst.msk [vmem:[#allocation3 + $0xe0] sm:$0xff] %vm1988, %v1984
        %2018 = vst.msk [vmem:[#allocation3 + $0xe8] sm:$0xff] %vm1988, %v1985
        %2019 = vst.msk [vmem:[#allocation3 + $0xf0] sm:$0xff] %vm1988, %v1986
        %2020 = vst.msk [vmem:[#allocation3 + $0xf8] sm:$0xff] %vm1988, %v1987
        %v2021 = vld [vmem:[#allocation3] sm:$0xff]
        %v2022 = vld [vmem:[#allocation3 + $0x8] sm:$0xff]
        %v2023 = vld [vmem:[#allocation3 + $0x10] sm:$0xff]
        %v2024 = vld [vmem:[#allocation3 + $0x18] sm:$0xff]
        %v2025 = vld [vmem:[#allocation3 + $0x20] sm:$0xff]
        %v2026 = vld [vmem:[#allocation3 + $0x28] sm:$0xff]
        %v2027 = vld [vmem:[#allocation3 + $0x30] sm:$0xff]
        %v2028 = vld [vmem:[#allocation3 + $0x38] sm:$0xff]
        %v2029 = vld [vmem:[#allocation3 + $0x40] sm:$0xff]
        %v2030 = vld [vmem:[#allocation3 + $0x48] sm:$0xff]
        %v2031 = vld [vmem:[#allocation3 + $0x50] sm:$0xff]
        %v2032 = vld [vmem:[#allocation3 + $0x58] sm:$0xff]
        %v2033 = vld [vmem:[#allocation3 + $0x60] sm:$0xff]
        %v2034 = vld [vmem:[#allocation3 + $0x68] sm:$0xff]
        %v2035 = vld [vmem:[#allocation3 + $0x70] sm:$0xff]
        %v2036 = vld [vmem:[#allocation3 + $0x78] sm:$0xff]
        %v2037 = vld [vmem:[#allocation3 + $0x80] sm:$0xff]
        %v2038 = vld [vmem:[#allocation3 + $0x88] sm:$0xff]
        %v2039 = vld [vmem:[#allocation3 + $0x90] sm:$0xff]
        %v2040 = vld [vmem:[#allocation3 + $0x98] sm:$0xff]
        %v2041 = vld [vmem:[#allocation3 + $0xa0] sm:$0xff]
        %v2042 = vld [vmem:[#allocation3 + $0xa8] sm:$0xff]
        %v2043 = vld [vmem:[#allocation3 + $0xb0] sm:$0xff]
        %v2044 = vld [vmem:[#allocation3 + $0xb8] sm:$0xff]
        %v2045 = vld [vmem:[#allocation3 + $0xc0] sm:$0xff]
        %v2046 = vld [vmem:[#allocation3 + $0xc8] sm:$0xff]
        %v2047 = vld [vmem:[#allocation3 + $0xd0] sm:$0xff]
        %v2048 = vld [vmem:[#allocation3 + $0xd8] sm:$0xff]
        %v2049 = vld [vmem:[#allocation3 + $0xe0] sm:$0xff]
        %v2050 = vld [vmem:[#allocation3 + $0xe8] sm:$0xff]
        %v2051 = vld [vmem:[#allocation3 + $0xf0] sm:$0xff]
        %v2052 = vld [vmem:[#allocation3 + $0xf8] sm:$0xff]
        %v2053 = vmul.f32 %v2021, %v1861
        %v2054 = vmul.f32 %v2022, %v1863
        %v2055 = vmul.f32 %v2023, %v1865
        %v2056 = vmul.f32 %v2024, %v1867
        %v2057 = vmul.f32 %v2025, %v1869
        %v2058 = vmul.f32 %v2026, %v1871
        %v2059 = vmul.f32 %v2027, %v1873
        %v2060 = vmul.f32 %v2028, %v1875
        %v2061 = vmul.f32 %v2029, %v1877
        %v2062 = vmul.f32 %v2030, %v1879
        %v2063 = vmul.f32 %v2031, %v1881
        %v2064 = vmul.f32 %v2032, %v1883
        %v2065 = vmul.f32 %v2033, %v1885
        %v2066 = vmul.f32 %v2034, %v1887
        %v2067 = vmul.f32 %v2035, %v1889
        %v2068 = vmul.f32 %v2036, %v1891
        %v2069 = vmul.f32 %v2037, %v1893
        %v2070 = vmul.f32 %v2038, %v1895
        %v2071 = vmul.f32 %v2039, %v1897
        %v2072 = vmul.f32 %v2040, %v1899
        %v2073 = vmul.f32 %v2041, %v1901
        %v2074 = vmul.f32 %v2042, %v1903
        %v2075 = vmul.f32 %v2043, %v1905
        %v2076 = vmul.f32 %v2044, %v1907
        %v2077 = vmul.f32 %v2045, %v1909
        %v2078 = vmul.f32 %v2046, %v1911
        %v2079 = vmul.f32 %v2047, %v1913
        %v2080 = vmul.f32 %v2048, %v1915
        %v2081 = vmul.f32 %v2049, %v1917
        %v2082 = vmul.f32 %v2050, %v1919
        %v2083 = vmul.f32 %v2051, %v1921
        %v2084 = vmul.f32 %v2052, %v1923
        %v2085 = vadd.f32 %v1603, %v2053
        %v2086 = vadd.f32 %v1606, %v2054
        %v2087 = vadd.f32 %v1611, %v2055
        %v2088 = vadd.f32 %v1614, %v2056
        %v2089 = vadd.f32 %v1619, %v2057
        %v2090 = vadd.f32 %v1622, %v2058
        %v2091 = vadd.f32 %v1627, %v2059
        %v2092 = vadd.f32 %v1630, %v2060
        %v2093 = vadd.f32 %v1635, %v2061
        %v2094 = vadd.f32 %v1638, %v2062
        %v2095 = vadd.f32 %v1643, %v2063
        %v2096 = vadd.f32 %v1646, %v2064
        %v2097 = vadd.f32 %v1651, %v2065
        %v2098 = vadd.f32 %v1654, %v2066
        %v2099 = vadd.f32 %v1659, %v2067
        %v2100 = vadd.f32 %v1662, %v2068
        %v2101 = vadd.f32 %v1667, %v2069
        %v2102 = vadd.f32 %v1670, %v2070
        %v2103 = vadd.f32 %v1675, %v2071
        %v2104 = vadd.f32 %v1678, %v2072
        %v2105 = vadd.f32 %v1683, %v2073
        %v2106 = vadd.f32 %v1686, %v2074
        %v2107 = vadd.f32 %v1691, %v2075
        %v2108 = vadd.f32 %v1694, %v2076
        %v2109 = vadd.f32 %v1699, %v2077
        %v2110 = vadd.f32 %v1702, %v2078
        %v2111 = vadd.f32 %v1707, %v2079
        %v2112 = vadd.f32 %v1710, %v2080
        %v2113 = vadd.f32 %v1715, %v2081
        %v2114 = vadd.f32 %v1718, %v2082
        %v2115 = vadd.f32 %v1723, %v2083
        %v2116 = vadd.f32 %v1726, %v2084
        %v2117 = vsel %vm1731, %v2085, 0.0
        %v2118 = vsel %vm1731, %v2086, 0.0
        %v2119 = vsel %vm1731, %v2087, 0.0
        %v2120 = vsel %vm1731, %v2088, 0.0
        %v2121 = vsel %vm1731, %v2089, 0.0
        %v2122 = vsel %vm1731, %v2090, 0.0
        %v2123 = vsel %vm1731, %v2091, 0.0
        %v2124 = vsel %vm1731, %v2092, 0.0
        %v2125 = vsel %vm1731, %v2093, 0.0
        %v2126 = vsel %vm1731, %v2094, 0.0
        %v2127 = vsel %vm1731, %v2095, 0.0
        %v2128 = vsel %vm1731, %v2096, 0.0
        %v2129 = vsel %vm1731, %v2097, 0.0
        %v2130 = vsel %vm1731, %v2098, 0.0
        %v2131 = vsel %vm1731, %v2099, 0.0
        %v2132 = vsel %vm1731, %v2100, 0.0
        %v2133 = vsel %vm1731, %v2101, 0.0
        %v2134 = vsel %vm1731, %v2102, 0.0
        %v2135 = vsel %vm1731, %v2103, 0.0
        %v2136 = vsel %vm1731, %v2104, 0.0
        %v2137 = vsel %vm1731, %v2105, 0.0
        %v2138 = vsel %vm1731, %v2106, 0.0
        %v2139 = vsel %vm1731, %v2107, 0.0
        %v2140 = vsel %vm1731, %v2108, 0.0
        %v2141 = vsel %vm1731, %v2109, 0.0
        %v2142 = vsel %vm1731, %v2110, 0.0
        %v2143 = vsel %vm1731, %v2111, 0.0
        %v2144 = vsel %vm1731, %v2112, 0.0
        %v2145 = vsel %vm1731, %v2113, 0.0
        %v2146 = vsel %vm1731, %v2114, 0.0
        %v2147 = vsel %vm1731, %v2115, 0.0
        %v2148 = vsel %vm1731, %v2116, 0.0
        %v2149 = vpack.c.bf16 %v2118, %v2117
        %v2150 = vpack.c.bf16 %v2120, %v2119
        %v2151 = vpack.c.bf16 %v2122, %v2121
        %v2152 = vpack.c.bf16 %v2124, %v2123
        %v2153 = vpack.c.bf16 %v2126, %v2125
        %v2154 = vpack.c.bf16 %v2128, %v2127
        %v2155 = vpack.c.bf16 %v2130, %v2129
        %v2156 = vpack.c.bf16 %v2132, %v2131
        %v2157 = vpack.c.bf16 %v2134, %v2133
        %v2158 = vpack.c.bf16 %v2136, %v2135
        %v2159 = vpack.c.bf16 %v2138, %v2137
        %v2160 = vpack.c.bf16 %v2140, %v2139
        %v2161 = vpack.c.bf16 %v2142, %v2141
        %v2162 = vpack.c.bf16 %v2144, %v2143
        %v2163 = vpack.c.bf16 %v2146, %v2145
        %v2164 = vpack.c.bf16 %v2148, %v2147
        %v2165 = vld [vmem:[%s8] sm:$0xf]
        %v2166 = vld [vmem:[%s8 + $0x4] sm:$0xf]
        %v2167 = vld [vmem:[%s8 + $0x8] sm:$0xf]
        %v2168 = vld [vmem:[%s8 + $0xc] sm:$0xf]
        %v2169 = vld [vmem:[%s8 + $0x10] sm:$0xf]
        %v2170 = vld [vmem:[%s8 + $0x14] sm:$0xf]
        %v2171 = vld [vmem:[%s8 + $0x18] sm:$0xf]
        %v2172 = vld [vmem:[%s8 + $0x1c] sm:$0xf]
        %v2173 = vld [vmem:[%s8 + $0x20] sm:$0xf]
        %v2174 = vld [vmem:[%s8 + $0x24] sm:$0xf]
        %v2175 = vld [vmem:[%s8 + $0x28] sm:$0xf]
        %v2176 = vld [vmem:[%s8 + $0x2c] sm:$0xf]
        %v2177 = vld [vmem:[%s8 + $0x30] sm:$0xf]
        %v2178 = vld [vmem:[%s8 + $0x34] sm:$0xf]
        %v2179 = vld [vmem:[%s8 + $0x38] sm:$0xf]
        %v2180 = vld [vmem:[%s8 + $0x3c] sm:$0xf]
        %v2181 = vld [vmem:[%s9] sm:$0x1]
        %v2183 = vlaneseq
        %v2184 = vshrl.u32 %v2183, 7
        %v2185 = vsub.s32 0, %v2184
        %v2186 = vrot.slane %v2181, %v2185
        %v2204 = vunpack.c.l.b16 %v2165
        %v2205 = vunpack.c.l.b16 %v2166
        %v2206 = vunpack.c.l.b16 %v2167
        %v2207 = vunpack.c.l.b16 %v2168
        %v2208 = vunpack.c.l.b16 %v2169
        %v2209 = vunpack.c.l.b16 %v2170
        %v2210 = vunpack.c.l.b16 %v2171
        %v2211 = vunpack.c.l.b16 %v2172
        %v2212 = vunpack.c.l.b16 %v2173
        %v2213 = vunpack.c.l.b16 %v2174
        %v2214 = vunpack.c.l.b16 %v2175
        %v2215 = vunpack.c.l.b16 %v2176
        %v2216 = vunpack.c.l.b16 %v2177
        %v2217 = vunpack.c.l.b16 %v2178
        %v2218 = vunpack.c.l.b16 %v2179
        %v2219 = vunpack.c.l.b16 %v2180
        %v2220 = vpack.c.b16 %v2205, %v2204
        %v2221 = vpack.c.b16 %v2207, %v2206
        %v2222 = vpack.c.b16 %v2209, %v2208
        %v2223 = vpack.c.b16 %v2211, %v2210
        %v2224 = vpack.c.b16 %v2213, %v2212
        %v2225 = vpack.c.b16 %v2215, %v2214
        %v2226 = vpack.c.b16 %v2217, %v2216
        %v2227 = vpack.c.b16 %v2219, %v2218
        %2236 = vmatprep.subr.bf16.mxu0 0
        %2237 = vmatpush1.bf16.msra.mxu0 %v2227
        %2238 = vmatprep.subr.bf16.mxu0 0
        %2239 = vmatpush1.bf16.msra.mxu0 %v2226
        %2240 = vmatprep.subr.bf16.mxu0 0
        %2241 = vmatpush1.bf16.msra.mxu0 %v2225
        %2242 = vmatprep.subr.bf16.mxu0 0
        %2243 = vmatpush1.bf16.msra.mxu0 %v2224
        %2244 = vmatprep.subr.bf16.mxu0 0
        %2245 = vmatpush1.bf16.msra.mxu0 %v2223
        %2246 = vmatprep.subr.bf16.mxu0 0
        %2247 = vmatpush1.bf16.msra.mxu0 %v2222
        %2248 = vmatprep.subr.bf16.mxu0 0
        %2249 = vmatpush1.bf16.msra.mxu0 %v2221
        %2250 = vmatprep.subr.bf16.mxu0 0
        %2251 = vmatpush1.bf16.msra.mxu0 %v2220
        %2252 = vmatprep.subr.bf16.mxu0 0
        %2253 = vmatpush2.bf16.msra.mxu0 0
        %2254 = vmatprep.subr.bf16.mxu0 0
        %2255 = vmatpush2.bf16.msra.mxu0 0
        %2256 = vmatprep.subr.bf16.mxu0 0
        %2257 = vmatpush2.bf16.msra.mxu0 0
        %2258 = vmatprep.subr.bf16.mxu0 0
        %2259 = vmatpush2.bf16.msra.mxu0 0
        %2260 = vmatprep.subr.bf16.mxu0 0
        %2261 = vmatpush2.bf16.msra.mxu0 0
        %2262 = vmatprep.subr.bf16.mxu0 0
        %2263 = vmatpush2.bf16.msra.mxu0 0
        %2264 = vmatprep.subr.bf16.mxu0 0
        %2265 = vmatpush2.bf16.msra.mxu0 0
        %2266 = vmatprep.subr.bf16.mxu0 0
        %2267 = vmatpush2.bf16.msra.mxu0 0
        %2268 = vmatprep.mubr.bf16.mxu0 0
        %2269 = vmatmul.mubr.bf16.gmra.mxu0 %v2149
        %v2270 = vpop.f32.mrf.mxu0
        %v2271 = vadd.f32 %v2186, %v2270
        %v2272 = vpop.f32.mrf.mxu0
        %v2273 = vpop.f32.mrf.mxu0
        %v2274 = vadd.f32 %v2186, %v2273
        %v2275 = vpop.f32.mrf.mxu0
        %2276 = vmatprep.mubr.bf16.mxu0 0
        %2277 = vmatmul.mubr.bf16.gmra.mxu0 %v2150
        %v2278 = vpop.f32.mrf.mxu0
        %v2279 = vadd.f32 %v2186, %v2278
        %v2280 = vpop.f32.mrf.mxu0
        %v2281 = vpop.f32.mrf.mxu0
        %v2282 = vadd.f32 %v2186, %v2281
        %v2283 = vpop.f32.mrf.mxu0
        %2284 = vmatprep.mubr.bf16.mxu0 0
        %2285 = vmatmul.mubr.bf16.gmra.mxu0 %v2151
        %v2286 = vpop.f32.mrf.mxu0
        %v2287 = vadd.f32 %v2186, %v2286
        %v2288 = vpop.f32.mrf.mxu0
        %v2289 = vpop.f32.mrf.mxu0
        %v2290 = vadd.f32 %v2186, %v2289
        %v2291 = vpop.f32.mrf.mxu0
        %2292 = vmatprep.mubr.bf16.mxu0 0
        %2293 = vmatmul.mubr.bf16.gmra.mxu0 %v2152
        %v2294 = vpop.f32.mrf.mxu0
        %v2295 = vadd.f32 %v2186, %v2294
        %v2296 = vpop.f32.mrf.mxu0
        %v2297 = vpop.f32.mrf.mxu0
        %v2298 = vadd.f32 %v2186, %v2297
        %v2299 = vpop.f32.mrf.mxu0
        %2300 = vmatprep.mubr.bf16.mxu0 0
        %2301 = vmatmul.mubr.bf16.gmra.mxu0 %v2153
        %v2302 = vpop.f32.mrf.mxu0
        %v2303 = vadd.f32 %v2186, %v2302
        %v2304 = vpop.f32.mrf.mxu0
        %v2305 = vpop.f32.mrf.mxu0
        %v2306 = vadd.f32 %v2186, %v2305
        %v2307 = vpop.f32.mrf.mxu0
        %2308 = vmatprep.mubr.bf16.mxu0 0
        %2309 = vmatmul.mubr.bf16.gmra.mxu0 %v2154
        %v2310 = vpop.f32.mrf.mxu0
        %v2311 = vadd.f32 %v2186, %v2310
        %v2312 = vpop.f32.mrf.mxu0
        %v2313 = vpop.f32.mrf.mxu0
        %v2314 = vadd.f32 %v2186, %v2313
        %v2315 = vpop.f32.mrf.mxu0
        %2316 = vmatprep.mubr.bf16.mxu0 0
        %2317 = vmatmul.mubr.bf16.gmra.mxu0 %v2155
        %v2318 = vpop.f32.mrf.mxu0
        %v2319 = vadd.f32 %v2186, %v2318
        %v2320 = vpop.f32.mrf.mxu0
        %v2321 = vpop.f32.mrf.mxu0
        %v2322 = vadd.f32 %v2186, %v2321
        %v2323 = vpop.f32.mrf.mxu0
        %2324 = vmatprep.mubr.bf16.mxu0 0
        %2325 = vmatmul.mubr.bf16.gmra.mxu0 %v2156
        %v2326 = vpop.f32.mrf.mxu0
        %v2327 = vadd.f32 %v2186, %v2326
        %v2328 = vpop.f32.mrf.mxu0
        %v2329 = vpop.f32.mrf.mxu0
        %v2330 = vadd.f32 %v2186, %v2329
        %v2331 = vpop.f32.mrf.mxu0
        %2332 = vmatprep.mubr.bf16.mxu0 0
        %2333 = vmatmul.mubr.bf16.gmra.mxu0 %v2157
        %v2334 = vpop.f32.mrf.mxu0
        %v2335 = vadd.f32 %v2186, %v2334
        %v2336 = vpop.f32.mrf.mxu0
        %v2337 = vpop.f32.mrf.mxu0
        %v2338 = vadd.f32 %v2186, %v2337
        %v2339 = vpop.f32.mrf.mxu0
        %2340 = vmatprep.mubr.bf16.mxu0 0
        %2341 = vmatmul.mubr.bf16.gmra.mxu0 %v2158
        %v2342 = vpop.f32.mrf.mxu0
        %v2343 = vadd.f32 %v2186, %v2342
        %v2344 = vpop.f32.mrf.mxu0
        %v2345 = vpop.f32.mrf.mxu0
        %v2346 = vadd.f32 %v2186, %v2345
        %v2347 = vpop.f32.mrf.mxu0
        %2348 = vmatprep.mubr.bf16.mxu0 0
        %2349 = vmatmul.mubr.bf16.gmra.mxu0 %v2159
        %v2350 = vpop.f32.mrf.mxu0
        %v2351 = vadd.f32 %v2186, %v2350
        %v2352 = vpop.f32.mrf.mxu0
        %v2353 = vpop.f32.mrf.mxu0
        %v2354 = vadd.f32 %v2186, %v2353
        %v2355 = vpop.f32.mrf.mxu0
        %2356 = vmatprep.mubr.bf16.mxu0 0
        %2357 = vmatmul.mubr.bf16.gmra.mxu0 %v2160
        %v2358 = vpop.f32.mrf.mxu0
        %v2359 = vadd.f32 %v2186, %v2358
        %v2360 = vpop.f32.mrf.mxu0
        %v2361 = vpop.f32.mrf.mxu0
        %v2362 = vadd.f32 %v2186, %v2361
        %v2363 = vpop.f32.mrf.mxu0
        %2364 = vmatprep.mubr.bf16.mxu0 0
        %2365 = vmatmul.mubr.bf16.gmra.mxu0 %v2161
        %v2366 = vpop.f32.mrf.mxu0
        %v2367 = vadd.f32 %v2186, %v2366
        %v2368 = vpop.f32.mrf.mxu0
        %v2369 = vpop.f32.mrf.mxu0
        %v2370 = vadd.f32 %v2186, %v2369
        %v2371 = vpop.f32.mrf.mxu0
        %2372 = vmatprep.mubr.bf16.mxu0 0
        %2373 = vmatmul.mubr.bf16.gmra.mxu0 %v2162
        %v2374 = vpop.f32.mrf.mxu0
        %v2375 = vadd.f32 %v2186, %v2374
        %v2376 = vpop.f32.mrf.mxu0
        %v2377 = vpop.f32.mrf.mxu0
        %v2378 = vadd.f32 %v2186, %v2377
        %v2379 = vpop.f32.mrf.mxu0
        %2380 = vmatprep.mubr.bf16.mxu0 0
        %2381 = vmatmul.mubr.bf16.gmra.mxu0 %v2163
        %v2382 = vpop.f32.mrf.mxu0
        %v2383 = vadd.f32 %v2186, %v2382
        %v2384 = vpop.f32.mrf.mxu0
        %v2385 = vpop.f32.mrf.mxu0
        %v2386 = vadd.f32 %v2186, %v2385
        %v2387 = vpop.f32.mrf.mxu0
        %2388 = vmatprep.mubr.bf16.mxu0 0
        %2389 = vmatmul.mubr.bf16.gmra.mxu0 %v2164
        %v2390 = vpop.f32.mrf.mxu0
        %v2391 = vadd.f32 %v2186, %v2390
        %v2392 = vpop.f32.mrf.mxu0
        %v2393 = vpop.f32.mrf.mxu0
        %v2394 = vadd.f32 %v2186, %v2393
        %v2395 = vpop.f32.mrf.mxu0
        %2396 = vdwg.mxu0
        %v2397 = vmax.f32 %v2271, 0.0
        %v2398 = vmax.f32 %v2274, 0.0
        %v2399 = vmax.f32 %v2279, 0.0
        %v2400 = vmax.f32 %v2282, 0.0
        %v2401 = vmax.f32 %v2287, 0.0
        %v2402 = vmax.f32 %v2290, 0.0
        %v2403 = vmax.f32 %v2295, 0.0
        %v2404 = vmax.f32 %v2298, 0.0
        %v2405 = vmax.f32 %v2303, 0.0
        %v2406 = vmax.f32 %v2306, 0.0
        %v2407 = vmax.f32 %v2311, 0.0
        %v2408 = vmax.f32 %v2314, 0.0
        %v2409 = vmax.f32 %v2319, 0.0
        %v2410 = vmax.f32 %v2322, 0.0
        %v2411 = vmax.f32 %v2327, 0.0
        %v2412 = vmax.f32 %v2330, 0.0
        %v2413 = vmax.f32 %v2335, 0.0
        %v2414 = vmax.f32 %v2338, 0.0
        %v2415 = vmax.f32 %v2343, 0.0
        %v2416 = vmax.f32 %v2346, 0.0
        %v2417 = vmax.f32 %v2351, 0.0
        %v2418 = vmax.f32 %v2354, 0.0
        %v2419 = vmax.f32 %v2359, 0.0
        %v2420 = vmax.f32 %v2362, 0.0
        %v2421 = vmax.f32 %v2367, 0.0
        %v2422 = vmax.f32 %v2370, 0.0
        %v2423 = vmax.f32 %v2375, 0.0
        %v2424 = vmax.f32 %v2378, 0.0
        %v2425 = vmax.f32 %v2383, 0.0
        %v2426 = vmax.f32 %v2386, 0.0
        %v2427 = vmax.f32 %v2391, 0.0
        %v2428 = vmax.f32 %v2394, 0.0
        %v2429 = vpack.c.bf16 %v2398, %v2397
        %v2430 = vpack.c.bf16 %v2400, %v2399
        %v2431 = vpack.c.bf16 %v2402, %v2401
        %v2432 = vpack.c.bf16 %v2404, %v2403
        %v2433 = vpack.c.bf16 %v2406, %v2405
        %v2434 = vpack.c.bf16 %v2408, %v2407
        %v2435 = vpack.c.bf16 %v2410, %v2409
        %v2436 = vpack.c.bf16 %v2412, %v2411
        %v2437 = vpack.c.bf16 %v2414, %v2413
        %v2438 = vpack.c.bf16 %v2416, %v2415
        %v2439 = vpack.c.bf16 %v2418, %v2417
        %v2440 = vpack.c.bf16 %v2420, %v2419
        %v2441 = vpack.c.bf16 %v2422, %v2421
        %v2442 = vpack.c.bf16 %v2424, %v2423
        %v2443 = vpack.c.bf16 %v2426, %v2425
        %v2444 = vpack.c.bf16 %v2428, %v2427
        %v2445 = vld [vmem:[%s10] sm:$0xff]
        %v2446 = vld [vmem:[%s10 + $0x8] sm:$0xff]
        %v2447 = vld [vmem:[%s10 + $0x10] sm:$0xff]
        %v2448 = vld [vmem:[%s10 + $0x18] sm:$0xff]
        %v2449 = vld [vmem:[%s10 + $0x20] sm:$0xff]
        %v2450 = vld [vmem:[%s10 + $0x28] sm:$0xff]
        %v2451 = vld [vmem:[%s10 + $0x30] sm:$0xff]
        %v2452 = vld [vmem:[%s10 + $0x38] sm:$0xff]
        %v2453 = vld [vmem:[%s10 + $0x40] sm:$0xff]
        %v2454 = vld [vmem:[%s10 + $0x48] sm:$0xff]
        %v2455 = vld [vmem:[%s10 + $0x50] sm:$0xff]
        %v2456 = vld [vmem:[%s10 + $0x58] sm:$0xff]
        %v2457 = vld [vmem:[%s10 + $0x60] sm:$0xff]
        %v2458 = vld [vmem:[%s10 + $0x68] sm:$0xff]
        %v2459 = vld [vmem:[%s10 + $0x70] sm:$0xff]
        %v2460 = vld [vmem:[%s10 + $0x78] sm:$0xff]
        %v2461 = vld [vmem:[%s11] sm:$0x3]
        %v2463 = vlaneseq
        %v2464 = vshrl.u32 %v2463, 7
        %v2465 = vsub.s32 0, %v2464
        %v2466 = vrot.slane %v2461, %v2465
        %v2467 = vlaneseq
        %v2468 = vshrl.u32 %v2467, 7
        %v2469 = vsub.s32 1, %v2468
        %v2470 = vrot.slane %v2461, %v2469
        %v2489 = vunpack.c.l.b16 %v2445
        %v2490 = vunpack.c.h.b16 %v2445
        %v2491 = vunpack.c.l.b16 %v2446
        %v2492 = vunpack.c.h.b16 %v2446
        %v2493 = vunpack.c.l.b16 %v2447
        %v2494 = vunpack.c.h.b16 %v2447
        %v2495 = vunpack.c.l.b16 %v2448
        %v2496 = vunpack.c.h.b16 %v2448
        %v2497 = vunpack.c.l.b16 %v2449
        %v2498 = vunpack.c.h.b16 %v2449
        %v2499 = vunpack.c.l.b16 %v2450
        %v2500 = vunpack.c.h.b16 %v2450
        %v2501 = vunpack.c.l.b16 %v2451
        %v2502 = vunpack.c.h.b16 %v2451
        %v2503 = vunpack.c.l.b16 %v2452
        %v2504 = vunpack.c.h.b16 %v2452
        %v2505 = vunpack.c.l.b16 %v2453
        %v2506 = vunpack.c.h.b16 %v2453
        %v2507 = vunpack.c.l.b16 %v2454
        %v2508 = vunpack.c.h.b16 %v2454
        %v2509 = vunpack.c.l.b16 %v2455
        %v2510 = vunpack.c.h.b16 %v2455
        %v2511 = vunpack.c.l.b16 %v2456
        %v2512 = vunpack.c.h.b16 %v2456
        %v2513 = vunpack.c.l.b16 %v2457
        %v2514 = vunpack.c.h.b16 %v2457
        %v2515 = vunpack.c.l.b16 %v2458
        %v2516 = vunpack.c.h.b16 %v2458
        %v2517 = vunpack.c.l.b16 %v2459
        %v2518 = vunpack.c.h.b16 %v2459
        %v2519 = vunpack.c.l.b16 %v2460
        %v2520 = vunpack.c.h.b16 %v2460
        %v2521 = vpack.c.b16 %v2491, %v2489
        %v2522 = vpack.c.b16 %v2492, %v2490
        %v2523 = vpack.c.b16 %v2495, %v2493
        %v2524 = vpack.c.b16 %v2496, %v2494
        %v2525 = vpack.c.b16 %v2499, %v2497
        %v2526 = vpack.c.b16 %v2500, %v2498
        %v2527 = vpack.c.b16 %v2503, %v2501
        %v2528 = vpack.c.b16 %v2504, %v2502
        %v2529 = vpack.c.b16 %v2507, %v2505
        %v2530 = vpack.c.b16 %v2508, %v2506
        %v2531 = vpack.c.b16 %v2511, %v2509
        %v2532 = vpack.c.b16 %v2512, %v2510
        %v2533 = vpack.c.b16 %v2515, %v2513
        %v2534 = vpack.c.b16 %v2516, %v2514
        %v2535 = vpack.c.b16 %v2519, %v2517
        %v2536 = vpack.c.b16 %v2520, %v2518
        %2553 = vmatprep.subr.bf16.mxu0 %v2536
        %2554 = vmatpush1.bf16.msra.mxu0 %v2535
        %2555 = vmatprep.subr.bf16.mxu0 %v2534
        %2556 = vmatpush1.bf16.msra.mxu0 %v2533
        %2557 = vmatprep.subr.bf16.mxu0 %v2532
        %2558 = vmatpush1.bf16.msra.mxu0 %v2531
        %2559 = vmatprep.subr.bf16.mxu0 %v2530
        %2560 = vmatpush1.bf16.msra.mxu0 %v2529
        %2561 = vmatprep.subr.bf16.mxu0 %v2528
        %2562 = vmatpush1.bf16.msra.mxu0 %v2527
        %2563 = vmatprep.subr.bf16.mxu0 %v2526
        %2564 = vmatpush1.bf16.msra.mxu0 %v2525
        %2565 = vmatprep.subr.bf16.mxu0 %v2524
        %2566 = vmatpush1.bf16.msra.mxu0 %v2523
        %2567 = vmatprep.subr.bf16.mxu0 %v2522
        %2568 = vmatpush1.bf16.msra.mxu0 %v2521
        %2569 = vmatprep.subr.bf16.mxu0 0
        %2570 = vmatpush2.bf16.msra.mxu0 0
        %2571 = vmatprep.subr.bf16.mxu0 0
        %2572 = vmatpush2.bf16.msra.mxu0 0
        %2573 = vmatprep.subr.bf16.mxu0 0
        %2574 = vmatpush2.bf16.msra.mxu0 0
        %2575 = vmatprep.subr.bf16.mxu0 0
        %2576 = vmatpush2.bf16.msra.mxu0 0
        %2577 = vmatprep.subr.bf16.mxu0 0
        %2578 = vmatpush2.bf16.msra.mxu0 0
        %2579 = vmatprep.subr.bf16.mxu0 0
        %2580 = vmatpush2.bf16.msra.mxu0 0
        %2581 = vmatprep.subr.bf16.mxu0 0
        %2582 = vmatpush2.bf16.msra.mxu0 0
        %2583 = vmatprep.subr.bf16.mxu0 0
        %2584 = vmatpush2.bf16.msra.mxu0 0
        %2585 = vmatprep.mubr.bf16.mxu0 0
        %2586 = vmatmul.mubr.bf16.gmra.mxu0 %v2429
        %v2587 = vpop.f32.mrf.mxu0
        %v2588 = vadd.f32 %v2466, %v2587
        %v2589 = vpop.f32.mrf.mxu0
        %v2590 = vadd.f32 %v2470, %v2589
        %v2591 = vpop.f32.mrf.mxu0
        %v2592 = vadd.f32 %v2466, %v2591
        %v2593 = vpop.f32.mrf.mxu0
        %v2594 = vadd.f32 %v2470, %v2593
        %2595 = vmatprep.mubr.bf16.mxu0 0
        %2596 = vmatmul.mubr.bf16.gmra.mxu0 %v2430
        %v2597 = vpop.f32.mrf.mxu0
        %v2598 = vadd.f32 %v2466, %v2597
        %v2599 = vpop.f32.mrf.mxu0
        %v2600 = vadd.f32 %v2470, %v2599
        %v2601 = vpop.f32.mrf.mxu0
        %v2602 = vadd.f32 %v2466, %v2601
        %v2603 = vpop.f32.mrf.mxu0
        %v2604 = vadd.f32 %v2470, %v2603
        %2605 = vmatprep.mubr.bf16.mxu0 0
        %2606 = vmatmul.mubr.bf16.gmra.mxu0 %v2431
        %v2607 = vpop.f32.mrf.mxu0
        %v2608 = vadd.f32 %v2466, %v2607
        %v2609 = vpop.f32.mrf.mxu0
        %v2610 = vadd.f32 %v2470, %v2609
        %v2611 = vpop.f32.mrf.mxu0
        %v2612 = vadd.f32 %v2466, %v2611
        %v2613 = vpop.f32.mrf.mxu0
        %v2614 = vadd.f32 %v2470, %v2613
        %2615 = vmatprep.mubr.bf16.mxu0 0
        %2616 = vmatmul.mubr.bf16.gmra.mxu0 %v2432
        %v2617 = vpop.f32.mrf.mxu0
        %v2618 = vadd.f32 %v2466, %v2617
        %v2619 = vpop.f32.mrf.mxu0
        %v2620 = vadd.f32 %v2470, %v2619
        %v2621 = vpop.f32.mrf.mxu0
        %v2622 = vadd.f32 %v2466, %v2621
        %v2623 = vpop.f32.mrf.mxu0
        %v2624 = vadd.f32 %v2470, %v2623
        %2625 = vmatprep.mubr.bf16.mxu0 0
        %2626 = vmatmul.mubr.bf16.gmra.mxu0 %v2433
        %v2627 = vpop.f32.mrf.mxu0
        %v2628 = vadd.f32 %v2466, %v2627
        %v2629 = vpop.f32.mrf.mxu0
        %v2630 = vadd.f32 %v2470, %v2629
        %v2631 = vpop.f32.mrf.mxu0
        %v2632 = vadd.f32 %v2466, %v2631
        %v2633 = vpop.f32.mrf.mxu0
        %v2634 = vadd.f32 %v2470, %v2633
        %2635 = vmatprep.mubr.bf16.mxu0 0
        %2636 = vmatmul.mubr.bf16.gmra.mxu0 %v2434
        %v2637 = vpop.f32.mrf.mxu0
        %v2638 = vadd.f32 %v2466, %v2637
        %v2639 = vpop.f32.mrf.mxu0
        %v2640 = vadd.f32 %v2470, %v2639
        %v2641 = vpop.f32.mrf.mxu0
        %v2642 = vadd.f32 %v2466, %v2641
        %v2643 = vpop.f32.mrf.mxu0
        %v2644 = vadd.f32 %v2470, %v2643
        %2645 = vmatprep.mubr.bf16.mxu0 0
        %2646 = vmatmul.mubr.bf16.gmra.mxu0 %v2435
        %v2647 = vpop.f32.mrf.mxu0
        %v2648 = vadd.f32 %v2466, %v2647
        %v2649 = vpop.f32.mrf.mxu0
        %v2650 = vadd.f32 %v2470, %v2649
        %v2651 = vpop.f32.mrf.mxu0
        %v2652 = vadd.f32 %v2466, %v2651
        %v2653 = vpop.f32.mrf.mxu0
        %v2654 = vadd.f32 %v2470, %v2653
        %2655 = vmatprep.mubr.bf16.mxu0 0
        %2656 = vmatmul.mubr.bf16.gmra.mxu0 %v2436
        %v2657 = vpop.f32.mrf.mxu0
        %v2658 = vadd.f32 %v2466, %v2657
        %v2659 = vpop.f32.mrf.mxu0
        %v2660 = vadd.f32 %v2470, %v2659
        %v2661 = vpop.f32.mrf.mxu0
        %v2662 = vadd.f32 %v2466, %v2661
        %v2663 = vpop.f32.mrf.mxu0
        %v2664 = vadd.f32 %v2470, %v2663
        %2665 = vmatprep.mubr.bf16.mxu0 0
        %2666 = vmatmul.mubr.bf16.gmra.mxu0 %v2437
        %v2667 = vpop.f32.mrf.mxu0
        %v2668 = vadd.f32 %v2466, %v2667
        %v2669 = vpop.f32.mrf.mxu0
        %v2670 = vadd.f32 %v2470, %v2669
        %v2671 = vpop.f32.mrf.mxu0
        %v2672 = vadd.f32 %v2466, %v2671
        %v2673 = vpop.f32.mrf.mxu0
        %v2674 = vadd.f32 %v2470, %v2673
        %2675 = vmatprep.mubr.bf16.mxu0 0
        %2676 = vmatmul.mubr.bf16.gmra.mxu0 %v2438
        %v2677 = vpop.f32.mrf.mxu0
        %v2678 = vadd.f32 %v2466, %v2677
        %v2679 = vpop.f32.mrf.mxu0
        %v2680 = vadd.f32 %v2470, %v2679
        %v2681 = vpop.f32.mrf.mxu0
        %v2682 = vadd.f32 %v2466, %v2681
        %v2683 = vpop.f32.mrf.mxu0
        %v2684 = vadd.f32 %v2470, %v2683
        %2685 = vmatprep.mubr.bf16.mxu0 0
        %2686 = vmatmul.mubr.bf16.gmra.mxu0 %v2439
        %v2687 = vpop.f32.mrf.mxu0
        %v2688 = vadd.f32 %v2466, %v2687
        %v2689 = vpop.f32.mrf.mxu0
        %v2690 = vadd.f32 %v2470, %v2689
        %v2691 = vpop.f32.mrf.mxu0
        %v2692 = vadd.f32 %v2466, %v2691
        %v2693 = vpop.f32.mrf.mxu0
        %v2694 = vadd.f32 %v2470, %v2693
        %2695 = vmatprep.mubr.bf16.mxu0 0
        %2696 = vmatmul.mubr.bf16.gmra.mxu0 %v2440
        %v2697 = vpop.f32.mrf.mxu0
        %v2698 = vadd.f32 %v2466, %v2697
        %v2699 = vpop.f32.mrf.mxu0
        %v2700 = vadd.f32 %v2470, %v2699
        %v2701 = vpop.f32.mrf.mxu0
        %v2702 = vadd.f32 %v2466, %v2701
        %v2703 = vpop.f32.mrf.mxu0
        %v2704 = vadd.f32 %v2470, %v2703
        %2705 = vmatprep.mubr.bf16.mxu0 0
        %2706 = vmatmul.mubr.bf16.gmra.mxu0 %v2441
        %v2707 = vpop.f32.mrf.mxu0
        %v2708 = vadd.f32 %v2466, %v2707
        %v2709 = vpop.f32.mrf.mxu0
        %v2710 = vadd.f32 %v2470, %v2709
        %v2711 = vpop.f32.mrf.mxu0
        %v2712 = vadd.f32 %v2466, %v2711
        %v2713 = vpop.f32.mrf.mxu0
        %v2714 = vadd.f32 %v2470, %v2713
        %2715 = vmatprep.mubr.bf16.mxu0 0
        %2716 = vmatmul.mubr.bf16.gmra.mxu0 %v2442
        %v2717 = vpop.f32.mrf.mxu0
        %v2718 = vadd.f32 %v2466, %v2717
        %v2719 = vpop.f32.mrf.mxu0
        %v2720 = vadd.f32 %v2470, %v2719
        %v2721 = vpop.f32.mrf.mxu0
        %v2722 = vadd.f32 %v2466, %v2721
        %v2723 = vpop.f32.mrf.mxu0
        %v2724 = vadd.f32 %v2470, %v2723
        %2725 = vmatprep.mubr.bf16.mxu0 0
        %2726 = vmatmul.mubr.bf16.gmra.mxu0 %v2443
        %v2727 = vpop.f32.mrf.mxu0
        %v2728 = vadd.f32 %v2466, %v2727
        %v2729 = vpop.f32.mrf.mxu0
        %v2730 = vadd.f32 %v2470, %v2729
        %v2731 = vpop.f32.mrf.mxu0
        %v2732 = vadd.f32 %v2466, %v2731
        %v2733 = vpop.f32.mrf.mxu0
        %v2734 = vadd.f32 %v2470, %v2733
        %2735 = vmatprep.mubr.bf16.mxu0 0
        %2736 = vmatmul.mubr.bf16.gmra.mxu0 %v2444
        %v2737 = vpop.f32.mrf.mxu0
        %v2738 = vadd.f32 %v2466, %v2737
        %v2739 = vpop.f32.mrf.mxu0
        %v2740 = vadd.f32 %v2470, %v2739
        %v2741 = vpop.f32.mrf.mxu0
        %v2742 = vadd.f32 %v2466, %v2741
        %v2743 = vpop.f32.mrf.mxu0
        %v2744 = vadd.f32 %v2470, %v2743
        %2745 = vdwg.mxu0
        %v2746 = vmax.f32 %v2588, 0.0
        %v2747 = vmax.f32 %v2590, 0.0
        %v2748 = vmax.f32 %v2592, 0.0
        %v2749 = vmax.f32 %v2594, 0.0
        %v2750 = vmax.f32 %v2598, 0.0
        %v2751 = vmax.f32 %v2600, 0.0
        %v2752 = vmax.f32 %v2602, 0.0
        %v2753 = vmax.f32 %v2604, 0.0
        %v2754 = vmax.f32 %v2608, 0.0
        %v2755 = vmax.f32 %v2610, 0.0
        %v2756 = vmax.f32 %v2612, 0.0
        %v2757 = vmax.f32 %v2614, 0.0
        %v2758 = vmax.f32 %v2618, 0.0
        %v2759 = vmax.f32 %v2620, 0.0
        %v2760 = vmax.f32 %v2622, 0.0
        %v2761 = vmax.f32 %v2624, 0.0
        %v2762 = vmax.f32 %v2628, 0.0
        %v2763 = vmax.f32 %v2630, 0.0
        %v2764 = vmax.f32 %v2632, 0.0
        %v2765 = vmax.f32 %v2634, 0.0
        %v2766 = vmax.f32 %v2638, 0.0
        %v2767 = vmax.f32 %v2640, 0.0
        %v2768 = vmax.f32 %v2642, 0.0
        %v2769 = vmax.f32 %v2644, 0.0
        %v2770 = vmax.f32 %v2648, 0.0
        %v2771 = vmax.f32 %v2650, 0.0
        %v2772 = vmax.f32 %v2652, 0.0
        %v2773 = vmax.f32 %v2654, 0.0
        %v2774 = vmax.f32 %v2658, 0.0
        %v2775 = vmax.f32 %v2660, 0.0
        %v2776 = vmax.f32 %v2662, 0.0
        %v2777 = vmax.f32 %v2664, 0.0
        %v2778 = vmax.f32 %v2668, 0.0
        %v2779 = vmax.f32 %v2670, 0.0
        %v2780 = vmax.f32 %v2672, 0.0
        %v2781 = vmax.f32 %v2674, 0.0
        %v2782 = vmax.f32 %v2678, 0.0
        %v2783 = vmax.f32 %v2680, 0.0
        %v2784 = vmax.f32 %v2682, 0.0
        %v2785 = vmax.f32 %v2684, 0.0
        %v2786 = vmax.f32 %v2688, 0.0
        %v2787 = vmax.f32 %v2690, 0.0
        %v2788 = vmax.f32 %v2692, 0.0
        %v2789 = vmax.f32 %v2694, 0.0
        %v2790 = vmax.f32 %v2698, 0.0
        %v2791 = vmax.f32 %v2700, 0.0
        %v2792 = vmax.f32 %v2702, 0.0
        %v2793 = vmax.f32 %v2704, 0.0
        %v2794 = vmax.f32 %v2708, 0.0
        %v2795 = vmax.f32 %v2710, 0.0
        %v2796 = vmax.f32 %v2712, 0.0
        %v2797 = vmax.f32 %v2714, 0.0
        %v2798 = vmax.f32 %v2718, 0.0
        %v2799 = vmax.f32 %v2720, 0.0
        %v2800 = vmax.f32 %v2722, 0.0
        %v2801 = vmax.f32 %v2724, 0.0
        %v2802 = vmax.f32 %v2728, 0.0
        %v2803 = vmax.f32 %v2730, 0.0
        %v2804 = vmax.f32 %v2732, 0.0
        %v2805 = vmax.f32 %v2734, 0.0
        %v2806 = vmax.f32 %v2738, 0.0
        %v2807 = vmax.f32 %v2740, 0.0
        %v2808 = vmax.f32 %v2742, 0.0
        %v2809 = vmax.f32 %v2744, 0.0
        %v2810 = vpack.c.bf16 %v2748, %v2746
        %v2811 = vpack.c.bf16 %v2749, %v2747
        %v2812 = vpack.c.bf16 %v2752, %v2750
        %v2813 = vpack.c.bf16 %v2753, %v2751
        %v2814 = vpack.c.bf16 %v2756, %v2754
        %v2815 = vpack.c.bf16 %v2757, %v2755
        %v2816 = vpack.c.bf16 %v2760, %v2758
        %v2817 = vpack.c.bf16 %v2761, %v2759
        %v2818 = vpack.c.bf16 %v2764, %v2762
        %v2819 = vpack.c.bf16 %v2765, %v2763
        %v2820 = vpack.c.bf16 %v2768, %v2766
        %v2821 = vpack.c.bf16 %v2769, %v2767
        %v2822 = vpack.c.bf16 %v2772, %v2770
        %v2823 = vpack.c.bf16 %v2773, %v2771
        %v2824 = vpack.c.bf16 %v2776, %v2774
        %v2825 = vpack.c.bf16 %v2777, %v2775
        %v2826 = vpack.c.bf16 %v2780, %v2778
        %v2827 = vpack.c.bf16 %v2781, %v2779
        %v2828 = vpack.c.bf16 %v2784, %v2782
        %v2829 = vpack.c.bf16 %v2785, %v2783
        %v2830 = vpack.c.bf16 %v2788, %v2786
        %v2831 = vpack.c.bf16 %v2789, %v2787
        %v2832 = vpack.c.bf16 %v2792, %v2790
        %v2833 = vpack.c.bf16 %v2793, %v2791
        %v2834 = vpack.c.bf16 %v2796, %v2794
        %v2835 = vpack.c.bf16 %v2797, %v2795
        %v2836 = vpack.c.bf16 %v2800, %v2798
        %v2837 = vpack.c.bf16 %v2801, %v2799
        %v2838 = vpack.c.bf16 %v2804, %v2802
        %v2839 = vpack.c.bf16 %v2805, %v2803
        %v2840 = vpack.c.bf16 %v2808, %v2806
        %v2841 = vpack.c.bf16 %v2809, %v2807
        %v2842 = vld [vmem:[%s12] sm:$0xf]
        %v2843 = vld [vmem:[%s12 + $0x4] sm:$0xf]
        %v2844 = vld [vmem:[%s12 + $0x8] sm:$0xf]
        %v2845 = vld [vmem:[%s12 + $0xc] sm:$0xf]
        %v2846 = vld [vmem:[%s12 + $0x10] sm:$0xf]
        %v2847 = vld [vmem:[%s12 + $0x14] sm:$0xf]
        %v2848 = vld [vmem:[%s12 + $0x18] sm:$0xf]
        %v2849 = vld [vmem:[%s12 + $0x1c] sm:$0xf]
        %v2850 = vld [vmem:[%s12 + $0x20] sm:$0xf]
        %v2851 = vld [vmem:[%s12 + $0x24] sm:$0xf]
        %v2852 = vld [vmem:[%s12 + $0x28] sm:$0xf]
        %v2853 = vld [vmem:[%s12 + $0x2c] sm:$0xf]
        %v2854 = vld [vmem:[%s12 + $0x30] sm:$0xf]
        %v2855 = vld [vmem:[%s12 + $0x34] sm:$0xf]
        %v2856 = vld [vmem:[%s12 + $0x38] sm:$0xf]
        %v2857 = vld [vmem:[%s12 + $0x3c] sm:$0xf]
        %v2858 = vld [vmem:[%s12 + $0x40] sm:$0xf]
        %v2859 = vld [vmem:[%s12 + $0x44] sm:$0xf]
        %v2860 = vld [vmem:[%s12 + $0x48] sm:$0xf]
        %v2861 = vld [vmem:[%s12 + $0x4c] sm:$0xf]
        %v2862 = vld [vmem:[%s12 + $0x50] sm:$0xf]
        %v2863 = vld [vmem:[%s12 + $0x54] sm:$0xf]
        %v2864 = vld [vmem:[%s12 + $0x58] sm:$0xf]
        %v2865 = vld [vmem:[%s12 + $0x5c] sm:$0xf]
        %v2866 = vld [vmem:[%s12 + $0x60] sm:$0xf]
        %v2867 = vld [vmem:[%s12 + $0x64] sm:$0xf]
        %v2868 = vld [vmem:[%s12 + $0x68] sm:$0xf]
        %v2869 = vld [vmem:[%s12 + $0x6c] sm:$0xf]
        %v2870 = vld [vmem:[%s12 + $0x70] sm:$0xf]
        %v2871 = vld [vmem:[%s12 + $0x74] sm:$0xf]
        %v2872 = vld [vmem:[%s12 + $0x78] sm:$0xf]
        %v2873 = vld [vmem:[%s12 + $0x7c] sm:$0xf]
        %v2874 = vld [vmem:[%s13] sm:$0x1]
        %v2876 = vlaneseq
        %v2877 = vshrl.u32 %v2876, 7
        %v2878 = vsub.s32 0, %v2877
        %v2879 = vrot.slane %v2874, %v2878
        %v2913 = vunpack.c.l.b16 %v2842
        %v2914 = vunpack.c.l.b16 %v2843
        %v2915 = vunpack.c.l.b16 %v2844
        %v2916 = vunpack.c.l.b16 %v2845
        %v2917 = vunpack.c.l.b16 %v2846
        %v2918 = vunpack.c.l.b16 %v2847
        %v2919 = vunpack.c.l.b16 %v2848
        %v2920 = vunpack.c.l.b16 %v2849
        %v2921 = vunpack.c.l.b16 %v2850
        %v2922 = vunpack.c.l.b16 %v2851
        %v2923 = vunpack.c.l.b16 %v2852
        %v2924 = vunpack.c.l.b16 %v2853
        %v2925 = vunpack.c.l.b16 %v2854
        %v2926 = vunpack.c.l.b16 %v2855
        %v2927 = vunpack.c.l.b16 %v2856
        %v2928 = vunpack.c.l.b16 %v2857
        %v2929 = vunpack.c.l.b16 %v2858
        %v2930 = vunpack.c.l.b16 %v2859
        %v2931 = vunpack.c.l.b16 %v2860
        %v2932 = vunpack.c.l.b16 %v2861
        %v2933 = vunpack.c.l.b16 %v2862
        %v2934 = vunpack.c.l.b16 %v2863
        %v2935 = vunpack.c.l.b16 %v2864
        %v2936 = vunpack.c.l.b16 %v2865
        %v2937 = vunpack.c.l.b16 %v2866
        %v2938 = vunpack.c.l.b16 %v2867
        %v2939 = vunpack.c.l.b16 %v2868
        %v2940 = vunpack.c.l.b16 %v2869
        %v2941 = vunpack.c.l.b16 %v2870
        %v2942 = vunpack.c.l.b16 %v2871
        %v2943 = vunpack.c.l.b16 %v2872
        %v2944 = vunpack.c.l.b16 %v2873
        %v2945 = vpack.c.b16 %v2914, %v2913
        %v2946 = vpack.c.b16 %v2916, %v2915
        %v2947 = vpack.c.b16 %v2918, %v2917
        %v2948 = vpack.c.b16 %v2920, %v2919
        %v2949 = vpack.c.b16 %v2922, %v2921
        %v2950 = vpack.c.b16 %v2924, %v2923
        %v2951 = vpack.c.b16 %v2926, %v2925
        %v2952 = vpack.c.b16 %v2928, %v2927
        %v2953 = vpack.c.b16 %v2930, %v2929
        %v2954 = vpack.c.b16 %v2932, %v2931
        %v2955 = vpack.c.b16 %v2934, %v2933
        %v2956 = vpack.c.b16 %v2936, %v2935
        %v2957 = vpack.c.b16 %v2938, %v2937
        %v2958 = vpack.c.b16 %v2940, %v2939
        %v2959 = vpack.c.b16 %v2942, %v2941
        %v2960 = vpack.c.b16 %v2944, %v2943
        %2977 = vmatprep.subr.bf16.mxu0 0
        %2978 = vmatpush1.bf16.msra.mxu0 %v2952
        %2979 = vmatprep.subr.bf16.mxu0 0
        %2980 = vmatpush1.bf16.msra.mxu0 %v2951
        %2981 = vmatprep.subr.bf16.mxu0 0
        %2982 = vmatpush1.bf16.msra.mxu0 %v2950
        %2983 = vmatprep.subr.bf16.mxu0 0
        %2984 = vmatpush1.bf16.msra.mxu0 %v2949
        %2985 = vmatprep.subr.bf16.mxu0 0
        %2986 = vmatpush1.bf16.msra.mxu0 %v2948
        %2987 = vmatprep.subr.bf16.mxu0 0
        %2988 = vmatpush1.bf16.msra.mxu0 %v2947
        %2989 = vmatprep.subr.bf16.mxu0 0
        %2990 = vmatpush1.bf16.msra.mxu0 %v2946
        %2991 = vmatprep.subr.bf16.mxu0 0
        %2992 = vmatpush1.bf16.msra.mxu0 %v2945
        %2993 = vmatprep.subr.bf16.mxu0 0
        %2994 = vmatpush2.bf16.msra.mxu0 %v2960
        %2995 = vmatprep.subr.bf16.mxu0 0
        %2996 = vmatpush2.bf16.msra.mxu0 %v2959
        %2997 = vmatprep.subr.bf16.mxu0 0
        %2998 = vmatpush2.bf16.msra.mxu0 %v2958
        %2999 = vmatprep.subr.bf16.mxu0 0
        %3000 = vmatpush2.bf16.msra.mxu0 %v2957
        %3001 = vmatprep.subr.bf16.mxu0 0
        %3002 = vmatpush2.bf16.msra.mxu0 %v2956
        %3003 = vmatprep.subr.bf16.mxu0 0
        %3004 = vmatpush2.bf16.msra.mxu0 %v2955
        %3005 = vmatprep.subr.bf16.mxu0 0
        %3006 = vmatpush2.bf16.msra.mxu0 %v2954
        %3007 = vmatprep.subr.bf16.mxu0 0
        %3008 = vmatpush2.bf16.msra.mxu0 %v2953
        %3009 = vmatprep.mubr.bf16.mxu0 %v2811
        %3010 = vmatmul.mubr.bf16.gmra.mxu0 %v2810
        %v3011 = vpop.f32.mrf.mxu0
        %v3012 = vadd.f32 %v2879, %v3011
        %v3013 = vpop.f32.mrf.mxu0
        %v3014 = vpop.f32.mrf.mxu0
        %v3015 = vadd.f32 %v2879, %v3014
        %v3016 = vpop.f32.mrf.mxu0
        %3017 = vmatprep.mubr.bf16.mxu0 %v2813
        %3018 = vmatmul.mubr.bf16.gmra.mxu0 %v2812
        %v3019 = vpop.f32.mrf.mxu0
        %v3020 = vadd.f32 %v2879, %v3019
        %v3021 = vpop.f32.mrf.mxu0
        %v3022 = vpop.f32.mrf.mxu0
        %v3023 = vadd.f32 %v2879, %v3022
        %v3024 = vpop.f32.mrf.mxu0
        %3025 = vmatprep.mubr.bf16.mxu0 %v2815
        %3026 = vmatmul.mubr.bf16.gmra.mxu0 %v2814
        %v3027 = vpop.f32.mrf.mxu0
        %v3028 = vadd.f32 %v2879, %v3027
        %v3029 = vpop.f32.mrf.mxu0
        %v3030 = vpop.f32.mrf.mxu0
        %v3031 = vadd.f32 %v2879, %v3030
        %v3032 = vpop.f32.mrf.mxu0
        %3033 = vmatprep.mubr.bf16.mxu0 %v2817
        %3034 = vmatmul.mubr.bf16.gmra.mxu0 %v2816
        %v3035 = vpop.f32.mrf.mxu0
        %v3036 = vadd.f32 %v2879, %v3035
        %v3037 = vpop.f32.mrf.mxu0
        %v3038 = vpop.f32.mrf.mxu0
        %v3039 = vadd.f32 %v2879, %v3038
        %v3040 = vpop.f32.mrf.mxu0
        %3041 = vmatprep.mubr.bf16.mxu0 %v2819
        %3042 = vmatmul.mubr.bf16.gmra.mxu0 %v2818
        %v3043 = vpop.f32.mrf.mxu0
        %v3044 = vadd.f32 %v2879, %v3043
        %v3045 = vpop.f32.mrf.mxu0
        %v3046 = vpop.f32.mrf.mxu0
        %v3047 = vadd.f32 %v2879, %v3046
        %v3048 = vpop.f32.mrf.mxu0
        %3049 = vmatprep.mubr.bf16.mxu0 %v2821
        %3050 = vmatmul.mubr.bf16.gmra.mxu0 %v2820
        %v3051 = vpop.f32.mrf.mxu0
        %v3052 = vadd.f32 %v2879, %v3051
        %v3053 = vpop.f32.mrf.mxu0
        %v3054 = vpop.f32.mrf.mxu0
        %v3055 = vadd.f32 %v2879, %v3054
        %v3056 = vpop.f32.mrf.mxu0
        %3057 = vmatprep.mubr.bf16.mxu0 %v2823
        %3058 = vmatmul.mubr.bf16.gmra.mxu0 %v2822
        %v3059 = vpop.f32.mrf.mxu0
        %v3060 = vadd.f32 %v2879, %v3059
        %v3061 = vpop.f32.mrf.mxu0
        %v3062 = vpop.f32.mrf.mxu0
        %v3063 = vadd.f32 %v2879, %v3062
        %v3064 = vpop.f32.mrf.mxu0
        %3065 = vmatprep.mubr.bf16.mxu0 %v2825
        %3066 = vmatmul.mubr.bf16.gmra.mxu0 %v2824
        %v3067 = vpop.f32.mrf.mxu0
        %v3068 = vadd.f32 %v2879, %v3067
        %v3069 = vpop.f32.mrf.mxu0
        %v3070 = vpop.f32.mrf.mxu0
        %v3071 = vadd.f32 %v2879, %v3070
        %v3072 = vpop.f32.mrf.mxu0
        %3073 = vmatprep.mubr.bf16.mxu0 %v2827
        %3074 = vmatmul.mubr.bf16.gmra.mxu0 %v2826
        %v3075 = vpop.f32.mrf.mxu0
        %v3076 = vadd.f32 %v2879, %v3075
        %v3077 = vpop.f32.mrf.mxu0
        %v3078 = vpop.f32.mrf.mxu0
        %v3079 = vadd.f32 %v2879, %v3078
        %v3080 = vpop.f32.mrf.mxu0
        %3081 = vmatprep.mubr.bf16.mxu0 %v2829
        %3082 = vmatmul.mubr.bf16.gmra.mxu0 %v2828
        %v3083 = vpop.f32.mrf.mxu0
        %v3084 = vadd.f32 %v2879, %v3083
        %v3085 = vpop.f32.mrf.mxu0
        %v3086 = vpop.f32.mrf.mxu0
        %v3087 = vadd.f32 %v2879, %v3086
        %v3088 = vpop.f32.mrf.mxu0
        %3089 = vmatprep.mubr.bf16.mxu0 %v2831
        %3090 = vmatmul.mubr.bf16.gmra.mxu0 %v2830
        %v3091 = vpop.f32.mrf.mxu0
        %v3092 = vadd.f32 %v2879, %v3091
        %v3093 = vpop.f32.mrf.mxu0
        %v3094 = vpop.f32.mrf.mxu0
        %v3095 = vadd.f32 %v2879, %v3094
        %v3096 = vpop.f32.mrf.mxu0
        %3097 = vmatprep.mubr.bf16.mxu0 %v2833
        %3098 = vmatmul.mubr.bf16.gmra.mxu0 %v2832
        %v3099 = vpop.f32.mrf.mxu0
        %v3100 = vadd.f32 %v2879, %v3099
        %v3101 = vpop.f32.mrf.mxu0
        %v3102 = vpop.f32.mrf.mxu0
        %v3103 = vadd.f32 %v2879, %v3102
        %v3104 = vpop.f32.mrf.mxu0
        %3105 = vmatprep.mubr.bf16.mxu0 %v2835
        %3106 = vmatmul.mubr.bf16.gmra.mxu0 %v2834
        %v3107 = vpop.f32.mrf.mxu0
        %v3108 = vadd.f32 %v2879, %v3107
        %v3109 = vpop.f32.mrf.mxu0
        %v3110 = vpop.f32.mrf.mxu0
        %v3111 = vadd.f32 %v2879, %v3110
        %v3112 = vpop.f32.mrf.mxu0
        %3113 = vmatprep.mubr.bf16.mxu0 %v2837
        %3114 = vmatmul.mubr.bf16.gmra.mxu0 %v2836
        %v3115 = vpop.f32.mrf.mxu0
        %v3116 = vadd.f32 %v2879, %v3115
        %v3117 = vpop.f32.mrf.mxu0
        %v3118 = vpop.f32.mrf.mxu0
        %v3119 = vadd.f32 %v2879, %v3118
        %v3120 = vpop.f32.mrf.mxu0
        %3121 = vmatprep.mubr.bf16.mxu0 %v2839
        %3122 = vmatmul.mubr.bf16.gmra.mxu0 %v2838
        %v3123 = vpop.f32.mrf.mxu0
        %v3124 = vadd.f32 %v2879, %v3123
        %v3125 = vpop.f32.mrf.mxu0
        %v3126 = vpop.f32.mrf.mxu0
        %v3127 = vadd.f32 %v2879, %v3126
        %v3128 = vpop.f32.mrf.mxu0
        %3129 = vmatprep.mubr.bf16.mxu0 %v2841
        %3130 = vmatmul.mubr.bf16.gmra.mxu0 %v2840
        %v3131 = vpop.f32.mrf.mxu0
        %v3132 = vadd.f32 %v2879, %v3131
        %v3133 = vpop.f32.mrf.mxu0
        %v3134 = vpop.f32.mrf.mxu0
        %v3135 = vadd.f32 %v2879, %v3134
        %v3136 = vpop.f32.mrf.mxu0
        %3137 = vdwg.mxu0
        %v3138 = vpack.c.bf16 %v3015, %v3012
        %v3139 = vpack.c.bf16 %v3023, %v3020
        %v3140 = vpack.c.bf16 %v3031, %v3028
        %v3141 = vpack.c.bf16 %v3039, %v3036
        %v3142 = vpack.c.bf16 %v3047, %v3044
        %v3143 = vpack.c.bf16 %v3055, %v3052
        %v3144 = vpack.c.bf16 %v3063, %v3060
        %v3145 = vpack.c.bf16 %v3071, %v3068
        %v3146 = vpack.c.bf16 %v3079, %v3076
        %v3147 = vpack.c.bf16 %v3087, %v3084
        %v3148 = vpack.c.bf16 %v3095, %v3092
        %v3149 = vpack.c.bf16 %v3103, %v3100
        %v3150 = vpack.c.bf16 %v3111, %v3108
        %v3151 = vpack.c.bf16 %v3119, %v3116
        %v3152 = vpack.c.bf16 %v3127, %v3124
        %v3153 = vpack.c.bf16 %v3135, %v3132
        %v3170 = vunpack.c.l.b16 %v3138
        %v3171 = vunpack.c.h.b16 %v3138
        %v3172 = vunpack.c.l.b16 %v3139
        %v3173 = vunpack.c.h.b16 %v3139
        %v3174 = vunpack.c.l.b16 %v3140
        %v3175 = vunpack.c.h.b16 %v3140
        %v3176 = vunpack.c.l.b16 %v3141
        %v3177 = vunpack.c.h.b16 %v3141
        %v3178 = vunpack.c.l.b16 %v3142
        %v3179 = vunpack.c.h.b16 %v3142
        %v3180 = vunpack.c.l.b16 %v3143
        %v3181 = vunpack.c.h.b16 %v3143
        %v3182 = vunpack.c.l.b16 %v3144
        %v3183 = vunpack.c.h.b16 %v3144
        %v3184 = vunpack.c.l.b16 %v3145
        %v3185 = vunpack.c.h.b16 %v3145
        %v3186 = vunpack.c.l.b16 %v3146
        %v3187 = vunpack.c.h.b16 %v3146
        %v3188 = vunpack.c.l.b16 %v3147
        %v3189 = vunpack.c.h.b16 %v3147
        %v3190 = vunpack.c.l.b16 %v3148
        %v3191 = vunpack.c.h.b16 %v3148
        %v3192 = vunpack.c.l.b16 %v3149
        %v3193 = vunpack.c.h.b16 %v3149
        %v3194 = vunpack.c.l.b16 %v3150
        %v3195 = vunpack.c.h.b16 %v3150
        %v3196 = vunpack.c.l.b16 %v3151
        %v3197 = vunpack.c.h.b16 %v3151
        %v3198 = vunpack.c.l.b16 %v3152
        %v3199 = vunpack.c.h.b16 %v3152
        %v3200 = vunpack.c.l.b16 %v3153
        %v3201 = vunpack.c.h.b16 %v3153
        %v3202 = vpack.c.b16 %v3170, %v3170
        %v3203 = vpack.c.b16 %v3171, %v3171
        %v3204 = vpack.c.b16 %v3172, %v3172
        %v3205 = vpack.c.b16 %v3173, %v3173
        %v3206 = vpack.c.b16 %v3174, %v3174
        %v3207 = vpack.c.b16 %v3175, %v3175
        %v3208 = vpack.c.b16 %v3176, %v3176
        %v3209 = vpack.c.b16 %v3177, %v3177
        %v3210 = vpack.c.b16 %v3178, %v3178
        %v3211 = vpack.c.b16 %v3179, %v3179
        %v3212 = vpack.c.b16 %v3180, %v3180
        %v3213 = vpack.c.b16 %v3181, %v3181
        %v3214 = vpack.c.b16 %v3182, %v3182
        %v3215 = vpack.c.b16 %v3183, %v3183
        %v3216 = vpack.c.b16 %v3184, %v3184
        %v3217 = vpack.c.b16 %v3185, %v3185
        %v3218 = vpack.c.b16 %v3186, %v3186
        %v3219 = vpack.c.b16 %v3187, %v3187
        %v3220 = vpack.c.b16 %v3188, %v3188
        %v3221 = vpack.c.b16 %v3189, %v3189
        %v3222 = vpack.c.b16 %v3190, %v3190
        %v3223 = vpack.c.b16 %v3191, %v3191
        %v3224 = vpack.c.b16 %v3192, %v3192
        %v3225 = vpack.c.b16 %v3193, %v3193
        %v3226 = vpack.c.b16 %v3194, %v3194
        %v3227 = vpack.c.b16 %v3195, %v3195
        %v3228 = vpack.c.b16 %v3196, %v3196
        %v3229 = vpack.c.b16 %v3197, %v3197
        %v3230 = vpack.c.b16 %v3198, %v3198
        %v3231 = vpack.c.b16 %v3199, %v3199
        %v3232 = vpack.c.b16 %v3200, %v3200
        %v3233 = vpack.c.b16 %v3201, %v3201
        %3266 = vst [vmem:[%s508] sm:$0xf] %v3202
        %3267 = vst [vmem:[%s508 + $0x4] sm:$0xf] %v3203
        %3268 = vst [vmem:[%s508 + $0x8] sm:$0xf] %v3204
        %3269 = vst [vmem:[%s508 + $0xc] sm:$0xf] %v3205
        %3270 = vst [vmem:[%s508 + $0x10] sm:$0xf] %v3206
        %3271 = vst [vmem:[%s508 + $0x14] sm:$0xf] %v3207
        %3272 = vst [vmem:[%s508 + $0x18] sm:$0xf] %v3208
        %3273 = vst [vmem:[%s508 + $0x1c] sm:$0xf] %v3209
        %3274 = vst [vmem:[%s508 + $0x20] sm:$0xf] %v3210
        %3275 = vst [vmem:[%s508 + $0x24] sm:$0xf] %v3211
        %3276 = vst [vmem:[%s508 + $0x28] sm:$0xf] %v3212
        %3277 = vst [vmem:[%s508 + $0x2c] sm:$0xf] %v3213
        %3278 = vst [vmem:[%s508 + $0x30] sm:$0xf] %v3214
        %3279 = vst [vmem:[%s508 + $0x34] sm:$0xf] %v3215
        %3280 = vst [vmem:[%s508 + $0x38] sm:$0xf] %v3216
        %3281 = vst [vmem:[%s508 + $0x3c] sm:$0xf] %v3217
        %3282 = vst [vmem:[%s508 + $0x40] sm:$0xf] %v3218
        %3283 = vst [vmem:[%s508 + $0x44] sm:$0xf] %v3219
        %3284 = vst [vmem:[%s508 + $0x48] sm:$0xf] %v3220
        %3285 = vst [vmem:[%s508 + $0x4c] sm:$0xf] %v3221
        %3286 = vst [vmem:[%s508 + $0x50] sm:$0xf] %v3222
        %3287 = vst [vmem:[%s508 + $0x54] sm:$0xf] %v3223
        %3288 = vst [vmem:[%s508 + $0x58] sm:$0xf] %v3224
        %3289 = vst [vmem:[%s508 + $0x5c] sm:$0xf] %v3225
        %3290 = vst [vmem:[%s508 + $0x60] sm:$0xf] %v3226
        %3291 = vst [vmem:[%s508 + $0x64] sm:$0xf] %v3227
        %3292 = vst [vmem:[%s508 + $0x68] sm:$0xf] %v3228
        %3293 = vst [vmem:[%s508 + $0x6c] sm:$0xf] %v3229
        %3294 = vst [vmem:[%s508 + $0x70] sm:$0xf] %v3230
        %3295 = vst [vmem:[%s508 + $0x74] sm:$0xf] %v3231
        %3296 = vst [vmem:[%s508 + $0x78] sm:$0xf] %v3232
        %3297 = vst [vmem:[%s508 + $0x7c] sm:$0xf] %v3233
        %v3298 = vpack.c.bf16 %v1606, %v1603
        %v3299 = vpack.c.bf16 %v1614, %v1611
        %v3300 = vpack.c.bf16 %v1622, %v1619
        %v3301 = vpack.c.bf16 %v1630, %v1627
        %v3302 = vpack.c.bf16 %v1638, %v1635
        %v3303 = vpack.c.bf16 %v1646, %v1643
        %v3304 = vpack.c.bf16 %v1654, %v1651
        %v3305 = vpack.c.bf16 %v1662, %v1659
        %v3306 = vpack.c.bf16 %v1670, %v1667
        %v3307 = vpack.c.bf16 %v1678, %v1675
        %v3308 = vpack.c.bf16 %v1686, %v1683
        %v3309 = vpack.c.bf16 %v1694, %v1691
        %v3310 = vpack.c.bf16 %v1702, %v1699
        %v3311 = vpack.c.bf16 %v1710, %v1707
        %v3312 = vpack.c.bf16 %v1718, %v1715
        %v3313 = vpack.c.bf16 %v1726, %v1723
        %v3330 = vunpack.c.l.b16 %v3298
        %v3331 = vunpack.c.h.b16 %v3298
        %v3332 = vunpack.c.l.b16 %v3299
        %v3333 = vunpack.c.h.b16 %v3299
        %v3334 = vunpack.c.l.b16 %v3300
        %v3335 = vunpack.c.h.b16 %v3300
        %v3336 = vunpack.c.l.b16 %v3301
        %v3337 = vunpack.c.h.b16 %v3301
        %v3338 = vunpack.c.l.b16 %v3302
        %v3339 = vunpack.c.h.b16 %v3302
        %v3340 = vunpack.c.l.b16 %v3303
        %v3341 = vunpack.c.h.b16 %v3303
        %v3342 = vunpack.c.l.b16 %v3304
        %v3343 = vunpack.c.h.b16 %v3304
        %v3344 = vunpack.c.l.b16 %v3305
        %v3345 = vunpack.c.h.b16 %v3305
        %v3346 = vunpack.c.l.b16 %v3306
        %v3347 = vunpack.c.h.b16 %v3306
        %v3348 = vunpack.c.l.b16 %v3307
        %v3349 = vunpack.c.h.b16 %v3307
        %v3350 = vunpack.c.l.b16 %v3308
        %v3351 = vunpack.c.h.b16 %v3308
        %v3352 = vunpack.c.l.b16 %v3309
        %v3353 = vunpack.c.h.b16 %v3309
        %v3354 = vunpack.c.l.b16 %v3310
        %v3355 = vunpack.c.h.b16 %v3310
        %v3356 = vunpack.c.l.b16 %v3311
        %v3357 = vunpack.c.h.b16 %v3311
        %v3358 = vunpack.c.l.b16 %v3312
        %v3359 = vunpack.c.h.b16 %v3312
        %v3360 = vunpack.c.l.b16 %v3313
        %v3361 = vunpack.c.h.b16 %v3313
        %v3362 = vpack.c.b16 %v3330, %v3330
        %v3363 = vpack.c.b16 %v3331, %v3331
        %v3364 = vpack.c.b16 %v3332, %v3332
        %v3365 = vpack.c.b16 %v3333, %v3333
        %v3366 = vpack.c.b16 %v3334, %v3334
        %v3367 = vpack.c.b16 %v3335, %v3335
        %v3368 = vpack.c.b16 %v3336, %v3336
        %v3369 = vpack.c.b16 %v3337, %v3337
        %v3370 = vpack.c.b16 %v3338, %v3338
        %v3371 = vpack.c.b16 %v3339, %v3339
        %v3372 = vpack.c.b16 %v3340, %v3340
        %v3373 = vpack.c.b16 %v3341, %v3341
        %v3374 = vpack.c.b16 %v3342, %v3342
        %v3375 = vpack.c.b16 %v3343, %v3343
        %v3376 = vpack.c.b16 %v3344, %v3344
        %v3377 = vpack.c.b16 %v3345, %v3345
        %v3378 = vpack.c.b16 %v3346, %v3346
        %v3379 = vpack.c.b16 %v3347, %v3347
        %v3380 = vpack.c.b16 %v3348, %v3348
        %v3381 = vpack.c.b16 %v3349, %v3349
        %v3382 = vpack.c.b16 %v3350, %v3350
        %v3383 = vpack.c.b16 %v3351, %v3351
        %v3384 = vpack.c.b16 %v3352, %v3352
        %v3385 = vpack.c.b16 %v3353, %v3353
        %v3386 = vpack.c.b16 %v3354, %v3354
        %v3387 = vpack.c.b16 %v3355, %v3355
        %v3388 = vpack.c.b16 %v3356, %v3356
        %v3389 = vpack.c.b16 %v3357, %v3357
        %v3390 = vpack.c.b16 %v3358, %v3358
        %v3391 = vpack.c.b16 %v3359, %v3359
        %v3392 = vpack.c.b16 %v3360, %v3360
        %v3393 = vpack.c.b16 %v3361, %v3361
        %3426 = vst [vmem:[%s515] sm:$0xf] %v3362
        %3427 = vst [vmem:[%s515 + $0x4] sm:$0xf] %v3363
        %3428 = vst [vmem:[%s515 + $0x8] sm:$0xf] %v3364
        %3429 = vst [vmem:[%s515 + $0xc] sm:$0xf] %v3365
        %3430 = vst [vmem:[%s515 + $0x10] sm:$0xf] %v3366
        %3431 = vst [vmem:[%s515 + $0x14] sm:$0xf] %v3367
        %3432 = vst [vmem:[%s515 + $0x18] sm:$0xf] %v3368
        %3433 = vst [vmem:[%s515 + $0x1c] sm:$0xf] %v3369
        %3434 = vst [vmem:[%s515 + $0x20] sm:$0xf] %v3370
        %3435 = vst [vmem:[%s515 + $0x24] sm:$0xf] %v3371
        %3436 = vst [vmem:[%s515 + $0x28] sm:$0xf] %v3372
        %3437 = vst [vmem:[%s515 + $0x2c] sm:$0xf] %v3373
        %3438 = vst [vmem:[%s515 + $0x30] sm:$0xf] %v3374
        %3439 = vst [vmem:[%s515 + $0x34] sm:$0xf] %v3375
        %3440 = vst [vmem:[%s515 + $0x38] sm:$0xf] %v3376
        %3441 = vst [vmem:[%s515 + $0x3c] sm:$0xf] %v3377
        %3442 = vst [vmem:[%s515 + $0x40] sm:$0xf] %v3378
        %3443 = vst [vmem:[%s515 + $0x44] sm:$0xf] %v3379
        %3444 = vst [vmem:[%s515 + $0x48] sm:$0xf] %v3380
        %3445 = vst [vmem:[%s515 + $0x4c] sm:$0xf] %v3381
        %3446 = vst [vmem:[%s515 + $0x50] sm:$0xf] %v3382
        %3447 = vst [vmem:[%s515 + $0x54] sm:$0xf] %v3383
        %3448 = vst [vmem:[%s515 + $0x58] sm:$0xf] %v3384
        %3449 = vst [vmem:[%s515 + $0x5c] sm:$0xf] %v3385
        %3450 = vst [vmem:[%s515 + $0x60] sm:$0xf] %v3386
        %3451 = vst [vmem:[%s515 + $0x64] sm:$0xf] %v3387
        %3452 = vst [vmem:[%s515 + $0x68] sm:$0xf] %v3388
        %3453 = vst [vmem:[%s515 + $0x6c] sm:$0xf] %v3389
        %3454 = vst [vmem:[%s515 + $0x70] sm:$0xf] %v3390
        %3455 = vst [vmem:[%s515 + $0x74] sm:$0xf] %v3391
        %3456 = vst [vmem:[%s515 + $0x78] sm:$0xf] %v3392
        %3457 = vst [vmem:[%s515 + $0x7c] sm:$0xf] %v3393
        %s3458 = sand.u32 %s345, 1
        %s3459 = scalar_lea.sflag [#allocation5], %s3458
        %s3460 = sand.u32 %s345, 1
        %s3461 = smul.addr %s3460, 128
        %s3462 = scalar_lea.vmem [#allocation4], %s3461
        %s3463 = sand.u32 %s371, 1
        %s3464 = scalar_lea.sflag [#allocation7], %s3463
        %s3465 = sand.u32 %s371, 1
        %s3466 = smul.addr %s3465, 128
        %s3467 = scalar_lea.vmem [#allocation6], %s3466
        // Predicated region
        $region77: #{tpu_custom_call.1} parent=75 // pred_check
          %p3468 = pneg %p355
        $region78: #{tpu_custom_call.1} parent=75 // pred_check_branch
          %3470 = sbr.rel (%p3468) target = $region80
        $region79: #{tpu_custom_call.1} parent=75 // pred_region
          %s3471 = smul.u32 32, %s33
          %s3473 = ssub.s32 2048, 2048
          %3474 = vsyncadd %s3459, %s3473
          %s3475 = smul.addr %s3471, 64
          %s3476 = scalar_lea.hbm %s14, %s3475
          %s3477 = sshll.u32 %s3462, 4
          %s3478 = int_to_ptr.vmem [resolvable:$true] %s3477
          %3483 = dma.vmem_to_hbm [thread:$0]  %s3478, 2048, %s3476, %s3459, 64, 64, 4
        $region80: #{tpu_custom_call.1} parent=75 // pred_fallthru
          _
        // Predicated region
        $region81: #{tpu_custom_call.1} parent=75 // pred_check
          %p3484 = pneg %p381
        $region82: #{tpu_custom_call.1} parent=75 // pred_check_branch
          %3486 = sbr.rel (%p3484) target = $region84
        $region83: #{tpu_custom_call.1} parent=75 // pred_region
          %s3487 = smul.u32 32, %s33
          %s3489 = ssub.s32 2048, 2048
          %3490 = vsyncadd %s3464, %s3489
          %s3491 = smul.addr %s3487, 64
          %s3492 = scalar_lea.hbm %s15, %s3491
          %s3493 = sshll.u32 %s3467, 4
          %s3494 = int_to_ptr.vmem [resolvable:$true] %s3493
          %3499 = dma.vmem_to_hbm [thread:$0]  %s3494, 2048, %s3492, %s3464, 64, 64, 4
        $region84: #{tpu_custom_call.1} parent=75 // pred_fallthru
          _
      $region76: #{tpu_custom_call.1} parent=5 // pred_fallthru
        _
      %p3500 = scmp.le.s32.totalorder 2, %s28
      // Predicated region
      $region85: #{tpu_custom_call.1} parent=5 // pred_check
        %p3501 = pneg %p3500
      $region86: #{tpu_custom_call.1} parent=5 // pred_check_branch
        %3503 = sbr.rel (%p3501) target = $region88
      $region87: #{tpu_custom_call.1} parent=5 // pred_region
        %s3504 = ssub.s32 %s28, 2
        // Predicated region
        $region89: #{tpu_custom_call.1} parent=87 // pred_check
          %p3505 = pneg %p361
        $region90: #{tpu_custom_call.1} parent=87 // pred_check_branch
          %3507 = sbr.rel (%p3505) target = $region92
        $region91: #{tpu_custom_call.1} parent=87 // pred_region
          %s3508 = sand.u32 %s346, 1
          %s3509 = scalar_lea.sflag [#allocation5], %s3508
          %s3510 = sand.u32 %s346, 1
          %s3511 = smul.addr %s3510, 128
          %s3512 = scalar_lea.vmem [#allocation4], %s3511
          %3513 = dma.done %s3509, 2048
        $region92: #{tpu_custom_call.1} parent=87 // pred_fallthru
          _
        // Predicated region
        $region93: #{tpu_custom_call.1} parent=87 // pred_check
          %p3514 = pneg %p387
        $region94: #{tpu_custom_call.1} parent=87 // pred_check_branch
          %3516 = sbr.rel (%p3514) target = $region96
        $region95: #{tpu_custom_call.1} parent=87 // pred_region
          %s3517 = sand.u32 %s372, 1
          %s3518 = scalar_lea.sflag [#allocation7], %s3517
          %s3519 = sand.u32 %s372, 1
          %s3520 = smul.addr %s3519, 128
          %s3521 = scalar_lea.vmem [#allocation6], %s3520
          %3522 = dma.done %s3518, 2048
        $region96: #{tpu_custom_call.1} parent=87 // pred_fallthru
          _
      $region88: #{tpu_custom_call.1} parent=5 // pred_fallthru
        _
    $region6: #{tpu_custom_call.1} parent=1 // loop_footer
      %s32 = sadd.s32 1, %s28
    $region7: #{tpu_custom_call.1} parent=1 // loop_footer_branch
      %27 = sbr.rel target = $region3
    $region8: #{tpu_custom_call.1} parent=1 // loop_exit
      _
    %3523 = vsyncpa [#allocation5], 1
    %s3524 = scalar_lea.sflag [#allocation5], 1
    %3525 = vsyncpa %s3524, 1
    %3526 = vsyncpa [#allocation7], 1
    %s3527 = scalar_lea.sflag [#allocation7], 1
    %3528 = vsyncpa %s3527, 1

</llo_original>
